<compile_context>
chip_gen: v7x
topology: tpu7x:2x2x1
jax: 0.10.0
libtpu: 0.0.40
codegen_flags: <defaults>
</compile_context>

<pallas_src>
import functools

import jax
import jax.numpy as jnp
import numpy as np
from jax import lax
from jax.experimental import pallas as pl
from jax.experimental.pallas import tpu as pltpu

MiB = 1024 * 1024


def _rup(x, m):
    return ((x + m - 1) // m) * m


def _wsconv_kernel(x_ref, w_ref, b_ref, o_ref, xpad_ref, patch_ref, *,
                   K, stride, padding, H, W, Ho, Wo, Cin, Cin_pad):
    """One batch block per grid step.

    x_ref     : (Bblk, Cin, H, W)          NCHW input block             (VMEM)
    w_ref     : (Cout, K*K*Cin_pad)        c-scaled im2col weights      (VMEM)
    b_ref     : (Cout, 1)                  conv_bias + extra_bias       (VMEM)
    o_ref     : (Bblk, Cout, Ho*Wo)        lane-dense output block      (VMEM)
    xpad_ref  : (Bblk, Cin_pad, Hp, Wp)    zero-padded staging scratch  (VMEM)
    patch_ref : (K*K*Cin_pad, Bblk*Ho*Wo)  batch-fused im2col matrix    (VMEM)
    """
    bblk = x_ref.shape[0]
    Hp, Wp = H + 2 * padding, W + 2 * padding
    HoWo = Ho * Wo
    f32 = jnp.float32
    patch_dtype = patch_ref.dtype

    # ---- stage x: zero ONLY the halo strips + channel-padding planes -------
    # (interior is fully overwritten every step; zeroing every step is
    #  megacore-safe since VMEM scratch is per-core and never pre-initialized)
    if Cin_pad > Cin:
        xpad_ref[:, Cin:, :, :] = jnp.zeros((bblk, Cin_pad - Cin, Hp, Wp), f32)
    if padding > 0:
        xpad_ref[:, :Cin, :padding, :] = jnp.zeros((bblk, Cin, padding, Wp), f32)
        xpad_ref[:, :Cin, padding + H:, :] = jnp.zeros((bblk, Cin, padding, Wp), f32)
        xpad_ref[:, :Cin, padding:padding + H, :padding] = jnp.zeros(
            (bblk, Cin, H, padding), f32)
        xpad_ref[:, :Cin, padding:padding + H, padding + W:] = jnp.zeros(
            (bblk, Cin, H, padding), f32)
    # TODO(synk): in the Ho-tiled variant, DMA x straight into this interior
    # (memory_space=pl.ANY + make_async_copy); marginal at 16x16.
    xpad_ref[:, :Cin, padding:padding + H, padding:padding + W] = x_ref[...]

    # ---- batch-fused im2col: every tap slab is a sublane/lane-aligned store -
    # (Cin_pad is a multiple of 8 sublanes; Ho*Wo a multiple of 128 lanes here)
    for b in range(bblk):
        if stride == 1:
            def get_tap(kh, kw, _b=b):
                return xpad_ref[_b, :, kh:kh + Ho, kw:kw + Wo]
        else:
            # polyphase / space-to-depth: stride**2 strided extractions instead
            # of K*K; every tap is then a unit-stride slice of one phase plane.
            xb = xpad_ref[b]                                  # (Cin_pad, Hp, Wp)
            phases = [[xb[:, ph::stride, pw::stride] for pw in range(stride)]
                      for ph in range(stride)]

            def get_tap(kh, kw, _ph=phases):
                p = _ph[kh % stride][kw % stride]
                oh, ow = kh // stride, kw // stride
                return p[:, oh:oh + Ho, ow:ow + Wo]

        for t in range(K * K):
            kh, kw = t // K, t % K
            tap = get_tap(kh, kw)                             # (Cin_pad, Ho, Wo)
            patch_ref[t * Cin_pad:(t + 1) * Cin_pad,
                      b * HoWo:(b + 1) * HoWo] = (
                tap.reshape(Cin_pad, HoWo).astype(patch_dtype))

    # ---- ONE fused MXU matmul for the whole batch block ---------------------
    acc = jnp.dot(w_ref[...], patch_ref[...],
                  preferred_element_type=jnp.float32)         # (Cout, bblk*HoWo)
    acc = acc + b_ref[...]                                    # (Cout,1) broadcast

    # ---- lane-aligned per-image writeback (Ho*Wo multiple of 128) -----------
    for b in range(bblk):
        o_ref[b] = acc[:, b * HoWo:(b + 1) * HoWo].astype(o_ref.dtype)


def _block_vmem_bytes(bblk, Cin, Cin_pad, Cout, H, W, Hp, Wp, Ho, Wo, K,
                      use_bf16):
    """Physical per-step VMEM footprint: (8,128) tile padding, double-buffered
    BlockSpec operands, im2col scratch and f32 accumulator all included."""
    HoWo = Ho * Wo
    f32, pdt = 4, (2 if use_bf16 else 4)
    x_blk = 2 * bblk * Cin * _rup(H, 8) * _rup(W, 128) * f32         # dbl-buf
    o_blk = 2 * bblk * _rup(Cout, 8) * _rup(HoWo, 128) * f32         # dbl-buf
    w_blk = 2 * _rup(Cout, 8) * _rup(K * K * Cin_pad, 128) * pdt     # dbl-buf
    b_blk = 2 * _rup(Cout, 8) * 128 * f32                            # dbl-buf
    xpad = bblk * Cin_pad * _rup(Hp, 8) * _rup(Wp, 128) * f32        # scratch
    patch = _rup(K * K * Cin_pad, 8) * _rup(bblk * HoWo, 128) * pdt  # scratch
    acc = _rup(Cout, 8) * _rup(bblk * HoWo, 128) * f32               # temp
    return x_blk + o_blk + w_blk + b_blk + xpad + patch + acc


def _vmem_capacity_bytes():
    try:
        return int(pltpu.get_tpu_info().vmem_capacity_bytes)
    except Exception:
        return 128 * MiB


def _pick_batch_block(B, Cin, Cin_pad, Cout, H, W, Hp, Wp, Ho, Wo, K,
                      use_bf16, budget_bytes, min_grid_steps, max_unroll=8):
    """Largest divisor of B (<= max_unroll) that fits the VMEM budget AND
    leaves >= min_grid_steps grid steps (megacore sharding + DMA overlap)."""
    cap = max(1, min(B, max_unroll, B // max(min_grid_steps, 1)))
    bblk = cap
    while bblk > 1 and (
            B % bblk != 0
            or _block_vmem_bytes(bblk, Cin, Cin_pad, Cout, H, W, Hp, Wp,
                                 Ho, Wo, K, use_bf16) > budget_bytes):
        bblk -= 1
    return bblk


def wscaled_conv2d_forward(x_nchw, weight_oihw, conv_bias, extra_bias,
                           c, stride, padding, use_bf16=False):
    """x_nchw: (B, Cin, H, W) float32.  Returns (B, Cout, Ho, Wo) float32."""
    B, Cin, H, W = x_nchw.shape
    Cout, _, K, _ = weight_oihw.shape
    Ho = (H + 2 * padding - K) // stride + 1
    Wo = (W + 2 * padding - K) // stride + 1
    Hp, Wp = H + 2 * padding, W + 2 * padding
    Cin_pad = _rup(Cin, 8)      # per-tap sublane alignment in the patch matrix
    HoWo = Ho * Wo

    # Fold c into the weights (conv(x*c, W) == conv(x, W*c)), reorder to the
    # im2col layout (Cout, (kh, kw, cin_pad)) and zero-pad cin -> Cin_pad so
    # every in-kernel patch-slab store is sublane aligned.  Weight tensor is
    # tiny, so this prep is ~free, and c stays a traced scalar (no retrace).
    w_dtype = jnp.bfloat16 if use_bf16 else jnp.float32
    w_t = jnp.transpose(weight_oihw, (0, 2, 3, 1))            # (Cout, K, K, Cin)
    w_t = jnp.pad(w_t, ((0, 0), (0, 0), (0, 0), (0, Cin_pad - Cin)))
    w_mat = (w_t.reshape(Cout, K * K * Cin_pad) * c).astype(w_dtype)
    bias_col = (conv_bias + extra_bias).reshape(Cout, 1).astype(jnp.float32)

    # Generation-aware VMEM budget: v7x has 64 MiB/TC, v5e/v6e have 128 MiB.
    vmem_cap = _vmem_capacity_bytes()
    is_v7x_like = vmem_cap <= 64 * MiB
    budget = 24 * MiB if is_v7x_like else 64 * MiB
    min_grid_steps = 4 if is_v7x_like else 2    # >=2 steps on all gens

    bblk = _pick_batch_block(B, Cin, Cin_pad, Cout, H, W, Hp, Wp, Ho, Wo, K,
                             use_bf16, budget, min_grid_steps)
    grid = (B // bblk,)
    need = _block_vmem_bytes(bblk, Cin, Cin_pad, Cout, H, W, Hp, Wp, Ho, Wo,
                             K, use_bf16)
    vmem_limit = int(min(int(0.75 * vmem_cap),
                         max(32 * MiB, int(1.5 * need))))

    kernel = functools.partial(
        _wsconv_kernel, K=K, stride=stride, padding=padding,
        H=H, W=W, Ho=Ho, Wo=Wo, Cin=Cin, Cin_pad=Cin_pad)

    patch_dtype = jnp.bfloat16 if use_bf16 else jnp.float32

    out_flat = pl.pallas_call(
        kernel,
        out_shape=jax.ShapeDtypeStruct((B, Cout, HoWo), jnp.float32),
        grid_spec=pltpu.PrefetchScalarGridSpec(
            num_scalar_prefetch=0,
            grid=grid,
            in_specs=[
                pl.BlockSpec((bblk, Cin, H, W), lambda i: (i, 0, 0, 0)),
                pl.BlockSpec((Cout, K * K * Cin_pad), lambda i: (0, 0)),
                pl.BlockSpec((Cout, 1), lambda i: (0, 0)),
            ],
            out_specs=pl.BlockSpec((bblk, Cout, HoWo), lambda i: (i, 0, 0)),
            scratch_shapes=[
                pltpu.VMEM((bblk, Cin_pad, Hp, Wp), jnp.float32),
                pltpu.VMEM((K * K * Cin_pad, bblk * HoWo), patch_dtype),
            ],
        ),
        compiler_params=pltpu.CompilerParams(
            dimension_semantics=("parallel",),
            vmem_limit_bytes=vmem_limit),
    )(x_nchw, w_mat, bias_col)

    # Pure reshape (no transpose): kernel already emits channel-major output.
    return out_flat.reshape(B, Cout, Ho, Wo)


if __name__ == "__main__":
    # ----- deterministic parameter init (mirrors __init__) ------------------
    in_channels, out_channels = 4, 8
    kernel_size, stride, padding = 3, 1, 1
    lrmul = 1.0

    key = jax.random.PRNGKey(0)
    kw_key, kb_key, kx_key = jax.random.split(key, 3)

    # kaiming_normal_(weight, a=calculate_gain('conv2d')/lrmul)
    # calculate_gain('conv2d') == 1.0 -> a = 1.0 -> gain = sqrt(2/(1+a^2)) = 1.0
    fan_in = in_channels * kernel_size * kernel_size
    std = 1.0 / np.sqrt(fan_in)
    w_init = std * jax.random.normal(
        kw_key, (out_channels, in_channels, kernel_size, kernel_size),
        dtype=jnp.float32)

    c = jnp.sqrt(jnp.mean(w_init ** 2))                 # scalar constant
    weight = w_init / (c / lrmul)                       # rescaled conv weight

    # nn.Conv2d's own bias (default bias=True in nn.Conv2d): uniform init
    bound = 1.0 / np.sqrt(fan_in)
    conv_bias = jax.random.uniform(kb_key, (out_channels,), jnp.float32,
                                   minval=-bound, maxval=bound)
    # module-level extra bias: zeros (bias=True path fills with 0)
    extra_bias = jnp.zeros((out_channels,), jnp.float32)

    # ----- example input (NCHW, like PyTorch) -------------------------------
    x = jax.random.normal(kx_key, (2, in_channels, 16, 16), dtype=jnp.float32)

    out = wscaled_conv2d_forward(x, weight, conv_bias, extra_bias,
                                 c, stride, padding)
    out = jax.block_until_ready(out)

    # ----- pure-JAX reference check ------------------------------------------
    ref = lax.conv_general_dilated(
        x * c, weight, window_strides=(stride, stride),
        padding=[(padding, padding), (padding, padding)],
        dimension_numbers=("NCHW", "OIHW", "NCHW"))
    ref = ref + (conv_bias + extra_bias).reshape(1, -1, 1, 1)

    assert out.shape == ref.shape == (2, out_channels, 16, 16)
    np.testing.assert_allclose(np.asarray(out), np.asarray(ref),
                               rtol=1e-5, atol=1e-5)
    print("KERNEL_OK")
</pallas_src>

<mosaic_0001>
module attributes {stable_mosaic.version = 11 : i64} {
  func.func @_wsconv_kernel(%arg0: i32, %arg1: memref<1x4x16x16xf32, #tpu.memory_space<vmem>>, %arg2: memref<8x72xf32, #tpu.memory_space<vmem>>, %arg3: memref<8x1xf32, #tpu.memory_space<vmem>>, %arg4: memref<1x8x256xf32, #tpu.memory_space<vmem>>, %arg5: memref<1x8x18x18xf32, #tpu.memory_space<vmem>>, %arg6: memref<72x256xf32, #tpu.memory_space<vmem>>) attributes {dimension_semantics = [#tpu.dimension_semantics<parallel>], iteration_bounds = array<i64: 2>, scalar_prefetch = 0 : i64, scratch_operands = 2 : i64, tpu.core_type = #tpu.core_type<tc>, window_params = [{transform_indices = @transform_0, window_bounds = array<i64: 1, 4, 16, 16>}, {pipeline_mode = #tpu.pipeline_mode<synchronous>, transform_indices = @transform_1, window_bounds = array<i64: 8, 72>}, {pipeline_mode = #tpu.pipeline_mode<synchronous>, transform_indices = @transform_2, window_bounds = array<i64: 8, 1>}, {transform_indices = @transform_3, window_bounds = array<i64: 1, 8, 256>}]} {
    %cst = arith.constant 0.000000e+00 : f32
    %0 = vector.broadcast %cst : f32 to vector<1x4x18x18xf32>
    %c0 = arith.constant 0 : index
    %c4 = arith.constant 4 : index
    %c0_0 = arith.constant 0 : index
    %c0_1 = arith.constant 0 : index
    %1 = vector.load %arg5[%c0, %c4, %c0_0, %c0_1] : memref<1x8x18x18xf32, #tpu.memory_space<vmem>>, vector<1x4x18x18xf32>
    tpu.vector_store %arg5[%c0, %c4, %c0_0, %c0_1], %0 {strides = array<i32>} : memref<1x8x18x18xf32, #tpu.memory_space<vmem>>, vector<1x4x18x18xf32>,
    %cst_2 = arith.constant 0.000000e+00 : f32
    %2 = vector.broadcast %cst_2 : f32 to vector<1x4x1x18xf32>
    %c0_3 = arith.constant 0 : index
    %c0_4 = arith.constant 0 : index
    %c0_5 = arith.constant 0 : index
    %c0_6 = arith.constant 0 : index
    %3 = vector.load %arg5[%c0_3, %c0_4, %c0_5, %c0_6] : memref<1x8x18x18xf32, #tpu.memory_space<vmem>>, vector<1x4x1x18xf32>
    tpu.vector_store %arg5[%c0_3, %c0_4, %c0_5, %c0_6], %2 {strides = array<i32>} : memref<1x8x18x18xf32, #tpu.memory_space<vmem>>, vector<1x4x1x18xf32>,
    %cst_7 = arith.constant 0.000000e+00 : f32
    %4 = vector.broadcast %cst_7 : f32 to vector<1x4x1x18xf32>
    %c0_8 = arith.constant 0 : index
    %c0_9 = arith.constant 0 : index
    %c17 = arith.constant 17 : index
    %c0_10 = arith.constant 0 : index
    %5 = vector.load %arg5[%c0_8, %c0_9, %c17, %c0_10] : memref<1x8x18x18xf32, #tpu.memory_space<vmem>>, vector<1x4x1x18xf32>
    tpu.vector_store %arg5[%c0_8, %c0_9, %c17, %c0_10], %4 {strides = array<i32>} : memref<1x8x18x18xf32, #tpu.memory_space<vmem>>, vector<1x4x1x18xf32>,
    %cst_11 = arith.constant 0.000000e+00 : f32
    %6 = vector.broadcast %cst_11 : f32 to vector<1x4x16x1xf32>
    %c0_12 = arith.constant 0 : index
    %c0_13 = arith.constant 0 : index
    %c1 = arith.constant 1 : index
    %c0_14 = arith.constant 0 : index
    %7 = vector.load %arg5[%c0_12, %c0_13, %c1, %c0_14] : memref<1x8x18x18xf32, #tpu.memory_space<vmem>>, vector<1x4x16x1xf32>
    tpu.vector_store %arg5[%c0_12, %c0_13, %c1, %c0_14], %6 {strides = array<i32>} : memref<1x8x18x18xf32, #tpu.memory_space<vmem>>, vector<1x4x16x1xf32>,
    %cst_15 = arith.constant 0.000000e+00 : f32
    %8 = vector.broadcast %cst_15 : f32 to vector<1x4x16x1xf32>
    %c0_16 = arith.constant 0 : index
    %c0_17 = arith.constant 0 : index
    %c1_18 = arith.constant 1 : index
    %c17_19 = arith.constant 17 : index
    %9 = vector.load %arg5[%c0_16, %c0_17, %c1_18, %c17_19] : memref<1x8x18x18xf32, #tpu.memory_space<vmem>>, vector<1x4x16x1xf32>
    tpu.vector_store %arg5[%c0_16, %c0_17, %c1_18, %c17_19], %8 {strides = array<i32>} : memref<1x8x18x18xf32, #tpu.memory_space<vmem>>, vector<1x4x16x1xf32>,
    %c0_20 = arith.constant 0 : index
    %c0_21 = arith.constant 0 : index
    %c0_22 = arith.constant 0 : index
    %c0_23 = arith.constant 0 : index
    %10 = vector.load %arg1[%c0_20, %c0_21, %c0_22, %c0_23] : memref<1x4x16x16xf32, #tpu.memory_space<vmem>>, vector<1x4x16x16xf32>
    %c0_24 = arith.constant 0 : index
    %c0_25 = arith.constant 0 : index
    %c1_26 = arith.constant 1 : index
    %c1_27 = arith.constant 1 : index
    %11 = vector.load %arg5[%c0_24, %c0_25, %c1_26, %c1_27] : memref<1x8x18x18xf32, #tpu.memory_space<vmem>>, vector<1x4x16x16xf32>
    tpu.vector_store %arg5[%c0_24, %c0_25, %c1_26, %c1_27], %10 {strides = array<i32>} : memref<1x8x18x18xf32, #tpu.memory_space<vmem>>, vector<1x4x16x16xf32>,
    %c0_28 = arith.constant 0 : index
    %c0_29 = arith.constant 0 : index
    %c0_30 = arith.constant 0 : index
    %c0_31 = arith.constant 0 : index
    %12 = vector.load %arg5[%c0_28, %c0_29, %c0_30, %c0_31] : memref<1x8x18x18xf32, #tpu.memory_space<vmem>>, vector<1x8x16x16xf32>
    %13 = vector.shape_cast %12 : vector<1x8x16x16xf32> to vector<8x16x16xf32>
    %14 = vector.shape_cast %13 : vector<8x16x16xf32> to vector<8x256xf32>
    %c0_32 = arith.constant 0 : index
    %c0_33 = arith.constant 0 : index
    %15 = vector.load %arg6[%c0_32, %c0_33] : memref<72x256xf32, #tpu.memory_space<vmem>>, vector<8x256xf32>
    tpu.vector_store %arg6[%c0_32, %c0_33], %14 {strides = array<i32>} : memref<72x256xf32, #tpu.memory_space<vmem>>, vector<8x256xf32>,
    %c0_34 = arith.constant 0 : index
    %c0_35 = arith.constant 0 : index
    %c0_36 = arith.constant 0 : index
    %c1_37 = arith.constant 1 : index
    %16 = vector.load %arg5[%c0_34, %c0_35, %c0_36, %c1_37] : memref<1x8x18x18xf32, #tpu.memory_space<vmem>>, vector<1x8x16x16xf32>
    %17 = vector.shape_cast %16 : vector<1x8x16x16xf32> to vector<8x16x16xf32>
    %18 = vector.shape_cast %17 : vector<8x16x16xf32> to vector<8x256xf32>
    %c8 = arith.constant 8 : index
    %c0_38 = arith.constant 0 : index
    %19 = vector.load %arg6[%c8, %c0_38] : memref<72x256xf32, #tpu.memory_space<vmem>>, vector<8x256xf32>
    tpu.vector_store %arg6[%c8, %c0_38], %18 {strides = array<i32>} : memref<72x256xf32, #tpu.memory_space<vmem>>, vector<8x256xf32>,
    %c0_39 = arith.constant 0 : index
    %c0_40 = arith.constant 0 : index
    %c0_41 = arith.constant 0 : index
    %c2 = arith.constant 2 : index
    %20 = vector.load %arg5[%c0_39, %c0_40, %c0_41, %c2] : memref<1x8x18x18xf32, #tpu.memory_space<vmem>>, vector<1x8x16x16xf32>
    %21 = vector.shape_cast %20 : vector<1x8x16x16xf32> to vector<8x16x16xf32>
    %22 = vector.shape_cast %21 : vector<8x16x16xf32> to vector<8x256xf32>
    %c16 = arith.constant 16 : index
    %c0_42 = arith.constant 0 : index
    %23 = vector.load %arg6[%c16, %c0_42] : memref<72x256xf32, #tpu.memory_space<vmem>>, vector<8x256xf32>
    tpu.vector_store %arg6[%c16, %c0_42], %22 {strides = array<i32>} : memref<72x256xf32, #tpu.memory_space<vmem>>, vector<8x256xf32>,
    %c0_43 = arith.constant 0 : index
    %c0_44 = arith.constant 0 : index
    %c1_45 = arith.constant 1 : index
    %c0_46 = arith.constant 0 : index
    %24 = vector.load %arg5[%c0_43, %c0_44, %c1_45, %c0_46] : memref<1x8x18x18xf32, #tpu.memory_space<vmem>>, vector<1x8x16x16xf32>
    %25 = vector.shape_cast %24 : vector<1x8x16x16xf32> to vector<8x16x16xf32>
    %26 = vector.shape_cast %25 : vector<8x16x16xf32> to vector<8x256xf32>
    %c24 = arith.constant 24 : index
    %c0_47 = arith.constant 0 : index
    %27 = vector.load %arg6[%c24, %c0_47] : memref<72x256xf32, #tpu.memory_space<vmem>>, vector<8x256xf32>
    tpu.vector_store %arg6[%c24, %c0_47], %26 {strides = array<i32>} : memref<72x256xf32, #tpu.memory_space<vmem>>, vector<8x256xf32>,
    %c0_48 = arith.constant 0 : index
    %c0_49 = arith.constant 0 : index
    %c1_50 = arith.constant 1 : index
    %c1_51 = arith.constant 1 : index
    %28 = vector.load %arg5[%c0_48, %c0_49, %c1_50, %c1_51] : memref<1x8x18x18xf32, #tpu.memory_space<vmem>>, vector<1x8x16x16xf32>
    %29 = vector.shape_cast %28 : vector<1x8x16x16xf32> to vector<8x16x16xf32>
    %30 = vector.shape_cast %29 : vector<8x16x16xf32> to vector<8x256xf32>
    %c32 = arith.constant 32 : index
    %c0_52 = arith.constant 0 : index
    %31 = vector.load %arg6[%c32, %c0_52] : memref<72x256xf32, #tpu.memory_space<vmem>>, vector<8x256xf32>
    tpu.vector_store %arg6[%c32, %c0_52], %30 {strides = array<i32>} : memref<72x256xf32, #tpu.memory_space<vmem>>, vector<8x256xf32>,
    %c0_53 = arith.constant 0 : index
    %c0_54 = arith.constant 0 : index
    %c1_55 = arith.constant 1 : index
    %c2_56 = arith.constant 2 : index
    %32 = vector.load %arg5[%c0_53, %c0_54, %c1_55, %c2_56] : memref<1x8x18x18xf32, #tpu.memory_space<vmem>>, vector<1x8x16x16xf32>
    %33 = vector.shape_cast %32 : vector<1x8x16x16xf32> to vector<8x16x16xf32>
    %34 = vector.shape_cast %33 : vector<8x16x16xf32> to vector<8x256xf32>
    %c40 = arith.constant 40 : index
    %c0_57 = arith.constant 0 : index
    %35 = vector.load %arg6[%c40, %c0_57] : memref<72x256xf32, #tpu.memory_space<vmem>>, vector<8x256xf32>
    tpu.vector_store %arg6[%c40, %c0_57], %34 {strides = array<i32>} : memref<72x256xf32, #tpu.memory_space<vmem>>, vector<8x256xf32>,
    %c0_58 = arith.constant 0 : index
    %c0_59 = arith.constant 0 : index
    %c2_60 = arith.constant 2 : index
    %c0_61 = arith.constant 0 : index
    %36 = vector.load %arg5[%c0_58, %c0_59, %c2_60, %c0_61] : memref<1x8x18x18xf32, #tpu.memory_space<vmem>>, vector<1x8x16x16xf32>
    %37 = vector.shape_cast %36 : vector<1x8x16x16xf32> to vector<8x16x16xf32>
    %38 = vector.shape_cast %37 : vector<8x16x16xf32> to vector<8x256xf32>
    %c48 = arith.constant 48 : index
    %c0_62 = arith.constant 0 : index
    %39 = vector.load %arg6[%c48, %c0_62] : memref<72x256xf32, #tpu.memory_space<vmem>>, vector<8x256xf32>
    tpu.vector_store %arg6[%c48, %c0_62], %38 {strides = array<i32>} : memref<72x256xf32, #tpu.memory_space<vmem>>, vector<8x256xf32>,
    %c0_63 = arith.constant 0 : index
    %c0_64 = arith.constant 0 : index
    %c2_65 = arith.constant 2 : index
    %c1_66 = arith.constant 1 : index
    %40 = vector.load %arg5[%c0_63, %c0_64, %c2_65, %c1_66] : memref<1x8x18x18xf32, #tpu.memory_space<vmem>>, vector<1x8x16x16xf32>
    %41 = vector.shape_cast %40 : vector<1x8x16x16xf32> to vector<8x16x16xf32>
    %42 = vector.shape_cast %41 : vector<8x16x16xf32> to vector<8x256xf32>
    %c56 = arith.constant 56 : index
    %c0_67 = arith.constant 0 : index
    %43 = vector.load %arg6[%c56, %c0_67] : memref<72x256xf32, #tpu.memory_space<vmem>>, vector<8x256xf32>
    tpu.vector_store %arg6[%c56, %c0_67], %42 {strides = array<i32>} : memref<72x256xf32, #tpu.memory_space<vmem>>, vector<8x256xf32>,
    %c0_68 = arith.constant 0 : index
    %c0_69 = arith.constant 0 : index
    %c2_70 = arith.constant 2 : index
    %c2_71 = arith.constant 2 : index
    %44 = vector.load %arg5[%c0_68, %c0_69, %c2_70, %c2_71] : memref<1x8x18x18xf32, #tpu.memory_space<vmem>>, vector<1x8x16x16xf32>
    %45 = vector.shape_cast %44 : vector<1x8x16x16xf32> to vector<8x16x16xf32>
    %46 = vector.shape_cast %45 : vector<8x16x16xf32> to vector<8x256xf32>
    %c64 = arith.constant 64 : index
    %c0_72 = arith.constant 0 : index
    %47 = vector.load %arg6[%c64, %c0_72] : memref<72x256xf32, #tpu.memory_space<vmem>>, vector<8x256xf32>
    tpu.vector_store %arg6[%c64, %c0_72], %46 {strides = array<i32>} : memref<72x256xf32, #tpu.memory_space<vmem>>, vector<8x256xf32>,
    %c0_73 = arith.constant 0 : index
    %c0_74 = arith.constant 0 : index
    %48 = vector.load %arg2[%c0_73, %c0_74] : memref<8x72xf32, #tpu.memory_space<vmem>>, vector<8x72xf32>
    %c0_75 = arith.constant 0 : index
    %c0_76 = arith.constant 0 : index
    %49 = vector.load %arg6[%c0_75, %c0_76] : memref<72x256xf32, #tpu.memory_space<vmem>>, vector<72x256xf32>
    %cst_77 = arith.constant dense<0.000000e+00> : vector<8x256xf32>
    %50 = tpu.matmul %48, %49, %cst_77 {dimension_numbers = #tpu.dot_dimension_numbers<[1], [0], [0], [1], [0, 0, 1, 1], [], []>} : vector<8x72xf32>, vector<72x256xf32>, vector<8x256xf32> -> vector<8x256xf32>
    %c0_78 = arith.constant 0 : index
    %c0_79 = arith.constant 0 : index
    %51 = vector.load %arg3[%c0_78, %c0_79] : memref<8x1xf32, #tpu.memory_space<vmem>>, vector<8x1xf32>
    %52 = vector.broadcast %51 : vector<8x1xf32> to vector<8x256xf32>
    %53 = arith.addf %50, %52 : vector<8x256xf32>
    %c0_80 = arith.constant 0 : index
    %c0_81 = arith.constant 0 : index
    %c0_82 = arith.constant 0 : index
    %54 = vector.load %arg4[%c0_80, %c0_81, %c0_82] : memref<1x8x256xf32, #tpu.memory_space<vmem>>, vector<1x8x256xf32>
    %55 = vector.shape_cast %54 : vector<1x8x256xf32> to vector<8x256xf32>
    %56 = vector.shape_cast %53 : vector<8x256xf32> to vector<1x8x256xf32>
    tpu.vector_store %arg4[%c0_80, %c0_81, %c0_82], %56 {strides = array<i32>} : memref<1x8x256xf32, #tpu.memory_space<vmem>>, vector<1x8x256xf32>,
    return
  }
  func.func @transform_0(%arg0: i32) -> (i32, i32, i32, i32) {
    %c0_i32 = arith.constant 0 : i32
    %c0_i32_0 = arith.constant 0 : i32
    %c0_i32_1 = arith.constant 0 : i32
    %c0_i32_2 = arith.constant 0 : i32
    return %arg0, %c0_i32, %c0_i32_0, %c0_i32_1 : i32, i32, i32, i32
  }
  func.func @transform_1(%arg0: i32) -> (i32, i32) {
    %c0_i32 = arith.constant 0 : i32
    %c0_i32_0 = arith.constant 0 : i32
    %c0_i32_1 = arith.constant 0 : i32
    return %c0_i32, %c0_i32_0 : i32, i32
  }
  func.func @transform_2(%arg0: i32) -> (i32, i32) {
    %c0_i32 = arith.constant 0 : i32
    %c0_i32_0 = arith.constant 0 : i32
    %c0_i32_1 = arith.constant 0 : i32
    return %c0_i32, %c0_i32_0 : i32, i32
  }
  func.func @transform_3(%arg0: i32) -> (i32, i32, i32) {
    %c0_i32 = arith.constant 0 : i32
    %c0_i32_0 = arith.constant 0 : i32
    %c0_i32_1 = arith.constant 0 : i32
    return %arg0, %c0_i32, %c0_i32_0 : i32, i32, i32
  }
}

</mosaic_0001>

<llo_original>
// kernel: tpu_custom_call.1
$region0: #{tpu_custom_call.1}
  #allocation0 [shape = 'u32[]', space=smem, size = 0x4, offset = 0x4, fixed_abs, tag = 'smem constant byte address 0x4 - core index']
  #allocation1 [shape = 'u32[144,128]{1,0:T(1,128)}', space=vmem, size = 0x12000, scoped, tag = 'internal scratch']
  #allocation2 [shape = 'f32[1,8,18,18]{3,2,1,0:T(8,128)}', space=vmem, size = 0x18000, scoped, tag = 'scratch operand']
  #allocation3 [shape = 'f32[72,256]{1,0:T(8,128)}', space=vmem, size = 0x12000, scoped, tag = 'scratch operand']
  %s0 = inlined_call_operand.hbm [shape: f32[2,4,16,16], index: 0, kind: input, shape index: {}]
  %s1 = inlined_call_operand.vmem [shape: f32[8,72], index: 1, kind: input, shape index: {}]
  %s2 = inlined_call_operand.vmem [shape: f32[8,1], index: 2, kind: input, shape index: {}]
  %s3 = inlined_call_operand.hbm [shape: f32[2,8,256], index: 3, kind: output, shape index: {}]
  %s4 = sld [smem:[#allocation0]]
  $region49: #{tpu_custom_call.1} parent=0
    _
  %s6 = ssub.s32 1, %s4
  %s7 = scalar_select 0, %s6, %s4
  $region1: #{tpu_custom_call.1} parent=0
    #allocation4 [shape = 'u8[65536]{0}', space=vmem, size = 0x10000, scoped, tag = 'input window, operand 0']
    #allocation5 [shape = 's32[2]{0}', space=sflag, size = 0x8, scoped, tag = 'scoped memory for tpu_custom_call.1']
    #allocation6 [shape = 's32[2]{0}', space=sflag, size = 0x8, scoped, tag = 'scoped memory for tpu_custom_call.1']
    #allocation7 [shape = 'u8[16384]{0}', space=vmem, size = 0x4000, scoped, tag = 'output window, operand 0']
    %8 = vsyncpa [#allocation5], 0
    %s9 = scalar_lea.sflag [#allocation5], 1
    %10 = vsyncpa %s9, 0
    %11 = vsyncpa [#allocation6], 0
    %s12 = scalar_lea.sflag [#allocation6], 1
    %13 = vsyncpa %s12, 0
    loop: start=0, step=1, limit=4
    $region2: #{tpu_custom_call.1} parent=1 // loop_pre_header
      _
    $region3: #{tpu_custom_call.1} parent=1 // loop_header
      %s15 = sphi 0, %s19
      %p16 = scmp.ge.s32.totalorder %s15, 4
      %s25 = sphi 0, %s27
      %s28 = sphi 0, %s25
      %s29 = sphi 0, %s28
      %s45 = sphi 0, %s29
      %s49 = sphi 0, %s49
      %s51 = sphi 0, %s49
      %s52 = sphi 0, %s51
      %s66 = sphi 0, %s52
      %s70 = sphi 0, %s70
      %s72 = sphi 0, %s70
      %s73 = sphi 0, %s72
      %s87 = sphi 0, %s73
      %s93 = sphi 0, %s95
      %s96 = sphi 0, %s93
      %s97 = sphi 0, %s96
      %s113 = sphi 0, %s97
    $region4: #{tpu_custom_call.1} parent=1 // loop_header_branch
      %18 = sbr.rel (%p16) target = $region8
    $region5: #{tpu_custom_call.1} parent=1 // loop_body
      %s20 = ssub.s32 %s15, 1
      %s21 = ssub.s32 %s15, 2
      %s22 = sadd.s32 %s15, 1
      %s23 = ssub.s32 %s15, %s22
      %p24 = scmp.eq.s32.totalorder %s23, 0
      %s26 = sadd.s32 %s25, 1
      %s27 = scalar_select %p24, %s25, %s26
      %p30 = pneg %p24
      %p31 = scmp.eq.s32.totalorder %s15, 1
      %p32 = por %p30, %p31
      %p33 = scmp.ne.s32.totalorder %s25, %s28
      %p34 = scmp.eq.s32.totalorder %s15, 0
      %p35 = por %p33, %p34
      %p36 = scmp.ne.s32.totalorder %s25, %s28
      %p37 = scmp.eq.s32.totalorder %s20, 1
      %p38 = por %p36, %p37
      %p39 = scmp.ne.s32.totalorder %s28, %s29
      %p40 = scmp.eq.s32.totalorder %s20, 0
      %p41 = por %p39, %p40
      %p42 = scmp.ne.s32.totalorder %s28, %s29
      %p43 = scmp.eq.s32.totalorder %s21, 1
      %p44 = por %p42, %p43
      %p46 = scmp.ne.s32.totalorder %s29, %s45
      %p47 = scmp.eq.s32.totalorder %s21, 0
      %p48 = por %p46, %p47
      %s50 = sadd.s32 %s49, 1
      %p53 = scmp.eq.s32.totalorder %s15, 1
      %p54 = scmp.ne.s32.totalorder %s49, %s51
      %p55 = scmp.eq.s32.totalorder %s15, 0
      %p56 = por %p54, %p55
      %p57 = scmp.ne.s32.totalorder %s49, %s51
      %p58 = scmp.eq.s32.totalorder %s20, 1
      %p59 = por %p57, %p58
      %p60 = scmp.ne.s32.totalorder %s51, %s52
      %p61 = scmp.eq.s32.totalorder %s20, 0
      %p62 = por %p60, %p61
      %p63 = scmp.ne.s32.totalorder %s51, %s52
      %p64 = scmp.eq.s32.totalorder %s21, 1
      %p65 = por %p63, %p64
      %p67 = scmp.ne.s32.totalorder %s52, %s66
      %p68 = scmp.eq.s32.totalorder %s21, 0
      %p69 = por %p67, %p68
      %s71 = sadd.s32 %s70, 1
      %p74 = scmp.eq.s32.totalorder %s15, 1
      %p75 = scmp.ne.s32.totalorder %s70, %s72
      %p76 = scmp.eq.s32.totalorder %s15, 0
      %p77 = por %p75, %p76
      %p78 = scmp.ne.s32.totalorder %s70, %s72
      %p79 = scmp.eq.s32.totalorder %s20, 1
      %p80 = por %p78, %p79
      %p81 = scmp.ne.s32.totalorder %s72, %s73
      %p82 = scmp.eq.s32.totalorder %s20, 0
      %p83 = por %p81, %p82
      %p84 = scmp.ne.s32.totalorder %s72, %s73
      %p85 = scmp.eq.s32.totalorder %s21, 1
      %p86 = por %p84, %p85
      %p88 = scmp.ne.s32.totalorder %s73, %s87
      %p89 = scmp.eq.s32.totalorder %s21, 0
      %p90 = por %p88, %p89
      %s91 = ssub.s32 %s15, %s22
      %p92 = scmp.eq.s32.totalorder %s91, 0
      %s94 = sadd.s32 %s93, 1
      %s95 = scalar_select %p92, %s93, %s94
      %p98 = pneg %p92
      %p99 = scmp.eq.s32.totalorder %s15, 1
      %p100 = por %p98, %p99
      %p101 = scmp.ne.s32.totalorder %s93, %s96
      %p102 = scmp.eq.s32.totalorder %s15, 0
      %p103 = por %p101, %p102
      %p104 = scmp.ne.s32.totalorder %s93, %s96
      %p105 = scmp.eq.s32.totalorder %s20, 1
      %p106 = por %p104, %p105
      %p107 = scmp.ne.s32.totalorder %s96, %s97
      %p108 = scmp.eq.s32.totalorder %s20, 0
      %p109 = por %p107, %p108
      %p110 = scmp.ne.s32.totalorder %s96, %s97
      %p111 = scmp.eq.s32.totalorder %s21, 1
      %p112 = por %p110, %p111
      %p114 = scmp.ne.s32.totalorder %s97, %s113
      %p115 = scmp.eq.s32.totalorder %s21, 0
      %p116 = por %p114, %p115
      %p117 = scmp.le.s32.totalorder 1, %s15
      %p118 = scmp.lt.s32.totalorder %s15, 3
      %p119 = pnand %p117, %p118
      %p120 = pneg %p119
      // Predicated region
      $region9: #{tpu_custom_call.1} parent=5 // pred_check
        _
      $region10: #{tpu_custom_call.1} parent=5 // pred_check_branch
        %122 = sbr.rel (%p119) target = $region12
      $region11: #{tpu_custom_call.1} parent=5 // pred_region
        %s123 = ssub.s32 %s15, 1
        // Predicated region
        $region13: #{tpu_custom_call.1} parent=11 // pred_check
          %p124 = pneg %p62
        $region14: #{tpu_custom_call.1} parent=11 // pred_check_branch
          %126 = sbr.rel (%p124) target = $region16
        $region15: #{tpu_custom_call.1} parent=11 // pred_region
          _
        $region16: #{tpu_custom_call.1} parent=11 // pred_fallthru
          _
        // Predicated region
        $region17: #{tpu_custom_call.1} parent=11 // pred_check
          %p127 = pneg %p83
        $region18: #{tpu_custom_call.1} parent=11 // pred_check_branch
          %129 = sbr.rel (%p127) target = $region20
        $region19: #{tpu_custom_call.1} parent=11 // pred_region
          _
        $region20: #{tpu_custom_call.1} parent=11 // pred_fallthru
          _
      $region12: #{tpu_custom_call.1} parent=5 // pred_fallthru
        _
      %p130 = scmp.lt.s32.totalorder %s15, 2
      // Predicated region
      $region21: #{tpu_custom_call.1} parent=5 // pred_check
        %p131 = pneg %p130
      $region22: #{tpu_custom_call.1} parent=5 // pred_check_branch
        %133 = sbr.rel (%p131) target = $region24
      $region23: #{tpu_custom_call.1} parent=5 // pred_region
        // Predicated region
        $region25: #{tpu_custom_call.1} parent=23 // pred_check
          %p134 = pneg %p35
        $region26: #{tpu_custom_call.1} parent=23 // pred_check_branch
          %136 = sbr.rel (%p134) target = $region28
        $region27: #{tpu_custom_call.1} parent=23 // pred_region
          %s137 = sand.u32 %s25, 1
          %s138 = scalar_lea.sflag [#allocation5], %s137
          %s139 = sand.u32 %s25, 1
          %s140 = smul.addr %s139, 64
          %s141 = scalar_lea.vmem [#allocation4], %s140
          %s143 = ssub.s32 1024, 1024
          %144 = vsyncadd %s138, %s143
          %s145 = smul.addr %s15, 8
          %s146 = smul.addr %s145, 128
          %s147 = scalar_lea.hbm %s0, %s146
          %s148 = sshll.u32 %s141, 4
          %s149 = int_to_ptr.vmem [resolvable:$true] %s148
          %154 = dma.hbm_to_vmem [thread:$0]  %s147, 1024, %s149, %s138, 128, 128, 8
        $region28: #{tpu_custom_call.1} parent=23 // pred_fallthru
          _
      $region24: #{tpu_custom_call.1} parent=5 // pred_fallthru
        _
      %p155 = scmp.le.s32.totalorder 1, %s15
      %p156 = scmp.lt.s32.totalorder %s15, 3
      %p157 = pnand %p155, %p156
      %p158 = pneg %p157
      // Predicated region
      $region29: #{tpu_custom_call.1} parent=5 // pred_check
        _
      $region30: #{tpu_custom_call.1} parent=5 // pred_check_branch
        %160 = sbr.rel (%p157) target = $region32
      $region31: #{tpu_custom_call.1} parent=5 // pred_region
        %s161 = ssub.s32 %s15, 1
        %s162 = sand.u32 %s28, 1
        %s163 = scalar_lea.sflag [#allocation5], %s162
        %s164 = sand.u32 %s28, 1
        %s165 = smul.addr %s164, 64
        %s166 = scalar_lea.vmem [#allocation4], %s165
        // Predicated region
        $region33: #{tpu_custom_call.1} parent=31 // pred_check
          %p167 = pneg %p41
        $region34: #{tpu_custom_call.1} parent=31 // pred_check_branch
          %169 = sbr.rel (%p167) target = $region36
        $region35: #{tpu_custom_call.1} parent=31 // pred_region
          %170 = dma.done %s163, 1024
        $region36: #{tpu_custom_call.1} parent=31 // pred_fallthru
          _
        %s171 = sand.u32 %s28, 1
        %s172 = scalar_lea.sflag [#allocation5], %s171
        %s173 = sand.u32 %s28, 1
        %s174 = smul.addr %s173, 64
        %s175 = scalar_lea.vmem [#allocation4], %s174
        %p176 = pneg %p41
        %p177 = pneg %p38
        %p178 = pneg %p62
        %p179 = pneg %p59
        %p180 = pneg %p83
        %p181 = pneg %p80
        %p182 = pneg %p109
        %p183 = pneg %p106
        %s184 = sand.u32 %s96, 1
        %s185 = scalar_lea.sflag [#allocation6], %s184
        %s186 = sand.u32 %s96, 1
        %s187 = smul.addr %s186, 16
        %s188 = scalar_lea.vmem [#allocation7], %s187
        %s189 = scalar_lea.vmem [#allocation2], 96
        %vm190 = vcmask 146432
        %191 = vst.msk [vmem:[%s189] sm:$0xff] %vm190, 0.0
        %192 = vst.msk [vmem:[%s189 + $0x8] sm:$0xff] %vm190, 0.0
        %vm193 = vcmask 140288
        %194 = vst.msk [vmem:[%s189 + $0x10] sm:$0x3] %vm193, 0.0
        %195 = vst.msk [vmem:[%s189 + $0x18] sm:$0xff] %vm190, 0.0
        %196 = vst.msk [vmem:[%s189 + $0x20] sm:$0xff] %vm190, 0.0
        %197 = vst.msk [vmem:[%s189 + $0x28] sm:$0x3] %vm193, 0.0
        %198 = vst.msk [vmem:[%s189 + $0x30] sm:$0xff] %vm190, 0.0
        %199 = vst.msk [vmem:[%s189 + $0x38] sm:$0xff] %vm190, 0.0
        %200 = vst.msk [vmem:[%s189 + $0x40] sm:$0x3] %vm193, 0.0
        %201 = vst.msk [vmem:[%s189 + $0x48] sm:$0xff] %vm190, 0.0
        %202 = vst.msk [vmem:[%s189 + $0x50] sm:$0xff] %vm190, 0.0
        %203 = vst.msk [vmem:[%s189 + $0x58] sm:$0x3] %vm193, 0.0
        %vm204 = vcmask 139264
        %205 = vst.msk [vmem:[#allocation2] sm:$0x1] %vm204, 0.0
        %206 = vst.msk [vmem:[#allocation2 + $0x18] sm:$0x1] %vm204, 0.0
        %207 = vst.msk [vmem:[#allocation2 + $0x30] sm:$0x1] %vm204, 0.0
        %208 = vst.msk [vmem:[#allocation2 + $0x48] sm:$0x1] %vm204, 0.0
        %209 = vst.msk [vmem:[#allocation2 + $0x11] sm:$0x1] %vm204, 0.0
        %210 = vst.msk [vmem:[#allocation2 + $0x29] sm:$0x1] %vm204, 0.0
        %211 = vst.msk [vmem:[#allocation2 + $0x41] sm:$0x1] %vm204, 0.0
        %212 = vst.msk [vmem:[#allocation2 + $0x59] sm:$0x1] %vm204, 0.0
        %vm213 = vcmask 7168
        %214 = vst.msk [vmem:[#allocation2 + $0x1] sm:$0xff] %vm213, 0.0
        %215 = vst.msk [vmem:[#allocation2 + $0x9] sm:$0xff] %vm213, 0.0
        %216 = vst.msk [vmem:[#allocation2 + $0x19] sm:$0xff] %vm213, 0.0
        %217 = vst.msk [vmem:[#allocation2 + $0x21] sm:$0xff] %vm213, 0.0
        %218 = vst.msk [vmem:[#allocation2 + $0x31] sm:$0xff] %vm213, 0.0
        %219 = vst.msk [vmem:[#allocation2 + $0x39] sm:$0xff] %vm213, 0.0
        %220 = vst.msk [vmem:[#allocation2 + $0x49] sm:$0xff] %vm213, 0.0
        %221 = vst.msk [vmem:[#allocation2 + $0x51] sm:$0xff] %vm213, 0.0
        %vm222 = vcmask 146568
        %223 = vst.msk [vmem:[#allocation2 + $0x1] sm:$0xff] %vm222, 0.0
        %224 = vst.msk [vmem:[#allocation2 + $0x9] sm:$0xff] %vm222, 0.0
        %225 = vst.msk [vmem:[#allocation2 + $0x19] sm:$0xff] %vm222, 0.0
        %226 = vst.msk [vmem:[#allocation2 + $0x21] sm:$0xff] %vm222, 0.0
        %227 = vst.msk [vmem:[#allocation2 + $0x31] sm:$0xff] %vm222, 0.0
        %228 = vst.msk [vmem:[#allocation2 + $0x39] sm:$0xff] %vm222, 0.0
        %229 = vst.msk [vmem:[#allocation2 + $0x49] sm:$0xff] %vm222, 0.0
        %230 = vst.msk [vmem:[#allocation2 + $0x51] sm:$0xff] %vm222, 0.0
        %v231 = vld [vmem:[%s166] sm:$0xff]
        %v232 = vld [vmem:[%s166 + $0x8] sm:$0xff]
        %v233 = vld [vmem:[%s166 + $0x10] sm:$0xff]
        %v234 = vld [vmem:[%s166 + $0x18] sm:$0xff]
        %v235 = vld [vmem:[%s166 + $0x20] sm:$0xff]
        %v236 = vld [vmem:[%s166 + $0x28] sm:$0xff]
        %v237 = vld [vmem:[%s166 + $0x30] sm:$0xff]
        %v238 = vld [vmem:[%s166 + $0x38] sm:$0xff]
        %247 = vrot.lane.b32.xlu0 %v231, 1
        %v248 = vpop.permute.xlu0 %247
        %249 = vrot.lane.b32.xlu0 %v232, 1
        %v250 = vpop.permute.xlu0 %249
        %251 = vrot.lane.b32.xlu0 %v233, 1
        %v252 = vpop.permute.xlu0 %251
        %253 = vrot.lane.b32.xlu0 %v234, 1
        %v254 = vpop.permute.xlu0 %253
        %255 = vrot.lane.b32.xlu0 %v235, 1
        %v256 = vpop.permute.xlu0 %255
        %257 = vrot.lane.b32.xlu0 %v236, 1
        %v258 = vpop.permute.xlu0 %257
        %259 = vrot.lane.b32.xlu0 %v237, 1
        %v260 = vpop.permute.xlu0 %259
        %261 = vrot.lane.b32.xlu0 %v238, 1
        %v262 = vpop.permute.xlu0 %261
        %vm271 = vcmask 138248
        %272 = vst.msk [vmem:[#allocation2 + $0x1] sm:$0xff] %vm271, %v248
        %273 = vst.msk [vmem:[#allocation2 + $0x9] sm:$0xff] %vm271, %v250
        %274 = vst.msk [vmem:[#allocation2 + $0x19] sm:$0xff] %vm271, %v252
        %275 = vst.msk [vmem:[#allocation2 + $0x21] sm:$0xff] %vm271, %v254
        %276 = vst.msk [vmem:[#allocation2 + $0x31] sm:$0xff] %vm271, %v256
        %277 = vst.msk [vmem:[#allocation2 + $0x39] sm:$0xff] %vm271, %v258
        %278 = vst.msk [vmem:[#allocation2 + $0x49] sm:$0xff] %vm271, %v260
        %279 = vst.msk [vmem:[#allocation2 + $0x51] sm:$0xff] %vm271, %v262
        %v280 = vld [vmem:[#allocation2] sm:$0xff]
        %v281 = vld [vmem:[#allocation2 + $0x8] sm:$0xff]
        %v282 = vld [vmem:[#allocation2 + $0x18] sm:$0xff]
        %v283 = vld [vmem:[#allocation2 + $0x20] sm:$0xff]
        %v284 = vld [vmem:[#allocation2 + $0x30] sm:$0xff]
        %v285 = vld [vmem:[#allocation2 + $0x38] sm:$0xff]
        %v286 = vld [vmem:[#allocation2 + $0x48] sm:$0xff]
        %v287 = vld [vmem:[#allocation2 + $0x50] sm:$0xff]
        %v288 = vld [vmem:[#allocation2 + $0x60] sm:$0xff]
        %v289 = vld [vmem:[#allocation2 + $0x68] sm:$0xff]
        %v290 = vld [vmem:[#allocation2 + $0x78] sm:$0xff]
        %v291 = vld [vmem:[#allocation2 + $0x80] sm:$0xff]
        %v292 = vld [vmem:[#allocation2 + $0x90] sm:$0xff]
        %v293 = vld [vmem:[#allocation2 + $0x98] sm:$0xff]
        %v294 = vld [vmem:[#allocation2 + $0xa8] sm:$0xff]
        %v295 = vld [vmem:[#allocation2 + $0xb0] sm:$0xff]
        %v296 = vcombine.low %v280, %v284
        %v297 = vcombine.high %v280, %v284
        %v299 = vunpack.c.l.s4 1983009808
        %v300 = vunpack.c.0.s8 %v299
        %v301 = vlaneseq
        %v302 = vshrl.u32 %v301, 7
        %v303 = vsub.s32 %v300, %v302
        %v304 = vrot.slane %v296, %v303
        %v306 = vunpack.c.l.s4 1983009808
        %v307 = vunpack.c.0.s8 %v306
        %v308 = vlaneseq
        %v309 = vshrl.u32 %v308, 7
        %v310 = vsub.s32 %v307, %v309
        %v311 = vrot.slane %v297, %v310
        %v312 = vcombine.low %v282, %v286
        %v313 = vcombine.high %v282, %v286
        %v315 = vunpack.c.l.s4 1983009808
        %v316 = vunpack.c.0.s8 %v315
        %v317 = vlaneseq
        %v318 = vshrl.u32 %v317, 7
        %v319 = vsub.s32 %v316, %v318
        %v320 = vrot.slane %v312, %v319
        %v322 = vunpack.c.l.s4 1983009808
        %v323 = vunpack.c.0.s8 %v322
        %v324 = vlaneseq
        %v325 = vshrl.u32 %v324, 7
        %v326 = vsub.s32 %v323, %v325
        %v327 = vrot.slane %v313, %v326
        %v328 = vcombine.low %v288, %v292
        %v329 = vcombine.high %v288, %v292
        %v331 = vunpack.c.l.s4 1983009808
        %v332 = vunpack.c.0.s8 %v331
        %v333 = vlaneseq
        %v334 = vshrl.u32 %v333, 7
        %v335 = vsub.s32 %v332, %v334
        %v336 = vrot.slane %v328, %v335
        %v338 = vunpack.c.l.s4 1983009808
        %v339 = vunpack.c.0.s8 %v338
        %v340 = vlaneseq
        %v341 = vshrl.u32 %v340, 7
        %v342 = vsub.s32 %v339, %v341
        %v343 = vrot.slane %v329, %v342
        %v344 = vcombine.low %v290, %v294
        %v345 = vcombine.high %v290, %v294
        %v347 = vunpack.c.l.s4 1983009808
        %v348 = vunpack.c.0.s8 %v347
        %v349 = vlaneseq
        %v350 = vshrl.u32 %v349, 7
        %v351 = vsub.s32 %v348, %v350
        %v352 = vrot.slane %v344, %v351
        %v354 = vunpack.c.l.s4 1983009808
        %v355 = vunpack.c.0.s8 %v354
        %v356 = vlaneseq
        %v357 = vshrl.u32 %v356, 7
        %v358 = vsub.s32 %v355, %v357
        %v359 = vrot.slane %v345, %v358
        %v360 = vcombine.low %v304, %v320
        %v361 = vcombine.high %v304, %v320
        %v363 = vunpack.c.l.s4 1934713408
        %v364 = vunpack.c.0.s8 %v363
        %v365 = vlaneseq
        %v366 = vshrl.u32 %v365, 7
        %v367 = vsub.s32 %v364, %v366
        %v368 = vrot.slane %v360, %v367
        %v370 = vunpack.c.l.s4 1934713408
        %v371 = vunpack.c.0.s8 %v370
        %v372 = vlaneseq
        %v373 = vshrl.u32 %v372, 7
        %v374 = vsub.s32 %v371, %v373
        %v375 = vrot.slane %v361, %v374
        %v376 = vcombine.low %v311, %v327
        %v377 = vcombine.high %v311, %v327
        %v379 = vunpack.c.l.s4 1934713408
        %v380 = vunpack.c.0.s8 %v379
        %v381 = vlaneseq
        %v382 = vshrl.u32 %v381, 7
        %v383 = vsub.s32 %v380, %v382
        %v384 = vrot.slane %v376, %v383
        %v386 = vunpack.c.l.s4 1934713408
        %v387 = vunpack.c.0.s8 %v386
        %v388 = vlaneseq
        %v389 = vshrl.u32 %v388, 7
        %v390 = vsub.s32 %v387, %v389
        %v391 = vrot.slane %v377, %v390
        %v392 = vcombine.low %v336, %v352
        %v393 = vcombine.high %v336, %v352
        %v395 = vunpack.c.l.s4 1934713408
        %v396 = vunpack.c.0.s8 %v395
        %v397 = vlaneseq
        %v398 = vshrl.u32 %v397, 7
        %v399 = vsub.s32 %v396, %v398
        %v400 = vrot.slane %v392, %v399
        %v402 = vunpack.c.l.s4 1934713408
        %v403 = vunpack.c.0.s8 %v402
        %v404 = vlaneseq
        %v405 = vshrl.u32 %v404, 7
        %v406 = vsub.s32 %v403, %v405
        %v407 = vrot.slane %v393, %v406
        %v408 = vcombine.low %v343, %v359
        %v409 = vcombine.high %v343, %v359
        %v411 = vunpack.c.l.s4 1934713408
        %v412 = vunpack.c.0.s8 %v411
        %v413 = vlaneseq
        %v414 = vshrl.u32 %v413, 7
        %v415 = vsub.s32 %v412, %v414
        %v416 = vrot.slane %v408, %v415
        %v418 = vunpack.c.l.s4 1934713408
        %v419 = vunpack.c.0.s8 %v418
        %v420 = vlaneseq
        %v421 = vshrl.u32 %v420, 7
        %v422 = vsub.s32 %v419, %v421
        %v423 = vrot.slane %v409, %v422
        %v424 = vcombine.low %v368, %v400
        %v425 = vcombine.high %v368, %v400
        %v426 = vcombine.low %v375, %v407
        %v427 = vcombine.high %v375, %v407
        %v428 = vcombine.low %v384, %v416
        %v429 = vcombine.high %v384, %v416
        %v430 = vcombine.low %v391, %v423
        %v431 = vcombine.high %v391, %v423
        %v432 = vcombine.low %v281, %v285
        %v433 = vcombine.high %v281, %v285
        %v435 = vunpack.c.l.s4 1983009808
        %v436 = vunpack.c.0.s8 %v435
        %v437 = vlaneseq
        %v438 = vshrl.u32 %v437, 7
        %v439 = vsub.s32 %v436, %v438
        %v440 = vrot.slane %v432, %v439
        %v442 = vunpack.c.l.s4 1983009808
        %v443 = vunpack.c.0.s8 %v442
        %v444 = vlaneseq
        %v445 = vshrl.u32 %v444, 7
        %v446 = vsub.s32 %v443, %v445
        %v447 = vrot.slane %v433, %v446
        %v448 = vcombine.low %v283, %v287
        %v449 = vcombine.high %v283, %v287
        %v451 = vunpack.c.l.s4 1983009808
        %v452 = vunpack.c.0.s8 %v451
        %v453 = vlaneseq
        %v454 = vshrl.u32 %v453, 7
        %v455 = vsub.s32 %v452, %v454
        %v456 = vrot.slane %v448, %v455
        %v458 = vunpack.c.l.s4 1983009808
        %v459 = vunpack.c.0.s8 %v458
        %v460 = vlaneseq
        %v461 = vshrl.u32 %v460, 7
        %v462 = vsub.s32 %v459, %v461
        %v463 = vrot.slane %v449, %v462
        %v464 = vcombine.low %v289, %v293
        %v465 = vcombine.high %v289, %v293
        %v467 = vunpack.c.l.s4 1983009808
        %v468 = vunpack.c.0.s8 %v467
        %v469 = vlaneseq
        %v470 = vshrl.u32 %v469, 7
        %v471 = vsub.s32 %v468, %v470
        %v472 = vrot.slane %v464, %v471
        %v474 = vunpack.c.l.s4 1983009808
        %v475 = vunpack.c.0.s8 %v474
        %v476 = vlaneseq
        %v477 = vshrl.u32 %v476, 7
        %v478 = vsub.s32 %v475, %v477
        %v479 = vrot.slane %v465, %v478
        %v480 = vcombine.low %v291, %v295
        %v481 = vcombine.high %v291, %v295
        %v483 = vunpack.c.l.s4 1983009808
        %v484 = vunpack.c.0.s8 %v483
        %v485 = vlaneseq
        %v486 = vshrl.u32 %v485, 7
        %v487 = vsub.s32 %v484, %v486
        %v488 = vrot.slane %v480, %v487
        %v490 = vunpack.c.l.s4 1983009808
        %v491 = vunpack.c.0.s8 %v490
        %v492 = vlaneseq
        %v493 = vshrl.u32 %v492, 7
        %v494 = vsub.s32 %v491, %v493
        %v495 = vrot.slane %v481, %v494
        %v496 = vcombine.low %v440, %v456
        %v497 = vcombine.high %v440, %v456
        %v499 = vunpack.c.l.s4 1934713408
        %v500 = vunpack.c.0.s8 %v499
        %v501 = vlaneseq
        %v502 = vshrl.u32 %v501, 7
        %v503 = vsub.s32 %v500, %v502
        %v504 = vrot.slane %v496, %v503
        %v506 = vunpack.c.l.s4 1934713408
        %v507 = vunpack.c.0.s8 %v506
        %v508 = vlaneseq
        %v509 = vshrl.u32 %v508, 7
        %v510 = vsub.s32 %v507, %v509
        %v511 = vrot.slane %v497, %v510
        %v512 = vcombine.low %v447, %v463
        %v513 = vcombine.high %v447, %v463
        %v515 = vunpack.c.l.s4 1934713408
        %v516 = vunpack.c.0.s8 %v515
        %v517 = vlaneseq
        %v518 = vshrl.u32 %v517, 7
        %v519 = vsub.s32 %v516, %v518
        %v520 = vrot.slane %v512, %v519
        %v522 = vunpack.c.l.s4 1934713408
        %v523 = vunpack.c.0.s8 %v522
        %v524 = vlaneseq
        %v525 = vshrl.u32 %v524, 7
        %v526 = vsub.s32 %v523, %v525
        %v527 = vrot.slane %v513, %v526
        %v528 = vcombine.low %v472, %v488
        %v529 = vcombine.high %v472, %v488
        %v531 = vunpack.c.l.s4 1934713408
        %v532 = vunpack.c.0.s8 %v531
        %v533 = vlaneseq
        %v534 = vshrl.u32 %v533, 7
        %v535 = vsub.s32 %v532, %v534
        %v536 = vrot.slane %v528, %v535
        %v538 = vunpack.c.l.s4 1934713408
        %v539 = vunpack.c.0.s8 %v538
        %v540 = vlaneseq
        %v541 = vshrl.u32 %v540, 7
        %v542 = vsub.s32 %v539, %v541
        %v543 = vrot.slane %v529, %v542
        %v544 = vcombine.low %v479, %v495
        %v545 = vcombine.high %v479, %v495
        %v547 = vunpack.c.l.s4 1934713408
        %v548 = vunpack.c.0.s8 %v547
        %v549 = vlaneseq
        %v550 = vshrl.u32 %v549, 7
        %v551 = vsub.s32 %v548, %v550
        %v552 = vrot.slane %v544, %v551
        %v554 = vunpack.c.l.s4 1934713408
        %v555 = vunpack.c.0.s8 %v554
        %v556 = vlaneseq
        %v557 = vshrl.u32 %v556, 7
        %v558 = vsub.s32 %v555, %v557
        %v559 = vrot.slane %v545, %v558
        %v560 = vcombine.low %v504, %v536
        %v561 = vcombine.high %v504, %v536
        %v562 = vcombine.low %v511, %v543
        %v563 = vcombine.high %v511, %v543
        %v564 = vcombine.low %v520, %v552
        %v565 = vcombine.high %v520, %v552
        %v566 = vcombine.low %v527, %v559
        %v567 = vcombine.high %v527, %v559
        %569 = vrot.lane.b32.xlu0 %v425, 16
        %v570 = vpop.permute.xlu0 %569
        %573 = vrot.lane.b32.xlu0 %v426, 32
        %v574 = vpop.permute.xlu0 %573
        %577 = vrot.lane.b32.xlu0 %v427, 48
        %v578 = vpop.permute.xlu0 %577
        %581 = vrot.lane.b32.xlu0 %v428, 64
        %v582 = vpop.permute.xlu0 %581
        %585 = vrot.lane.b32.xlu0 %v429, 80
        %v586 = vpop.permute.xlu0 %585
        %589 = vrot.lane.b32.xlu0 %v430, 96
        %v590 = vpop.permute.xlu0 %589
        %593 = vrot.lane.b32.xlu0 %v431, 112
        %v594 = vpop.permute.xlu0 %593
        %597 = vrot.lane.b32.xlu0 %v561, 16
        %v598 = vpop.permute.xlu0 %597
        %601 = vrot.lane.b32.xlu0 %v562, 32
        %v602 = vpop.permute.xlu0 %601
        %605 = vrot.lane.b32.xlu0 %v563, 48
        %v606 = vpop.permute.xlu0 %605
        %609 = vrot.lane.b32.xlu0 %v564, 64
        %v610 = vpop.permute.xlu0 %609
        %613 = vrot.lane.b32.xlu0 %v565, 80
        %v614 = vpop.permute.xlu0 %613
        %617 = vrot.lane.b32.xlu0 %v566, 96
        %v618 = vpop.permute.xlu0 %617
        %621 = vrot.lane.b32.xlu0 %v567, 112
        %v622 = vpop.permute.xlu0 %621
        %vm624 = vcmask 130048
        %v625 = vsel %vm624, %v424, %v570
        %vm626 = vcmask 261120
        %v627 = vsel %vm626, %v625, %v574
        %vm628 = vcmask 392192
        %v629 = vsel %vm628, %v627, %v578
        %vm630 = vcmask 523264
        %v631 = vsel %vm630, %v629, %v582
        %vm632 = vcmask 654336
        %v633 = vsel %vm632, %v631, %v586
        %vm634 = vcmask 785408
        %v635 = vsel %vm634, %v633, %v590
        %vm636 = vcmask 916480
        %v637 = vsel %vm636, %v635, %v594
        %v638 = vsel %vm624, %v560, %v598
        %v639 = vsel %vm626, %v638, %v602
        %v640 = vsel %vm628, %v639, %v606
        %v641 = vsel %vm630, %v640, %v610
        %v642 = vsel %vm632, %v641, %v614
        %v643 = vsel %vm634, %v642, %v618
        %v644 = vsel %vm636, %v643, %v622
        %645 = vst [vmem:[#allocation3] sm:$0xff] %v637
        %646 = vst [vmem:[#allocation3 + $0x8] sm:$0xff] %v644
        %v647 = vld [vmem:[#allocation2] sm:$0xff]
        %v648 = vld [vmem:[#allocation2 + $0x8] sm:$0xff]
        %v649 = vld [vmem:[#allocation2 + $0x18] sm:$0xff]
        %v650 = vld [vmem:[#allocation2 + $0x20] sm:$0xff]
        %v651 = vld [vmem:[#allocation2 + $0x30] sm:$0xff]
        %v652 = vld [vmem:[#allocation2 + $0x38] sm:$0xff]
        %v653 = vld [vmem:[#allocation2 + $0x48] sm:$0xff]
        %v654 = vld [vmem:[#allocation2 + $0x50] sm:$0xff]
        %v655 = vld [vmem:[#allocation2 + $0x60] sm:$0xff]
        %v656 = vld [vmem:[#allocation2 + $0x68] sm:$0xff]
        %v657 = vld [vmem:[#allocation2 + $0x78] sm:$0xff]
        %v658 = vld [vmem:[#allocation2 + $0x80] sm:$0xff]
        %v659 = vld [vmem:[#allocation2 + $0x90] sm:$0xff]
        %v660 = vld [vmem:[#allocation2 + $0x98] sm:$0xff]
        %v661 = vld [vmem:[#allocation2 + $0xa8] sm:$0xff]
        %v662 = vld [vmem:[#allocation2 + $0xb0] sm:$0xff]
        %679 = vrot.lane.b32.xlu0 %v647, 127
        %v680 = vpop.permute.xlu0 %679
        %681 = vrot.lane.b32.xlu0 %v648, 127
        %v682 = vpop.permute.xlu0 %681
        %683 = vrot.lane.b32.xlu0 %v649, 127
        %v684 = vpop.permute.xlu0 %683
        %685 = vrot.lane.b32.xlu0 %v650, 127
        %v686 = vpop.permute.xlu0 %685
        %687 = vrot.lane.b32.xlu0 %v651, 127
        %v688 = vpop.permute.xlu0 %687
        %689 = vrot.lane.b32.xlu0 %v652, 127
        %v690 = vpop.permute.xlu0 %689
        %691 = vrot.lane.b32.xlu0 %v653, 127
        %v692 = vpop.permute.xlu0 %691
        %693 = vrot.lane.b32.xlu0 %v654, 127
        %v694 = vpop.permute.xlu0 %693
        %695 = vrot.lane.b32.xlu0 %v655, 127
        %v696 = vpop.permute.xlu0 %695
        %697 = vrot.lane.b32.xlu0 %v656, 127
        %v698 = vpop.permute.xlu0 %697
        %699 = vrot.lane.b32.xlu0 %v657, 127
        %v700 = vpop.permute.xlu0 %699
        %701 = vrot.lane.b32.xlu0 %v658, 127
        %v702 = vpop.permute.xlu0 %701
        %703 = vrot.lane.b32.xlu0 %v659, 127
        %v704 = vpop.permute.xlu0 %703
        %705 = vrot.lane.b32.xlu0 %v660, 127
        %v706 = vpop.permute.xlu0 %705
        %707 = vrot.lane.b32.xlu0 %v661, 127
        %v708 = vpop.permute.xlu0 %707
        %709 = vrot.lane.b32.xlu0 %v662, 127
        %v710 = vpop.permute.xlu0 %709
        %v727 = vcombine.low %v680, %v688
        %v728 = vcombine.high %v680, %v688
        %v730 = vunpack.c.l.s4 1983009808
        %v731 = vunpack.c.0.s8 %v730
        %v732 = vlaneseq
        %v733 = vshrl.u32 %v732, 7
        %v734 = vsub.s32 %v731, %v733
        %v735 = vrot.slane %v727, %v734
        %v737 = vunpack.c.l.s4 1983009808
        %v738 = vunpack.c.0.s8 %v737
        %v739 = vlaneseq
        %v740 = vshrl.u32 %v739, 7
        %v741 = vsub.s32 %v738, %v740
        %v742 = vrot.slane %v728, %v741
        %v743 = vcombine.low %v684, %v692
        %v744 = vcombine.high %v684, %v692
        %v746 = vunpack.c.l.s4 1983009808
        %v747 = vunpack.c.0.s8 %v746
        %v748 = vlaneseq
        %v749 = vshrl.u32 %v748, 7
        %v750 = vsub.s32 %v747, %v749
        %v751 = vrot.slane %v743, %v750
        %v753 = vunpack.c.l.s4 1983009808
        %v754 = vunpack.c.0.s8 %v753
        %v755 = vlaneseq
        %v756 = vshrl.u32 %v755, 7
        %v757 = vsub.s32 %v754, %v756
        %v758 = vrot.slane %v744, %v757
        %v759 = vcombine.low %v696, %v704
        %v760 = vcombine.high %v696, %v704
        %v762 = vunpack.c.l.s4 1983009808
        %v763 = vunpack.c.0.s8 %v762
        %v764 = vlaneseq
        %v765 = vshrl.u32 %v764, 7
        %v766 = vsub.s32 %v763, %v765
        %v767 = vrot.slane %v759, %v766
        %v769 = vunpack.c.l.s4 1983009808
        %v770 = vunpack.c.0.s8 %v769
        %v771 = vlaneseq
        %v772 = vshrl.u32 %v771, 7
        %v773 = vsub.s32 %v770, %v772
        %v774 = vrot.slane %v760, %v773
        %v775 = vcombine.low %v700, %v708
        %v776 = vcombine.high %v700, %v708
        %v778 = vunpack.c.l.s4 1983009808
        %v779 = vunpack.c.0.s8 %v778
        %v780 = vlaneseq
        %v781 = vshrl.u32 %v780, 7
        %v782 = vsub.s32 %v779, %v781
        %v783 = vrot.slane %v775, %v782
        %v785 = vunpack.c.l.s4 1983009808
        %v786 = vunpack.c.0.s8 %v785
        %v787 = vlaneseq
        %v788 = vshrl.u32 %v787, 7
        %v789 = vsub.s32 %v786, %v788
        %v790 = vrot.slane %v776, %v789
        %v791 = vcombine.low %v735, %v751
        %v792 = vcombine.high %v735, %v751
        %v794 = vunpack.c.l.s4 1934713408
        %v795 = vunpack.c.0.s8 %v794
        %v796 = vlaneseq
        %v797 = vshrl.u32 %v796, 7
        %v798 = vsub.s32 %v795, %v797
        %v799 = vrot.slane %v791, %v798
        %v801 = vunpack.c.l.s4 1934713408
        %v802 = vunpack.c.0.s8 %v801
        %v803 = vlaneseq
        %v804 = vshrl.u32 %v803, 7
        %v805 = vsub.s32 %v802, %v804
        %v806 = vrot.slane %v792, %v805
        %v807 = vcombine.low %v742, %v758
        %v808 = vcombine.high %v742, %v758
        %v810 = vunpack.c.l.s4 1934713408
        %v811 = vunpack.c.0.s8 %v810
        %v812 = vlaneseq
        %v813 = vshrl.u32 %v812, 7
        %v814 = vsub.s32 %v811, %v813
        %v815 = vrot.slane %v807, %v814
        %v817 = vunpack.c.l.s4 1934713408
        %v818 = vunpack.c.0.s8 %v817
        %v819 = vlaneseq
        %v820 = vshrl.u32 %v819, 7
        %v821 = vsub.s32 %v818, %v820
        %v822 = vrot.slane %v808, %v821
        %v823 = vcombine.low %v767, %v783
        %v824 = vcombine.high %v767, %v783
        %v826 = vunpack.c.l.s4 1934713408
        %v827 = vunpack.c.0.s8 %v826
        %v828 = vlaneseq
        %v829 = vshrl.u32 %v828, 7
        %v830 = vsub.s32 %v827, %v829
        %v831 = vrot.slane %v823, %v830
        %v833 = vunpack.c.l.s4 1934713408
        %v834 = vunpack.c.0.s8 %v833
        %v835 = vlaneseq
        %v836 = vshrl.u32 %v835, 7
        %v837 = vsub.s32 %v834, %v836
        %v838 = vrot.slane %v824, %v837
        %v839 = vcombine.low %v774, %v790
        %v840 = vcombine.high %v774, %v790
        %v842 = vunpack.c.l.s4 1934713408
        %v843 = vunpack.c.0.s8 %v842
        %v844 = vlaneseq
        %v845 = vshrl.u32 %v844, 7
        %v846 = vsub.s32 %v843, %v845
        %v847 = vrot.slane %v839, %v846
        %v849 = vunpack.c.l.s4 1934713408
        %v850 = vunpack.c.0.s8 %v849
        %v851 = vlaneseq
        %v852 = vshrl.u32 %v851, 7
        %v853 = vsub.s32 %v850, %v852
        %v854 = vrot.slane %v840, %v853
        %v855 = vcombine.low %v799, %v831
        %v856 = vcombine.high %v799, %v831
        %v857 = vcombine.low %v806, %v838
        %v858 = vcombine.high %v806, %v838
        %v859 = vcombine.low %v815, %v847
        %v860 = vcombine.high %v815, %v847
        %v861 = vcombine.low %v822, %v854
        %v862 = vcombine.high %v822, %v854
        %v863 = vcombine.low %v682, %v690
        %v864 = vcombine.high %v682, %v690
        %v866 = vunpack.c.l.s4 1983009808
        %v867 = vunpack.c.0.s8 %v866
        %v868 = vlaneseq
        %v869 = vshrl.u32 %v868, 7
        %v870 = vsub.s32 %v867, %v869
        %v871 = vrot.slane %v863, %v870
        %v873 = vunpack.c.l.s4 1983009808
        %v874 = vunpack.c.0.s8 %v873
        %v875 = vlaneseq
        %v876 = vshrl.u32 %v875, 7
        %v877 = vsub.s32 %v874, %v876
        %v878 = vrot.slane %v864, %v877
        %v879 = vcombine.low %v686, %v694
        %v880 = vcombine.high %v686, %v694
        %v882 = vunpack.c.l.s4 1983009808
        %v883 = vunpack.c.0.s8 %v882
        %v884 = vlaneseq
        %v885 = vshrl.u32 %v884, 7
        %v886 = vsub.s32 %v883, %v885
        %v887 = vrot.slane %v879, %v886
        %v889 = vunpack.c.l.s4 1983009808
        %v890 = vunpack.c.0.s8 %v889
        %v891 = vlaneseq
        %v892 = vshrl.u32 %v891, 7
        %v893 = vsub.s32 %v890, %v892
        %v894 = vrot.slane %v880, %v893
        %v895 = vcombine.low %v698, %v706
        %v896 = vcombine.high %v698, %v706
        %v898 = vunpack.c.l.s4 1983009808
        %v899 = vunpack.c.0.s8 %v898
        %v900 = vlaneseq
        %v901 = vshrl.u32 %v900, 7
        %v902 = vsub.s32 %v899, %v901
        %v903 = vrot.slane %v895, %v902
        %v905 = vunpack.c.l.s4 1983009808
        %v906 = vunpack.c.0.s8 %v905
        %v907 = vlaneseq
        %v908 = vshrl.u32 %v907, 7
        %v909 = vsub.s32 %v906, %v908
        %v910 = vrot.slane %v896, %v909
        %v911 = vcombine.low %v702, %v710
        %v912 = vcombine.high %v702, %v710
        %v914 = vunpack.c.l.s4 1983009808
        %v915 = vunpack.c.0.s8 %v914
        %v916 = vlaneseq
        %v917 = vshrl.u32 %v916, 7
        %v918 = vsub.s32 %v915, %v917
        %v919 = vrot.slane %v911, %v918
        %v921 = vunpack.c.l.s4 1983009808
        %v922 = vunpack.c.0.s8 %v921
        %v923 = vlaneseq
        %v924 = vshrl.u32 %v923, 7
        %v925 = vsub.s32 %v922, %v924
        %v926 = vrot.slane %v912, %v925
        %v927 = vcombine.low %v871, %v887
        %v928 = vcombine.high %v871, %v887
        %v930 = vunpack.c.l.s4 1934713408
        %v931 = vunpack.c.0.s8 %v930
        %v932 = vlaneseq
        %v933 = vshrl.u32 %v932, 7
        %v934 = vsub.s32 %v931, %v933
        %v935 = vrot.slane %v927, %v934
        %v937 = vunpack.c.l.s4 1934713408
        %v938 = vunpack.c.0.s8 %v937
        %v939 = vlaneseq
        %v940 = vshrl.u32 %v939, 7
        %v941 = vsub.s32 %v938, %v940
        %v942 = vrot.slane %v928, %v941
        %v943 = vcombine.low %v878, %v894
        %v944 = vcombine.high %v878, %v894
        %v946 = vunpack.c.l.s4 1934713408
        %v947 = vunpack.c.0.s8 %v946
        %v948 = vlaneseq
        %v949 = vshrl.u32 %v948, 7
        %v950 = vsub.s32 %v947, %v949
        %v951 = vrot.slane %v943, %v950
        %v953 = vunpack.c.l.s4 1934713408
        %v954 = vunpack.c.0.s8 %v953
        %v955 = vlaneseq
        %v956 = vshrl.u32 %v955, 7
        %v957 = vsub.s32 %v954, %v956
        %v958 = vrot.slane %v944, %v957
        %v959 = vcombine.low %v903, %v919
        %v960 = vcombine.high %v903, %v919
        %v962 = vunpack.c.l.s4 1934713408
        %v963 = vunpack.c.0.s8 %v962
        %v964 = vlaneseq
        %v965 = vshrl.u32 %v964, 7
        %v966 = vsub.s32 %v963, %v965
        %v967 = vrot.slane %v959, %v966
        %v969 = vunpack.c.l.s4 1934713408
        %v970 = vunpack.c.0.s8 %v969
        %v971 = vlaneseq
        %v972 = vshrl.u32 %v971, 7
        %v973 = vsub.s32 %v970, %v972
        %v974 = vrot.slane %v960, %v973
        %v975 = vcombine.low %v910, %v926
        %v976 = vcombine.high %v910, %v926
        %v978 = vunpack.c.l.s4 1934713408
        %v979 = vunpack.c.0.s8 %v978
        %v980 = vlaneseq
        %v981 = vshrl.u32 %v980, 7
        %v982 = vsub.s32 %v979, %v981
        %v983 = vrot.slane %v975, %v982
        %v985 = vunpack.c.l.s4 1934713408
        %v986 = vunpack.c.0.s8 %v985
        %v987 = vlaneseq
        %v988 = vshrl.u32 %v987, 7
        %v989 = vsub.s32 %v986, %v988
        %v990 = vrot.slane %v976, %v989
        %v991 = vcombine.low %v935, %v967
        %v992 = vcombine.high %v935, %v967
        %v993 = vcombine.low %v942, %v974
        %v994 = vcombine.high %v942, %v974
        %v995 = vcombine.low %v951, %v983
        %v996 = vcombine.high %v951, %v983
        %v997 = vcombine.low %v958, %v990
        %v998 = vcombine.high %v958, %v990
        %1000 = vrot.lane.b32.xlu0 %v856, 16
        %v1001 = vpop.permute.xlu0 %1000
        %1004 = vrot.lane.b32.xlu0 %v857, 32
        %v1005 = vpop.permute.xlu0 %1004
        %1008 = vrot.lane.b32.xlu0 %v858, 48
        %v1009 = vpop.permute.xlu0 %1008
        %1012 = vrot.lane.b32.xlu0 %v859, 64
        %v1013 = vpop.permute.xlu0 %1012
        %1016 = vrot.lane.b32.xlu0 %v860, 80
        %v1017 = vpop.permute.xlu0 %1016
        %1020 = vrot.lane.b32.xlu0 %v861, 96
        %v1021 = vpop.permute.xlu0 %1020
        %1024 = vrot.lane.b32.xlu0 %v862, 112
        %v1025 = vpop.permute.xlu0 %1024
        %1028 = vrot.lane.b32.xlu0 %v992, 16
        %v1029 = vpop.permute.xlu0 %1028
        %1032 = vrot.lane.b32.xlu0 %v993, 32
        %v1033 = vpop.permute.xlu0 %1032
        %1036 = vrot.lane.b32.xlu0 %v994, 48
        %v1037 = vpop.permute.xlu0 %1036
        %1040 = vrot.lane.b32.xlu0 %v995, 64
        %v1041 = vpop.permute.xlu0 %1040
        %1044 = vrot.lane.b32.xlu0 %v996, 80
        %v1045 = vpop.permute.xlu0 %1044
        %1048 = vrot.lane.b32.xlu0 %v997, 96
        %v1049 = vpop.permute.xlu0 %1048
        %1052 = vrot.lane.b32.xlu0 %v998, 112
        %v1053 = vpop.permute.xlu0 %1052
        %v1055 = vsel %vm624, %v855, %v1001
        %v1056 = vsel %vm626, %v1055, %v1005
        %v1057 = vsel %vm628, %v1056, %v1009
        %v1058 = vsel %vm630, %v1057, %v1013
        %v1059 = vsel %vm632, %v1058, %v1017
        %v1060 = vsel %vm634, %v1059, %v1021
        %v1061 = vsel %vm636, %v1060, %v1025
        %v1062 = vsel %vm624, %v991, %v1029
        %v1063 = vsel %vm626, %v1062, %v1033
        %v1064 = vsel %vm628, %v1063, %v1037
        %v1065 = vsel %vm630, %v1064, %v1041
        %v1066 = vsel %vm632, %v1065, %v1045
        %v1067 = vsel %vm634, %v1066, %v1049
        %v1068 = vsel %vm636, %v1067, %v1053
        %1069 = vst [vmem:[#allocation3 + $0x10] sm:$0xff] %v1061
        %1070 = vst [vmem:[#allocation3 + $0x18] sm:$0xff] %v1068
        %v1071 = vld [vmem:[#allocation2] sm:$0xff]
        %v1072 = vld [vmem:[#allocation2 + $0x8] sm:$0xff]
        %v1073 = vld [vmem:[#allocation2 + $0x18] sm:$0xff]
        %v1074 = vld [vmem:[#allocation2 + $0x20] sm:$0xff]
        %v1075 = vld [vmem:[#allocation2 + $0x30] sm:$0xff]
        %v1076 = vld [vmem:[#allocation2 + $0x38] sm:$0xff]
        %v1077 = vld [vmem:[#allocation2 + $0x48] sm:$0xff]
        %v1078 = vld [vmem:[#allocation2 + $0x50] sm:$0xff]
        %v1079 = vld [vmem:[#allocation2 + $0x60] sm:$0xff]
        %v1080 = vld [vmem:[#allocation2 + $0x68] sm:$0xff]
        %v1081 = vld [vmem:[#allocation2 + $0x78] sm:$0xff]
        %v1082 = vld [vmem:[#allocation2 + $0x80] sm:$0xff]
        %v1083 = vld [vmem:[#allocation2 + $0x90] sm:$0xff]
        %v1084 = vld [vmem:[#allocation2 + $0x98] sm:$0xff]
        %v1085 = vld [vmem:[#allocation2 + $0xa8] sm:$0xff]
        %v1086 = vld [vmem:[#allocation2 + $0xb0] sm:$0xff]
        %1103 = vrot.lane.b32.xlu0 %v1071, 126
        %v1104 = vpop.permute.xlu0 %1103
        %1105 = vrot.lane.b32.xlu0 %v1072, 126
        %v1106 = vpop.permute.xlu0 %1105
        %1107 = vrot.lane.b32.xlu0 %v1073, 126
        %v1108 = vpop.permute.xlu0 %1107
        %1109 = vrot.lane.b32.xlu0 %v1074, 126
        %v1110 = vpop.permute.xlu0 %1109
        %1111 = vrot.lane.b32.xlu0 %v1075, 126
        %v1112 = vpop.permute.xlu0 %1111
        %1113 = vrot.lane.b32.xlu0 %v1076, 126
        %v1114 = vpop.permute.xlu0 %1113
        %1115 = vrot.lane.b32.xlu0 %v1077, 126
        %v1116 = vpop.permute.xlu0 %1115
        %1117 = vrot.lane.b32.xlu0 %v1078, 126
        %v1118 = vpop.permute.xlu0 %1117
        %1119 = vrot.lane.b32.xlu0 %v1079, 126
        %v1120 = vpop.permute.xlu0 %1119
        %1121 = vrot.lane.b32.xlu0 %v1080, 126
        %v1122 = vpop.permute.xlu0 %1121
        %1123 = vrot.lane.b32.xlu0 %v1081, 126
        %v1124 = vpop.permute.xlu0 %1123
        %1125 = vrot.lane.b32.xlu0 %v1082, 126
        %v1126 = vpop.permute.xlu0 %1125
        %1127 = vrot.lane.b32.xlu0 %v1083, 126
        %v1128 = vpop.permute.xlu0 %1127
        %1129 = vrot.lane.b32.xlu0 %v1084, 126
        %v1130 = vpop.permute.xlu0 %1129
        %1131 = vrot.lane.b32.xlu0 %v1085, 126
        %v1132 = vpop.permute.xlu0 %1131
        %1133 = vrot.lane.b32.xlu0 %v1086, 126
        %v1134 = vpop.permute.xlu0 %1133
        %v1151 = vcombine.low %v1104, %v1112
        %v1152 = vcombine.high %v1104, %v1112
        %v1154 = vunpack.c.l.s4 1983009808
        %v1155 = vunpack.c.0.s8 %v1154
        %v1156 = vlaneseq
        %v1157 = vshrl.u32 %v1156, 7
        %v1158 = vsub.s32 %v1155, %v1157
        %v1159 = vrot.slane %v1151, %v1158
        %v1161 = vunpack.c.l.s4 1983009808
        %v1162 = vunpack.c.0.s8 %v1161
        %v1163 = vlaneseq
        %v1164 = vshrl.u32 %v1163, 7
        %v1165 = vsub.s32 %v1162, %v1164
        %v1166 = vrot.slane %v1152, %v1165
        %v1167 = vcombine.low %v1108, %v1116
        %v1168 = vcombine.high %v1108, %v1116
        %v1170 = vunpack.c.l.s4 1983009808
        %v1171 = vunpack.c.0.s8 %v1170
        %v1172 = vlaneseq
        %v1173 = vshrl.u32 %v1172, 7
        %v1174 = vsub.s32 %v1171, %v1173
        %v1175 = vrot.slane %v1167, %v1174
        %v1177 = vunpack.c.l.s4 1983009808
        %v1178 = vunpack.c.0.s8 %v1177
        %v1179 = vlaneseq
        %v1180 = vshrl.u32 %v1179, 7
        %v1181 = vsub.s32 %v1178, %v1180
        %v1182 = vrot.slane %v1168, %v1181
        %v1183 = vcombine.low %v1120, %v1128
        %v1184 = vcombine.high %v1120, %v1128
        %v1186 = vunpack.c.l.s4 1983009808
        %v1187 = vunpack.c.0.s8 %v1186
        %v1188 = vlaneseq
        %v1189 = vshrl.u32 %v1188, 7
        %v1190 = vsub.s32 %v1187, %v1189
        %v1191 = vrot.slane %v1183, %v1190
        %v1193 = vunpack.c.l.s4 1983009808
        %v1194 = vunpack.c.0.s8 %v1193
        %v1195 = vlaneseq
        %v1196 = vshrl.u32 %v1195, 7
        %v1197 = vsub.s32 %v1194, %v1196
        %v1198 = vrot.slane %v1184, %v1197
        %v1199 = vcombine.low %v1124, %v1132
        %v1200 = vcombine.high %v1124, %v1132
        %v1202 = vunpack.c.l.s4 1983009808
        %v1203 = vunpack.c.0.s8 %v1202
        %v1204 = vlaneseq
        %v1205 = vshrl.u32 %v1204, 7
        %v1206 = vsub.s32 %v1203, %v1205
        %v1207 = vrot.slane %v1199, %v1206
        %v1209 = vunpack.c.l.s4 1983009808
        %v1210 = vunpack.c.0.s8 %v1209
        %v1211 = vlaneseq
        %v1212 = vshrl.u32 %v1211, 7
        %v1213 = vsub.s32 %v1210, %v1212
        %v1214 = vrot.slane %v1200, %v1213
        %v1215 = vcombine.low %v1159, %v1175
        %v1216 = vcombine.high %v1159, %v1175
        %v1218 = vunpack.c.l.s4 1934713408
        %v1219 = vunpack.c.0.s8 %v1218
        %v1220 = vlaneseq
        %v1221 = vshrl.u32 %v1220, 7
        %v1222 = vsub.s32 %v1219, %v1221
        %v1223 = vrot.slane %v1215, %v1222
        %v1225 = vunpack.c.l.s4 1934713408
        %v1226 = vunpack.c.0.s8 %v1225
        %v1227 = vlaneseq
        %v1228 = vshrl.u32 %v1227, 7
        %v1229 = vsub.s32 %v1226, %v1228
        %v1230 = vrot.slane %v1216, %v1229
        %v1231 = vcombine.low %v1166, %v1182
        %v1232 = vcombine.high %v1166, %v1182
        %v1234 = vunpack.c.l.s4 1934713408
        %v1235 = vunpack.c.0.s8 %v1234
        %v1236 = vlaneseq
        %v1237 = vshrl.u32 %v1236, 7
        %v1238 = vsub.s32 %v1235, %v1237
        %v1239 = vrot.slane %v1231, %v1238
        %v1241 = vunpack.c.l.s4 1934713408
        %v1242 = vunpack.c.0.s8 %v1241
        %v1243 = vlaneseq
        %v1244 = vshrl.u32 %v1243, 7
        %v1245 = vsub.s32 %v1242, %v1244
        %v1246 = vrot.slane %v1232, %v1245
        %v1247 = vcombine.low %v1191, %v1207
        %v1248 = vcombine.high %v1191, %v1207
        %v1250 = vunpack.c.l.s4 1934713408
        %v1251 = vunpack.c.0.s8 %v1250
        %v1252 = vlaneseq
        %v1253 = vshrl.u32 %v1252, 7
        %v1254 = vsub.s32 %v1251, %v1253
        %v1255 = vrot.slane %v1247, %v1254
        %v1257 = vunpack.c.l.s4 1934713408
        %v1258 = vunpack.c.0.s8 %v1257
        %v1259 = vlaneseq
        %v1260 = vshrl.u32 %v1259, 7
        %v1261 = vsub.s32 %v1258, %v1260
        %v1262 = vrot.slane %v1248, %v1261
        %v1263 = vcombine.low %v1198, %v1214
        %v1264 = vcombine.high %v1198, %v1214
        %v1266 = vunpack.c.l.s4 1934713408
        %v1267 = vunpack.c.0.s8 %v1266
        %v1268 = vlaneseq
        %v1269 = vshrl.u32 %v1268, 7
        %v1270 = vsub.s32 %v1267, %v1269
        %v1271 = vrot.slane %v1263, %v1270
        %v1273 = vunpack.c.l.s4 1934713408
        %v1274 = vunpack.c.0.s8 %v1273
        %v1275 = vlaneseq
        %v1276 = vshrl.u32 %v1275, 7
        %v1277 = vsub.s32 %v1274, %v1276
        %v1278 = vrot.slane %v1264, %v1277
        %v1279 = vcombine.low %v1223, %v1255
        %v1280 = vcombine.high %v1223, %v1255
        %v1281 = vcombine.low %v1230, %v1262
        %v1282 = vcombine.high %v1230, %v1262
        %v1283 = vcombine.low %v1239, %v1271
        %v1284 = vcombine.high %v1239, %v1271
        %v1285 = vcombine.low %v1246, %v1278
        %v1286 = vcombine.high %v1246, %v1278
        %v1287 = vcombine.low %v1106, %v1114
        %v1288 = vcombine.high %v1106, %v1114
        %v1290 = vunpack.c.l.s4 1983009808
        %v1291 = vunpack.c.0.s8 %v1290
        %v1292 = vlaneseq
        %v1293 = vshrl.u32 %v1292, 7
        %v1294 = vsub.s32 %v1291, %v1293
        %v1295 = vrot.slane %v1287, %v1294
        %v1297 = vunpack.c.l.s4 1983009808
        %v1298 = vunpack.c.0.s8 %v1297
        %v1299 = vlaneseq
        %v1300 = vshrl.u32 %v1299, 7
        %v1301 = vsub.s32 %v1298, %v1300
        %v1302 = vrot.slane %v1288, %v1301
        %v1303 = vcombine.low %v1110, %v1118
        %v1304 = vcombine.high %v1110, %v1118
        %v1306 = vunpack.c.l.s4 1983009808
        %v1307 = vunpack.c.0.s8 %v1306
        %v1308 = vlaneseq
        %v1309 = vshrl.u32 %v1308, 7
        %v1310 = vsub.s32 %v1307, %v1309
        %v1311 = vrot.slane %v1303, %v1310
        %v1313 = vunpack.c.l.s4 1983009808
        %v1314 = vunpack.c.0.s8 %v1313
        %v1315 = vlaneseq
        %v1316 = vshrl.u32 %v1315, 7
        %v1317 = vsub.s32 %v1314, %v1316
        %v1318 = vrot.slane %v1304, %v1317
        %v1319 = vcombine.low %v1122, %v1130
        %v1320 = vcombine.high %v1122, %v1130
        %v1322 = vunpack.c.l.s4 1983009808
        %v1323 = vunpack.c.0.s8 %v1322
        %v1324 = vlaneseq
        %v1325 = vshrl.u32 %v1324, 7
        %v1326 = vsub.s32 %v1323, %v1325
        %v1327 = vrot.slane %v1319, %v1326
        %v1329 = vunpack.c.l.s4 1983009808
        %v1330 = vunpack.c.0.s8 %v1329
        %v1331 = vlaneseq
        %v1332 = vshrl.u32 %v1331, 7
        %v1333 = vsub.s32 %v1330, %v1332
        %v1334 = vrot.slane %v1320, %v1333
        %v1335 = vcombine.low %v1126, %v1134
        %v1336 = vcombine.high %v1126, %v1134
        %v1338 = vunpack.c.l.s4 1983009808
        %v1339 = vunpack.c.0.s8 %v1338
        %v1340 = vlaneseq
        %v1341 = vshrl.u32 %v1340, 7
        %v1342 = vsub.s32 %v1339, %v1341
        %v1343 = vrot.slane %v1335, %v1342
        %v1345 = vunpack.c.l.s4 1983009808
        %v1346 = vunpack.c.0.s8 %v1345
        %v1347 = vlaneseq
        %v1348 = vshrl.u32 %v1347, 7
        %v1349 = vsub.s32 %v1346, %v1348
        %v1350 = vrot.slane %v1336, %v1349
        %v1351 = vcombine.low %v1295, %v1311
        %v1352 = vcombine.high %v1295, %v1311
        %v1354 = vunpack.c.l.s4 1934713408
        %v1355 = vunpack.c.0.s8 %v1354
        %v1356 = vlaneseq
        %v1357 = vshrl.u32 %v1356, 7
        %v1358 = vsub.s32 %v1355, %v1357
        %v1359 = vrot.slane %v1351, %v1358
        %v1361 = vunpack.c.l.s4 1934713408
        %v1362 = vunpack.c.0.s8 %v1361
        %v1363 = vlaneseq
        %v1364 = vshrl.u32 %v1363, 7
        %v1365 = vsub.s32 %v1362, %v1364
        %v1366 = vrot.slane %v1352, %v1365
        %v1367 = vcombine.low %v1302, %v1318
        %v1368 = vcombine.high %v1302, %v1318
        %v1370 = vunpack.c.l.s4 1934713408
        %v1371 = vunpack.c.0.s8 %v1370
        %v1372 = vlaneseq
        %v1373 = vshrl.u32 %v1372, 7
        %v1374 = vsub.s32 %v1371, %v1373
        %v1375 = vrot.slane %v1367, %v1374
        %v1377 = vunpack.c.l.s4 1934713408
        %v1378 = vunpack.c.0.s8 %v1377
        %v1379 = vlaneseq
        %v1380 = vshrl.u32 %v1379, 7
        %v1381 = vsub.s32 %v1378, %v1380
        %v1382 = vrot.slane %v1368, %v1381
        %v1383 = vcombine.low %v1327, %v1343
        %v1384 = vcombine.high %v1327, %v1343
        %v1386 = vunpack.c.l.s4 1934713408
        %v1387 = vunpack.c.0.s8 %v1386
        %v1388 = vlaneseq
        %v1389 = vshrl.u32 %v1388, 7
        %v1390 = vsub.s32 %v1387, %v1389
        %v1391 = vrot.slane %v1383, %v1390
        %v1393 = vunpack.c.l.s4 1934713408
        %v1394 = vunpack.c.0.s8 %v1393
        %v1395 = vlaneseq
        %v1396 = vshrl.u32 %v1395, 7
        %v1397 = vsub.s32 %v1394, %v1396
        %v1398 = vrot.slane %v1384, %v1397
        %v1399 = vcombine.low %v1334, %v1350
        %v1400 = vcombine.high %v1334, %v1350
        %v1402 = vunpack.c.l.s4 1934713408
        %v1403 = vunpack.c.0.s8 %v1402
        %v1404 = vlaneseq
        %v1405 = vshrl.u32 %v1404, 7
        %v1406 = vsub.s32 %v1403, %v1405
        %v1407 = vrot.slane %v1399, %v1406
        %v1409 = vunpack.c.l.s4 1934713408
        %v1410 = vunpack.c.0.s8 %v1409
        %v1411 = vlaneseq
        %v1412 = vshrl.u32 %v1411, 7
        %v1413 = vsub.s32 %v1410, %v1412
        %v1414 = vrot.slane %v1400, %v1413
        %v1415 = vcombine.low %v1359, %v1391
        %v1416 = vcombine.high %v1359, %v1391
        %v1417 = vcombine.low %v1366, %v1398
        %v1418 = vcombine.high %v1366, %v1398
        %v1419 = vcombine.low %v1375, %v1407
        %v1420 = vcombine.high %v1375, %v1407
        %v1421 = vcombine.low %v1382, %v1414
        %v1422 = vcombine.high %v1382, %v1414
        %1424 = vrot.lane.b32.xlu0 %v1280, 16
        %v1425 = vpop.permute.xlu0 %1424
        %1428 = vrot.lane.b32.xlu0 %v1281, 32
        %v1429 = vpop.permute.xlu0 %1428
        %1432 = vrot.lane.b32.xlu0 %v1282, 48
        %v1433 = vpop.permute.xlu0 %1432
        %1436 = vrot.lane.b32.xlu0 %v1283, 64
        %v1437 = vpop.permute.xlu0 %1436
        %1440 = vrot.lane.b32.xlu0 %v1284, 80
        %v1441 = vpop.permute.xlu0 %1440
        %1444 = vrot.lane.b32.xlu0 %v1285, 96
        %v1445 = vpop.permute.xlu0 %1444
        %1448 = vrot.lane.b32.xlu0 %v1286, 112
        %v1449 = vpop.permute.xlu0 %1448
        %1452 = vrot.lane.b32.xlu0 %v1416, 16
        %v1453 = vpop.permute.xlu0 %1452
        %1456 = vrot.lane.b32.xlu0 %v1417, 32
        %v1457 = vpop.permute.xlu0 %1456
        %1460 = vrot.lane.b32.xlu0 %v1418, 48
        %v1461 = vpop.permute.xlu0 %1460
        %1464 = vrot.lane.b32.xlu0 %v1419, 64
        %v1465 = vpop.permute.xlu0 %1464
        %1468 = vrot.lane.b32.xlu0 %v1420, 80
        %v1469 = vpop.permute.xlu0 %1468
        %1472 = vrot.lane.b32.xlu0 %v1421, 96
        %v1473 = vpop.permute.xlu0 %1472
        %1476 = vrot.lane.b32.xlu0 %v1422, 112
        %v1477 = vpop.permute.xlu0 %1476
        %v1479 = vsel %vm624, %v1279, %v1425
        %v1480 = vsel %vm626, %v1479, %v1429
        %v1481 = vsel %vm628, %v1480, %v1433
        %v1482 = vsel %vm630, %v1481, %v1437
        %v1483 = vsel %vm632, %v1482, %v1441
        %v1484 = vsel %vm634, %v1483, %v1445
        %v1485 = vsel %vm636, %v1484, %v1449
        %v1486 = vsel %vm624, %v1415, %v1453
        %v1487 = vsel %vm626, %v1486, %v1457
        %v1488 = vsel %vm628, %v1487, %v1461
        %v1489 = vsel %vm630, %v1488, %v1465
        %v1490 = vsel %vm632, %v1489, %v1469
        %v1491 = vsel %vm634, %v1490, %v1473
        %v1492 = vsel %vm636, %v1491, %v1477
        %1493 = vst [vmem:[#allocation3 + $0x20] sm:$0xff] %v1485
        %1494 = vst [vmem:[#allocation3 + $0x28] sm:$0xff] %v1492
        %v1495 = vld [vmem:[#allocation2 + $0x1] sm:$0xff]
        %v1496 = vld [vmem:[#allocation2 + $0x9] sm:$0xff]
        %v1497 = vld [vmem:[#allocation2 + $0x19] sm:$0xff]
        %v1498 = vld [vmem:[#allocation2 + $0x21] sm:$0xff]
        %v1499 = vld [vmem:[#allocation2 + $0x31] sm:$0xff]
        %v1500 = vld [vmem:[#allocation2 + $0x39] sm:$0xff]
        %v1501 = vld [vmem:[#allocation2 + $0x49] sm:$0xff]
        %v1502 = vld [vmem:[#allocation2 + $0x51] sm:$0xff]
        %v1503 = vld [vmem:[#allocation2 + $0x61] sm:$0xff]
        %v1504 = vld [vmem:[#allocation2 + $0x69] sm:$0xff]
        %v1505 = vld [vmem:[#allocation2 + $0x79] sm:$0xff]
        %v1506 = vld [vmem:[#allocation2 + $0x81] sm:$0xff]
        %v1507 = vld [vmem:[#allocation2 + $0x91] sm:$0xff]
        %v1508 = vld [vmem:[#allocation2 + $0x99] sm:$0xff]
        %v1509 = vld [vmem:[#allocation2 + $0xa9] sm:$0xff]
        %v1510 = vld [vmem:[#allocation2 + $0xb1] sm:$0xff]
        %v1511 = vcombine.low %v1495, %v1499
        %v1512 = vcombine.high %v1495, %v1499
        %v1514 = vunpack.c.l.s4 1983009808
        %v1515 = vunpack.c.0.s8 %v1514
        %v1516 = vlaneseq
        %v1517 = vshrl.u32 %v1516, 7
        %v1518 = vsub.s32 %v1515, %v1517
        %v1519 = vrot.slane %v1511, %v1518
        %v1521 = vunpack.c.l.s4 1983009808
        %v1522 = vunpack.c.0.s8 %v1521
        %v1523 = vlaneseq
        %v1524 = vshrl.u32 %v1523, 7
        %v1525 = vsub.s32 %v1522, %v1524
        %v1526 = vrot.slane %v1512, %v1525
        %v1527 = vcombine.low %v1497, %v1501
        %v1528 = vcombine.high %v1497, %v1501
        %v1530 = vunpack.c.l.s4 1983009808
        %v1531 = vunpack.c.0.s8 %v1530
        %v1532 = vlaneseq
        %v1533 = vshrl.u32 %v1532, 7
        %v1534 = vsub.s32 %v1531, %v1533
        %v1535 = vrot.slane %v1527, %v1534
        %v1537 = vunpack.c.l.s4 1983009808
        %v1538 = vunpack.c.0.s8 %v1537
        %v1539 = vlaneseq
        %v1540 = vshrl.u32 %v1539, 7
        %v1541 = vsub.s32 %v1538, %v1540
        %v1542 = vrot.slane %v1528, %v1541
        %v1543 = vcombine.low %v1503, %v1507
        %v1544 = vcombine.high %v1503, %v1507
        %v1546 = vunpack.c.l.s4 1983009808
        %v1547 = vunpack.c.0.s8 %v1546
        %v1548 = vlaneseq
        %v1549 = vshrl.u32 %v1548, 7
        %v1550 = vsub.s32 %v1547, %v1549
        %v1551 = vrot.slane %v1543, %v1550
        %v1553 = vunpack.c.l.s4 1983009808
        %v1554 = vunpack.c.0.s8 %v1553
        %v1555 = vlaneseq
        %v1556 = vshrl.u32 %v1555, 7
        %v1557 = vsub.s32 %v1554, %v1556
        %v1558 = vrot.slane %v1544, %v1557
        %v1559 = vcombine.low %v1505, %v1509
        %v1560 = vcombine.high %v1505, %v1509
        %v1562 = vunpack.c.l.s4 1983009808
        %v1563 = vunpack.c.0.s8 %v1562
        %v1564 = vlaneseq
        %v1565 = vshrl.u32 %v1564, 7
        %v1566 = vsub.s32 %v1563, %v1565
        %v1567 = vrot.slane %v1559, %v1566
        %v1569 = vunpack.c.l.s4 1983009808
        %v1570 = vunpack.c.0.s8 %v1569
        %v1571 = vlaneseq
        %v1572 = vshrl.u32 %v1571, 7
        %v1573 = vsub.s32 %v1570, %v1572
        %v1574 = vrot.slane %v1560, %v1573
        %v1575 = vcombine.low %v1519, %v1535
        %v1576 = vcombine.high %v1519, %v1535
        %v1578 = vunpack.c.l.s4 1934713408
        %v1579 = vunpack.c.0.s8 %v1578
        %v1580 = vlaneseq
        %v1581 = vshrl.u32 %v1580, 7
        %v1582 = vsub.s32 %v1579, %v1581
        %v1583 = vrot.slane %v1575, %v1582
        %v1585 = vunpack.c.l.s4 1934713408
        %v1586 = vunpack.c.0.s8 %v1585
        %v1587 = vlaneseq
        %v1588 = vshrl.u32 %v1587, 7
        %v1589 = vsub.s32 %v1586, %v1588
        %v1590 = vrot.slane %v1576, %v1589
        %v1591 = vcombine.low %v1526, %v1542
        %v1592 = vcombine.high %v1526, %v1542
        %v1594 = vunpack.c.l.s4 1934713408
        %v1595 = vunpack.c.0.s8 %v1594
        %v1596 = vlaneseq
        %v1597 = vshrl.u32 %v1596, 7
        %v1598 = vsub.s32 %v1595, %v1597
        %v1599 = vrot.slane %v1591, %v1598
        %v1601 = vunpack.c.l.s4 1934713408
        %v1602 = vunpack.c.0.s8 %v1601
        %v1603 = vlaneseq
        %v1604 = vshrl.u32 %v1603, 7
        %v1605 = vsub.s32 %v1602, %v1604
        %v1606 = vrot.slane %v1592, %v1605
        %v1607 = vcombine.low %v1551, %v1567
        %v1608 = vcombine.high %v1551, %v1567
        %v1610 = vunpack.c.l.s4 1934713408
        %v1611 = vunpack.c.0.s8 %v1610
        %v1612 = vlaneseq
        %v1613 = vshrl.u32 %v1612, 7
        %v1614 = vsub.s32 %v1611, %v1613
        %v1615 = vrot.slane %v1607, %v1614
        %v1617 = vunpack.c.l.s4 1934713408
        %v1618 = vunpack.c.0.s8 %v1617
        %v1619 = vlaneseq
        %v1620 = vshrl.u32 %v1619, 7
        %v1621 = vsub.s32 %v1618, %v1620
        %v1622 = vrot.slane %v1608, %v1621
        %v1623 = vcombine.low %v1558, %v1574
        %v1624 = vcombine.high %v1558, %v1574
        %v1626 = vunpack.c.l.s4 1934713408
        %v1627 = vunpack.c.0.s8 %v1626
        %v1628 = vlaneseq
        %v1629 = vshrl.u32 %v1628, 7
        %v1630 = vsub.s32 %v1627, %v1629
        %v1631 = vrot.slane %v1623, %v1630
        %v1633 = vunpack.c.l.s4 1934713408
        %v1634 = vunpack.c.0.s8 %v1633
        %v1635 = vlaneseq
        %v1636 = vshrl.u32 %v1635, 7
        %v1637 = vsub.s32 %v1634, %v1636
        %v1638 = vrot.slane %v1624, %v1637
        %v1639 = vcombine.low %v1583, %v1615
        %v1640 = vcombine.high %v1583, %v1615
        %v1641 = vcombine.low %v1590, %v1622
        %v1642 = vcombine.high %v1590, %v1622
        %v1643 = vcombine.low %v1599, %v1631
        %v1644 = vcombine.high %v1599, %v1631
        %v1645 = vcombine.low %v1606, %v1638
        %v1646 = vcombine.high %v1606, %v1638
        %v1647 = vcombine.low %v1496, %v1500
        %v1648 = vcombine.high %v1496, %v1500
        %v1650 = vunpack.c.l.s4 1983009808
        %v1651 = vunpack.c.0.s8 %v1650
        %v1652 = vlaneseq
        %v1653 = vshrl.u32 %v1652, 7
        %v1654 = vsub.s32 %v1651, %v1653
        %v1655 = vrot.slane %v1647, %v1654
        %v1657 = vunpack.c.l.s4 1983009808
        %v1658 = vunpack.c.0.s8 %v1657
        %v1659 = vlaneseq
        %v1660 = vshrl.u32 %v1659, 7
        %v1661 = vsub.s32 %v1658, %v1660
        %v1662 = vrot.slane %v1648, %v1661
        %v1663 = vcombine.low %v1498, %v1502
        %v1664 = vcombine.high %v1498, %v1502
        %v1666 = vunpack.c.l.s4 1983009808
        %v1667 = vunpack.c.0.s8 %v1666
        %v1668 = vlaneseq
        %v1669 = vshrl.u32 %v1668, 7
        %v1670 = vsub.s32 %v1667, %v1669
        %v1671 = vrot.slane %v1663, %v1670
        %v1673 = vunpack.c.l.s4 1983009808
        %v1674 = vunpack.c.0.s8 %v1673
        %v1675 = vlaneseq
        %v1676 = vshrl.u32 %v1675, 7
        %v1677 = vsub.s32 %v1674, %v1676
        %v1678 = vrot.slane %v1664, %v1677
        %v1679 = vcombine.low %v1504, %v1508
        %v1680 = vcombine.high %v1504, %v1508
        %v1682 = vunpack.c.l.s4 1983009808
        %v1683 = vunpack.c.0.s8 %v1682
        %v1684 = vlaneseq
        %v1685 = vshrl.u32 %v1684, 7
        %v1686 = vsub.s32 %v1683, %v1685
        %v1687 = vrot.slane %v1679, %v1686
        %v1689 = vunpack.c.l.s4 1983009808
        %v1690 = vunpack.c.0.s8 %v1689
        %v1691 = vlaneseq
        %v1692 = vshrl.u32 %v1691, 7
        %v1693 = vsub.s32 %v1690, %v1692
        %v1694 = vrot.slane %v1680, %v1693
        %v1695 = vcombine.low %v1506, %v1510
        %v1696 = vcombine.high %v1506, %v1510
        %v1698 = vunpack.c.l.s4 1983009808
        %v1699 = vunpack.c.0.s8 %v1698
        %v1700 = vlaneseq
        %v1701 = vshrl.u32 %v1700, 7
        %v1702 = vsub.s32 %v1699, %v1701
        %v1703 = vrot.slane %v1695, %v1702
        %v1705 = vunpack.c.l.s4 1983009808
        %v1706 = vunpack.c.0.s8 %v1705
        %v1707 = vlaneseq
        %v1708 = vshrl.u32 %v1707, 7
        %v1709 = vsub.s32 %v1706, %v1708
        %v1710 = vrot.slane %v1696, %v1709
        %v1711 = vcombine.low %v1655, %v1671
        %v1712 = vcombine.high %v1655, %v1671
        %v1714 = vunpack.c.l.s4 1934713408
        %v1715 = vunpack.c.0.s8 %v1714
        %v1716 = vlaneseq
        %v1717 = vshrl.u32 %v1716, 7
        %v1718 = vsub.s32 %v1715, %v1717
        %v1719 = vrot.slane %v1711, %v1718
        %v1721 = vunpack.c.l.s4 1934713408
        %v1722 = vunpack.c.0.s8 %v1721
        %v1723 = vlaneseq
        %v1724 = vshrl.u32 %v1723, 7
        %v1725 = vsub.s32 %v1722, %v1724
        %v1726 = vrot.slane %v1712, %v1725
        %v1727 = vcombine.low %v1662, %v1678
        %v1728 = vcombine.high %v1662, %v1678
        %v1730 = vunpack.c.l.s4 1934713408
        %v1731 = vunpack.c.0.s8 %v1730
        %v1732 = vlaneseq
        %v1733 = vshrl.u32 %v1732, 7
        %v1734 = vsub.s32 %v1731, %v1733
        %v1735 = vrot.slane %v1727, %v1734
        %v1737 = vunpack.c.l.s4 1934713408
        %v1738 = vunpack.c.0.s8 %v1737
        %v1739 = vlaneseq
        %v1740 = vshrl.u32 %v1739, 7
        %v1741 = vsub.s32 %v1738, %v1740
        %v1742 = vrot.slane %v1728, %v1741
        %v1743 = vcombine.low %v1687, %v1703
        %v1744 = vcombine.high %v1687, %v1703
        %v1746 = vunpack.c.l.s4 1934713408
        %v1747 = vunpack.c.0.s8 %v1746
        %v1748 = vlaneseq
        %v1749 = vshrl.u32 %v1748, 7
        %v1750 = vsub.s32 %v1747, %v1749
        %v1751 = vrot.slane %v1743, %v1750
        %v1753 = vunpack.c.l.s4 1934713408
        %v1754 = vunpack.c.0.s8 %v1753
        %v1755 = vlaneseq
        %v1756 = vshrl.u32 %v1755, 7
        %v1757 = vsub.s32 %v1754, %v1756
        %v1758 = vrot.slane %v1744, %v1757
        %v1759 = vcombine.low %v1694, %v1710
        %v1760 = vcombine.high %v1694, %v1710
        %v1762 = vunpack.c.l.s4 1934713408
        %v1763 = vunpack.c.0.s8 %v1762
        %v1764 = vlaneseq
        %v1765 = vshrl.u32 %v1764, 7
        %v1766 = vsub.s32 %v1763, %v1765
        %v1767 = vrot.slane %v1759, %v1766
        %v1769 = vunpack.c.l.s4 1934713408
        %v1770 = vunpack.c.0.s8 %v1769
        %v1771 = vlaneseq
        %v1772 = vshrl.u32 %v1771, 7
        %v1773 = vsub.s32 %v1770, %v1772
        %v1774 = vrot.slane %v1760, %v1773
        %v1775 = vcombine.low %v1719, %v1751
        %v1776 = vcombine.high %v1719, %v1751
        %v1777 = vcombine.low %v1726, %v1758
        %v1778 = vcombine.high %v1726, %v1758
        %v1779 = vcombine.low %v1735, %v1767
        %v1780 = vcombine.high %v1735, %v1767
        %v1781 = vcombine.low %v1742, %v1774
        %v1782 = vcombine.high %v1742, %v1774
        %1784 = vrot.lane.b32.xlu0 %v1640, 16
        %v1785 = vpop.permute.xlu0 %1784
        %1788 = vrot.lane.b32.xlu0 %v1641, 32
        %v1789 = vpop.permute.xlu0 %1788
        %1792 = vrot.lane.b32.xlu0 %v1642, 48
        %v1793 = vpop.permute.xlu0 %1792
        %1796 = vrot.lane.b32.xlu0 %v1643, 64
        %v1797 = vpop.permute.xlu0 %1796
        %1800 = vrot.lane.b32.xlu0 %v1644, 80
        %v1801 = vpop.permute.xlu0 %1800
        %1804 = vrot.lane.b32.xlu0 %v1645, 96
        %v1805 = vpop.permute.xlu0 %1804
        %1808 = vrot.lane.b32.xlu0 %v1646, 112
        %v1809 = vpop.permute.xlu0 %1808
        %1812 = vrot.lane.b32.xlu0 %v1776, 16
        %v1813 = vpop.permute.xlu0 %1812
        %1816 = vrot.lane.b32.xlu0 %v1777, 32
        %v1817 = vpop.permute.xlu0 %1816
        %1820 = vrot.lane.b32.xlu0 %v1778, 48
        %v1821 = vpop.permute.xlu0 %1820
        %1824 = vrot.lane.b32.xlu0 %v1779, 64
        %v1825 = vpop.permute.xlu0 %1824
        %1828 = vrot.lane.b32.xlu0 %v1780, 80
        %v1829 = vpop.permute.xlu0 %1828
        %1832 = vrot.lane.b32.xlu0 %v1781, 96
        %v1833 = vpop.permute.xlu0 %1832
        %1836 = vrot.lane.b32.xlu0 %v1782, 112
        %v1837 = vpop.permute.xlu0 %1836
        %v1839 = vsel %vm624, %v1639, %v1785
        %v1840 = vsel %vm626, %v1839, %v1789
        %v1841 = vsel %vm628, %v1840, %v1793
        %v1842 = vsel %vm630, %v1841, %v1797
        %v1843 = vsel %vm632, %v1842, %v1801
        %v1844 = vsel %vm634, %v1843, %v1805
        %v1845 = vsel %vm636, %v1844, %v1809
        %v1846 = vsel %vm624, %v1775, %v1813
        %v1847 = vsel %vm626, %v1846, %v1817
        %v1848 = vsel %vm628, %v1847, %v1821
        %v1849 = vsel %vm630, %v1848, %v1825
        %v1850 = vsel %vm632, %v1849, %v1829
        %v1851 = vsel %vm634, %v1850, %v1833
        %v1852 = vsel %vm636, %v1851, %v1837
        %1853 = vst [vmem:[#allocation3 + $0x30] sm:$0xff] %v1845
        %1854 = vst [vmem:[#allocation3 + $0x38] sm:$0xff] %v1852
        %v1855 = vld [vmem:[#allocation2 + $0x1] sm:$0xff]
        %v1856 = vld [vmem:[#allocation2 + $0x9] sm:$0xff]
        %v1857 = vld [vmem:[#allocation2 + $0x19] sm:$0xff]
        %v1858 = vld [vmem:[#allocation2 + $0x21] sm:$0xff]
        %v1859 = vld [vmem:[#allocation2 + $0x31] sm:$0xff]
        %v1860 = vld [vmem:[#allocation2 + $0x39] sm:$0xff]
        %v1861 = vld [vmem:[#allocation2 + $0x49] sm:$0xff]
        %v1862 = vld [vmem:[#allocation2 + $0x51] sm:$0xff]
        %v1863 = vld [vmem:[#allocation2 + $0x61] sm:$0xff]
        %v1864 = vld [vmem:[#allocation2 + $0x69] sm:$0xff]
        %v1865 = vld [vmem:[#allocation2 + $0x79] sm:$0xff]
        %v1866 = vld [vmem:[#allocation2 + $0x81] sm:$0xff]
        %v1867 = vld [vmem:[#allocation2 + $0x91] sm:$0xff]
        %v1868 = vld [vmem:[#allocation2 + $0x99] sm:$0xff]
        %v1869 = vld [vmem:[#allocation2 + $0xa9] sm:$0xff]
        %v1870 = vld [vmem:[#allocation2 + $0xb1] sm:$0xff]
        %1887 = vrot.lane.b32.xlu0 %v1855, 127
        %v1888 = vpop.permute.xlu0 %1887
        %1889 = vrot.lane.b32.xlu0 %v1856, 127
        %v1890 = vpop.permute.xlu0 %1889
        %1891 = vrot.lane.b32.xlu0 %v1857, 127
        %v1892 = vpop.permute.xlu0 %1891
        %1893 = vrot.lane.b32.xlu0 %v1858, 127
        %v1894 = vpop.permute.xlu0 %1893
        %1895 = vrot.lane.b32.xlu0 %v1859, 127
        %v1896 = vpop.permute.xlu0 %1895
        %1897 = vrot.lane.b32.xlu0 %v1860, 127
        %v1898 = vpop.permute.xlu0 %1897
        %1899 = vrot.lane.b32.xlu0 %v1861, 127
        %v1900 = vpop.permute.xlu0 %1899
        %1901 = vrot.lane.b32.xlu0 %v1862, 127
        %v1902 = vpop.permute.xlu0 %1901
        %1903 = vrot.lane.b32.xlu0 %v1863, 127
        %v1904 = vpop.permute.xlu0 %1903
        %1905 = vrot.lane.b32.xlu0 %v1864, 127
        %v1906 = vpop.permute.xlu0 %1905
        %1907 = vrot.lane.b32.xlu0 %v1865, 127
        %v1908 = vpop.permute.xlu0 %1907
        %1909 = vrot.lane.b32.xlu0 %v1866, 127
        %v1910 = vpop.permute.xlu0 %1909
        %1911 = vrot.lane.b32.xlu0 %v1867, 127
        %v1912 = vpop.permute.xlu0 %1911
        %1913 = vrot.lane.b32.xlu0 %v1868, 127
        %v1914 = vpop.permute.xlu0 %1913
        %1915 = vrot.lane.b32.xlu0 %v1869, 127
        %v1916 = vpop.permute.xlu0 %1915
        %1917 = vrot.lane.b32.xlu0 %v1870, 127
        %v1918 = vpop.permute.xlu0 %1917
        %v1935 = vcombine.low %v1888, %v1896
        %v1936 = vcombine.high %v1888, %v1896
        %v1938 = vunpack.c.l.s4 1983009808
        %v1939 = vunpack.c.0.s8 %v1938
        %v1940 = vlaneseq
        %v1941 = vshrl.u32 %v1940, 7
        %v1942 = vsub.s32 %v1939, %v1941
        %v1943 = vrot.slane %v1935, %v1942
        %v1945 = vunpack.c.l.s4 1983009808
        %v1946 = vunpack.c.0.s8 %v1945
        %v1947 = vlaneseq
        %v1948 = vshrl.u32 %v1947, 7
        %v1949 = vsub.s32 %v1946, %v1948
        %v1950 = vrot.slane %v1936, %v1949
        %v1951 = vcombine.low %v1892, %v1900
        %v1952 = vcombine.high %v1892, %v1900
        %v1954 = vunpack.c.l.s4 1983009808
        %v1955 = vunpack.c.0.s8 %v1954
        %v1956 = vlaneseq
        %v1957 = vshrl.u32 %v1956, 7
        %v1958 = vsub.s32 %v1955, %v1957
        %v1959 = vrot.slane %v1951, %v1958
        %v1961 = vunpack.c.l.s4 1983009808
        %v1962 = vunpack.c.0.s8 %v1961
        %v1963 = vlaneseq
        %v1964 = vshrl.u32 %v1963, 7
        %v1965 = vsub.s32 %v1962, %v1964
        %v1966 = vrot.slane %v1952, %v1965
        %v1967 = vcombine.low %v1904, %v1912
        %v1968 = vcombine.high %v1904, %v1912
        %v1970 = vunpack.c.l.s4 1983009808
        %v1971 = vunpack.c.0.s8 %v1970
        %v1972 = vlaneseq
        %v1973 = vshrl.u32 %v1972, 7
        %v1974 = vsub.s32 %v1971, %v1973
        %v1975 = vrot.slane %v1967, %v1974
        %v1977 = vunpack.c.l.s4 1983009808
        %v1978 = vunpack.c.0.s8 %v1977
        %v1979 = vlaneseq
        %v1980 = vshrl.u32 %v1979, 7
        %v1981 = vsub.s32 %v1978, %v1980
        %v1982 = vrot.slane %v1968, %v1981
        %v1983 = vcombine.low %v1908, %v1916
        %v1984 = vcombine.high %v1908, %v1916
        %v1986 = vunpack.c.l.s4 1983009808
        %v1987 = vunpack.c.0.s8 %v1986
        %v1988 = vlaneseq
        %v1989 = vshrl.u32 %v1988, 7
        %v1990 = vsub.s32 %v1987, %v1989
        %v1991 = vrot.slane %v1983, %v1990
        %v1993 = vunpack.c.l.s4 1983009808
        %v1994 = vunpack.c.0.s8 %v1993
        %v1995 = vlaneseq
        %v1996 = vshrl.u32 %v1995, 7
        %v1997 = vsub.s32 %v1994, %v1996
        %v1998 = vrot.slane %v1984, %v1997
        %v1999 = vcombine.low %v1943, %v1959
        %v2000 = vcombine.high %v1943, %v1959
        %v2002 = vunpack.c.l.s4 1934713408
        %v2003 = vunpack.c.0.s8 %v2002
        %v2004 = vlaneseq
        %v2005 = vshrl.u32 %v2004, 7
        %v2006 = vsub.s32 %v2003, %v2005
        %v2007 = vrot.slane %v1999, %v2006
        %v2009 = vunpack.c.l.s4 1934713408
        %v2010 = vunpack.c.0.s8 %v2009
        %v2011 = vlaneseq
        %v2012 = vshrl.u32 %v2011, 7
        %v2013 = vsub.s32 %v2010, %v2012
        %v2014 = vrot.slane %v2000, %v2013
        %v2015 = vcombine.low %v1950, %v1966
        %v2016 = vcombine.high %v1950, %v1966
        %v2018 = vunpack.c.l.s4 1934713408
        %v2019 = vunpack.c.0.s8 %v2018
        %v2020 = vlaneseq
        %v2021 = vshrl.u32 %v2020, 7
        %v2022 = vsub.s32 %v2019, %v2021
        %v2023 = vrot.slane %v2015, %v2022
        %v2025 = vunpack.c.l.s4 1934713408
        %v2026 = vunpack.c.0.s8 %v2025
        %v2027 = vlaneseq
        %v2028 = vshrl.u32 %v2027, 7
        %v2029 = vsub.s32 %v2026, %v2028
        %v2030 = vrot.slane %v2016, %v2029
        %v2031 = vcombine.low %v1975, %v1991
        %v2032 = vcombine.high %v1975, %v1991
        %v2034 = vunpack.c.l.s4 1934713408
        %v2035 = vunpack.c.0.s8 %v2034
        %v2036 = vlaneseq
        %v2037 = vshrl.u32 %v2036, 7
        %v2038 = vsub.s32 %v2035, %v2037
        %v2039 = vrot.slane %v2031, %v2038
        %v2041 = vunpack.c.l.s4 1934713408
        %v2042 = vunpack.c.0.s8 %v2041
        %v2043 = vlaneseq
        %v2044 = vshrl.u32 %v2043, 7
        %v2045 = vsub.s32 %v2042, %v2044
        %v2046 = vrot.slane %v2032, %v2045
        %v2047 = vcombine.low %v1982, %v1998
        %v2048 = vcombine.high %v1982, %v1998
        %v2050 = vunpack.c.l.s4 1934713408
        %v2051 = vunpack.c.0.s8 %v2050
        %v2052 = vlaneseq
        %v2053 = vshrl.u32 %v2052, 7
        %v2054 = vsub.s32 %v2051, %v2053
        %v2055 = vrot.slane %v2047, %v2054
        %v2057 = vunpack.c.l.s4 1934713408
        %v2058 = vunpack.c.0.s8 %v2057
        %v2059 = vlaneseq
        %v2060 = vshrl.u32 %v2059, 7
        %v2061 = vsub.s32 %v2058, %v2060
        %v2062 = vrot.slane %v2048, %v2061
        %v2063 = vcombine.low %v2007, %v2039
        %v2064 = vcombine.high %v2007, %v2039
        %v2065 = vcombine.low %v2014, %v2046
        %v2066 = vcombine.high %v2014, %v2046
        %v2067 = vcombine.low %v2023, %v2055
        %v2068 = vcombine.high %v2023, %v2055
        %v2069 = vcombine.low %v2030, %v2062
        %v2070 = vcombine.high %v2030, %v2062
        %v2071 = vcombine.low %v1890, %v1898
        %v2072 = vcombine.high %v1890, %v1898
        %v2074 = vunpack.c.l.s4 1983009808
        %v2075 = vunpack.c.0.s8 %v2074
        %v2076 = vlaneseq
        %v2077 = vshrl.u32 %v2076, 7
        %v2078 = vsub.s32 %v2075, %v2077
        %v2079 = vrot.slane %v2071, %v2078
        %v2081 = vunpack.c.l.s4 1983009808
        %v2082 = vunpack.c.0.s8 %v2081
        %v2083 = vlaneseq
        %v2084 = vshrl.u32 %v2083, 7
        %v2085 = vsub.s32 %v2082, %v2084
        %v2086 = vrot.slane %v2072, %v2085
        %v2087 = vcombine.low %v1894, %v1902
        %v2088 = vcombine.high %v1894, %v1902
        %v2090 = vunpack.c.l.s4 1983009808
        %v2091 = vunpack.c.0.s8 %v2090
        %v2092 = vlaneseq
        %v2093 = vshrl.u32 %v2092, 7
        %v2094 = vsub.s32 %v2091, %v2093
        %v2095 = vrot.slane %v2087, %v2094
        %v2097 = vunpack.c.l.s4 1983009808
        %v2098 = vunpack.c.0.s8 %v2097
        %v2099 = vlaneseq
        %v2100 = vshrl.u32 %v2099, 7
        %v2101 = vsub.s32 %v2098, %v2100
        %v2102 = vrot.slane %v2088, %v2101
        %v2103 = vcombine.low %v1906, %v1914
        %v2104 = vcombine.high %v1906, %v1914
        %v2106 = vunpack.c.l.s4 1983009808
        %v2107 = vunpack.c.0.s8 %v2106
        %v2108 = vlaneseq
        %v2109 = vshrl.u32 %v2108, 7
        %v2110 = vsub.s32 %v2107, %v2109
        %v2111 = vrot.slane %v2103, %v2110
        %v2113 = vunpack.c.l.s4 1983009808
        %v2114 = vunpack.c.0.s8 %v2113
        %v2115 = vlaneseq
        %v2116 = vshrl.u32 %v2115, 7
        %v2117 = vsub.s32 %v2114, %v2116
        %v2118 = vrot.slane %v2104, %v2117
        %v2119 = vcombine.low %v1910, %v1918
        %v2120 = vcombine.high %v1910, %v1918
        %v2122 = vunpack.c.l.s4 1983009808
        %v2123 = vunpack.c.0.s8 %v2122
        %v2124 = vlaneseq
        %v2125 = vshrl.u32 %v2124, 7
        %v2126 = vsub.s32 %v2123, %v2125
        %v2127 = vrot.slane %v2119, %v2126
        %v2129 = vunpack.c.l.s4 1983009808
        %v2130 = vunpack.c.0.s8 %v2129
        %v2131 = vlaneseq
        %v2132 = vshrl.u32 %v2131, 7
        %v2133 = vsub.s32 %v2130, %v2132
        %v2134 = vrot.slane %v2120, %v2133
        %v2135 = vcombine.low %v2079, %v2095
        %v2136 = vcombine.high %v2079, %v2095
        %v2138 = vunpack.c.l.s4 1934713408
        %v2139 = vunpack.c.0.s8 %v2138
        %v2140 = vlaneseq
        %v2141 = vshrl.u32 %v2140, 7
        %v2142 = vsub.s32 %v2139, %v2141
        %v2143 = vrot.slane %v2135, %v2142
        %v2145 = vunpack.c.l.s4 1934713408
        %v2146 = vunpack.c.0.s8 %v2145
        %v2147 = vlaneseq
        %v2148 = vshrl.u32 %v2147, 7
        %v2149 = vsub.s32 %v2146, %v2148
        %v2150 = vrot.slane %v2136, %v2149
        %v2151 = vcombine.low %v2086, %v2102
        %v2152 = vcombine.high %v2086, %v2102
        %v2154 = vunpack.c.l.s4 1934713408
        %v2155 = vunpack.c.0.s8 %v2154
        %v2156 = vlaneseq
        %v2157 = vshrl.u32 %v2156, 7
        %v2158 = vsub.s32 %v2155, %v2157
        %v2159 = vrot.slane %v2151, %v2158
        %v2161 = vunpack.c.l.s4 1934713408
        %v2162 = vunpack.c.0.s8 %v2161
        %v2163 = vlaneseq
        %v2164 = vshrl.u32 %v2163, 7
        %v2165 = vsub.s32 %v2162, %v2164
        %v2166 = vrot.slane %v2152, %v2165
        %v2167 = vcombine.low %v2111, %v2127
        %v2168 = vcombine.high %v2111, %v2127
        %v2170 = vunpack.c.l.s4 1934713408
        %v2171 = vunpack.c.0.s8 %v2170
        %v2172 = vlaneseq
        %v2173 = vshrl.u32 %v2172, 7
        %v2174 = vsub.s32 %v2171, %v2173
        %v2175 = vrot.slane %v2167, %v2174
        %v2177 = vunpack.c.l.s4 1934713408
        %v2178 = vunpack.c.0.s8 %v2177
        %v2179 = vlaneseq
        %v2180 = vshrl.u32 %v2179, 7
        %v2181 = vsub.s32 %v2178, %v2180
        %v2182 = vrot.slane %v2168, %v2181
        %v2183 = vcombine.low %v2118, %v2134
        %v2184 = vcombine.high %v2118, %v2134
        %v2186 = vunpack.c.l.s4 1934713408
        %v2187 = vunpack.c.0.s8 %v2186
        %v2188 = vlaneseq
        %v2189 = vshrl.u32 %v2188, 7
        %v2190 = vsub.s32 %v2187, %v2189
        %v2191 = vrot.slane %v2183, %v2190
        %v2193 = vunpack.c.l.s4 1934713408
        %v2194 = vunpack.c.0.s8 %v2193
        %v2195 = vlaneseq
        %v2196 = vshrl.u32 %v2195, 7
        %v2197 = vsub.s32 %v2194, %v2196
        %v2198 = vrot.slane %v2184, %v2197
        %v2199 = vcombine.low %v2143, %v2175
        %v2200 = vcombine.high %v2143, %v2175
        %v2201 = vcombine.low %v2150, %v2182
        %v2202 = vcombine.high %v2150, %v2182
        %v2203 = vcombine.low %v2159, %v2191
        %v2204 = vcombine.high %v2159, %v2191
        %v2205 = vcombine.low %v2166, %v2198
        %v2206 = vcombine.high %v2166, %v2198
        %2208 = vrot.lane.b32.xlu0 %v2064, 16
        %v2209 = vpop.permute.xlu0 %2208
        %2212 = vrot.lane.b32.xlu0 %v2065, 32
        %v2213 = vpop.permute.xlu0 %2212
        %2216 = vrot.lane.b32.xlu0 %v2066, 48
        %v2217 = vpop.permute.xlu0 %2216
        %2220 = vrot.lane.b32.xlu0 %v2067, 64
        %v2221 = vpop.permute.xlu0 %2220
        %2224 = vrot.lane.b32.xlu0 %v2068, 80
        %v2225 = vpop.permute.xlu0 %2224
        %2228 = vrot.lane.b32.xlu0 %v2069, 96
        %v2229 = vpop.permute.xlu0 %2228
        %2232 = vrot.lane.b32.xlu0 %v2070, 112
        %v2233 = vpop.permute.xlu0 %2232
        %2236 = vrot.lane.b32.xlu0 %v2200, 16
        %v2237 = vpop.permute.xlu0 %2236
        %2240 = vrot.lane.b32.xlu0 %v2201, 32
        %v2241 = vpop.permute.xlu0 %2240
        %2244 = vrot.lane.b32.xlu0 %v2202, 48
        %v2245 = vpop.permute.xlu0 %2244
        %2248 = vrot.lane.b32.xlu0 %v2203, 64
        %v2249 = vpop.permute.xlu0 %2248
        %2252 = vrot.lane.b32.xlu0 %v2204, 80
        %v2253 = vpop.permute.xlu0 %2252
        %2256 = vrot.lane.b32.xlu0 %v2205, 96
        %v2257 = vpop.permute.xlu0 %2256
        %2260 = vrot.lane.b32.xlu0 %v2206, 112
        %v2261 = vpop.permute.xlu0 %2260
        %v2263 = vsel %vm624, %v2063, %v2209
        %v2264 = vsel %vm626, %v2263, %v2213
        %v2265 = vsel %vm628, %v2264, %v2217
        %v2266 = vsel %vm630, %v2265, %v2221
        %v2267 = vsel %vm632, %v2266, %v2225
        %v2268 = vsel %vm634, %v2267, %v2229
        %v2269 = vsel %vm636, %v2268, %v2233
        %v2270 = vsel %vm624, %v2199, %v2237
        %v2271 = vsel %vm626, %v2270, %v2241
        %v2272 = vsel %vm628, %v2271, %v2245
        %v2273 = vsel %vm630, %v2272, %v2249
        %v2274 = vsel %vm632, %v2273, %v2253
        %v2275 = vsel %vm634, %v2274, %v2257
        %v2276 = vsel %vm636, %v2275, %v2261
        %2277 = vst [vmem:[#allocation3 + $0x40] sm:$0xff] %v2269
        %2278 = vst [vmem:[#allocation3 + $0x48] sm:$0xff] %v2276
        %v2279 = vld [vmem:[#allocation2 + $0x1] sm:$0xff]
        %v2280 = vld [vmem:[#allocation2 + $0x9] sm:$0xff]
        %v2281 = vld [vmem:[#allocation2 + $0x19] sm:$0xff]
        %v2282 = vld [vmem:[#allocation2 + $0x21] sm:$0xff]
        %v2283 = vld [vmem:[#allocation2 + $0x31] sm:$0xff]
        %v2284 = vld [vmem:[#allocation2 + $0x39] sm:$0xff]
        %v2285 = vld [vmem:[#allocation2 + $0x49] sm:$0xff]
        %v2286 = vld [vmem:[#allocation2 + $0x51] sm:$0xff]
        %v2287 = vld [vmem:[#allocation2 + $0x61] sm:$0xff]
        %v2288 = vld [vmem:[#allocation2 + $0x69] sm:$0xff]
        %v2289 = vld [vmem:[#allocation2 + $0x79] sm:$0xff]
        %v2290 = vld [vmem:[#allocation2 + $0x81] sm:$0xff]
        %v2291 = vld [vmem:[#allocation2 + $0x91] sm:$0xff]
        %v2292 = vld [vmem:[#allocation2 + $0x99] sm:$0xff]
        %v2293 = vld [vmem:[#allocation2 + $0xa9] sm:$0xff]
        %v2294 = vld [vmem:[#allocation2 + $0xb1] sm:$0xff]
        %2311 = vrot.lane.b32.xlu0 %v2279, 126
        %v2312 = vpop.permute.xlu0 %2311
        %2313 = vrot.lane.b32.xlu0 %v2280, 126
        %v2314 = vpop.permute.xlu0 %2313
        %2315 = vrot.lane.b32.xlu0 %v2281, 126
        %v2316 = vpop.permute.xlu0 %2315
        %2317 = vrot.lane.b32.xlu0 %v2282, 126
        %v2318 = vpop.permute.xlu0 %2317
        %2319 = vrot.lane.b32.xlu0 %v2283, 126
        %v2320 = vpop.permute.xlu0 %2319
        %2321 = vrot.lane.b32.xlu0 %v2284, 126
        %v2322 = vpop.permute.xlu0 %2321
        %2323 = vrot.lane.b32.xlu0 %v2285, 126
        %v2324 = vpop.permute.xlu0 %2323
        %2325 = vrot.lane.b32.xlu0 %v2286, 126
        %v2326 = vpop.permute.xlu0 %2325
        %2327 = vrot.lane.b32.xlu0 %v2287, 126
        %v2328 = vpop.permute.xlu0 %2327
        %2329 = vrot.lane.b32.xlu0 %v2288, 126
        %v2330 = vpop.permute.xlu0 %2329
        %2331 = vrot.lane.b32.xlu0 %v2289, 126
        %v2332 = vpop.permute.xlu0 %2331
        %2333 = vrot.lane.b32.xlu0 %v2290, 126
        %v2334 = vpop.permute.xlu0 %2333
        %2335 = vrot.lane.b32.xlu0 %v2291, 126
        %v2336 = vpop.permute.xlu0 %2335
        %2337 = vrot.lane.b32.xlu0 %v2292, 126
        %v2338 = vpop.permute.xlu0 %2337
        %2339 = vrot.lane.b32.xlu0 %v2293, 126
        %v2340 = vpop.permute.xlu0 %2339
        %2341 = vrot.lane.b32.xlu0 %v2294, 126
        %v2342 = vpop.permute.xlu0 %2341
        %v2359 = vcombine.low %v2312, %v2320
        %v2360 = vcombine.high %v2312, %v2320
        %v2362 = vunpack.c.l.s4 1983009808
        %v2363 = vunpack.c.0.s8 %v2362
        %v2364 = vlaneseq
        %v2365 = vshrl.u32 %v2364, 7
        %v2366 = vsub.s32 %v2363, %v2365
        %v2367 = vrot.slane %v2359, %v2366
        %v2369 = vunpack.c.l.s4 1983009808
        %v2370 = vunpack.c.0.s8 %v2369
        %v2371 = vlaneseq
        %v2372 = vshrl.u32 %v2371, 7
        %v2373 = vsub.s32 %v2370, %v2372
        %v2374 = vrot.slane %v2360, %v2373
        %v2375 = vcombine.low %v2316, %v2324
        %v2376 = vcombine.high %v2316, %v2324
        %v2378 = vunpack.c.l.s4 1983009808
        %v2379 = vunpack.c.0.s8 %v2378
        %v2380 = vlaneseq
        %v2381 = vshrl.u32 %v2380, 7
        %v2382 = vsub.s32 %v2379, %v2381
        %v2383 = vrot.slane %v2375, %v2382
        %v2385 = vunpack.c.l.s4 1983009808
        %v2386 = vunpack.c.0.s8 %v2385
        %v2387 = vlaneseq
        %v2388 = vshrl.u32 %v2387, 7
        %v2389 = vsub.s32 %v2386, %v2388
        %v2390 = vrot.slane %v2376, %v2389
        %v2391 = vcombine.low %v2328, %v2336
        %v2392 = vcombine.high %v2328, %v2336
        %v2394 = vunpack.c.l.s4 1983009808
        %v2395 = vunpack.c.0.s8 %v2394
        %v2396 = vlaneseq
        %v2397 = vshrl.u32 %v2396, 7
        %v2398 = vsub.s32 %v2395, %v2397
        %v2399 = vrot.slane %v2391, %v2398
        %v2401 = vunpack.c.l.s4 1983009808
        %v2402 = vunpack.c.0.s8 %v2401
        %v2403 = vlaneseq
        %v2404 = vshrl.u32 %v2403, 7
        %v2405 = vsub.s32 %v2402, %v2404
        %v2406 = vrot.slane %v2392, %v2405
        %v2407 = vcombine.low %v2332, %v2340
        %v2408 = vcombine.high %v2332, %v2340
        %v2410 = vunpack.c.l.s4 1983009808
        %v2411 = vunpack.c.0.s8 %v2410
        %v2412 = vlaneseq
        %v2413 = vshrl.u32 %v2412, 7
        %v2414 = vsub.s32 %v2411, %v2413
        %v2415 = vrot.slane %v2407, %v2414
        %v2417 = vunpack.c.l.s4 1983009808
        %v2418 = vunpack.c.0.s8 %v2417
        %v2419 = vlaneseq
        %v2420 = vshrl.u32 %v2419, 7
        %v2421 = vsub.s32 %v2418, %v2420
        %v2422 = vrot.slane %v2408, %v2421
        %v2423 = vcombine.low %v2367, %v2383
        %v2424 = vcombine.high %v2367, %v2383
        %v2426 = vunpack.c.l.s4 1934713408
        %v2427 = vunpack.c.0.s8 %v2426
        %v2428 = vlaneseq
        %v2429 = vshrl.u32 %v2428, 7
        %v2430 = vsub.s32 %v2427, %v2429
        %v2431 = vrot.slane %v2423, %v2430
        %v2433 = vunpack.c.l.s4 1934713408
        %v2434 = vunpack.c.0.s8 %v2433
        %v2435 = vlaneseq
        %v2436 = vshrl.u32 %v2435, 7
        %v2437 = vsub.s32 %v2434, %v2436
        %v2438 = vrot.slane %v2424, %v2437
        %v2439 = vcombine.low %v2374, %v2390
        %v2440 = vcombine.high %v2374, %v2390
        %v2442 = vunpack.c.l.s4 1934713408
        %v2443 = vunpack.c.0.s8 %v2442
        %v2444 = vlaneseq
        %v2445 = vshrl.u32 %v2444, 7
        %v2446 = vsub.s32 %v2443, %v2445
        %v2447 = vrot.slane %v2439, %v2446
        %v2449 = vunpack.c.l.s4 1934713408
        %v2450 = vunpack.c.0.s8 %v2449
        %v2451 = vlaneseq
        %v2452 = vshrl.u32 %v2451, 7
        %v2453 = vsub.s32 %v2450, %v2452
        %v2454 = vrot.slane %v2440, %v2453
        %v2455 = vcombine.low %v2399, %v2415
        %v2456 = vcombine.high %v2399, %v2415
        %v2458 = vunpack.c.l.s4 1934713408
        %v2459 = vunpack.c.0.s8 %v2458
        %v2460 = vlaneseq
        %v2461 = vshrl.u32 %v2460, 7
        %v2462 = vsub.s32 %v2459, %v2461
        %v2463 = vrot.slane %v2455, %v2462
        %v2465 = vunpack.c.l.s4 1934713408
        %v2466 = vunpack.c.0.s8 %v2465
        %v2467 = vlaneseq
        %v2468 = vshrl.u32 %v2467, 7
        %v2469 = vsub.s32 %v2466, %v2468
        %v2470 = vrot.slane %v2456, %v2469
        %v2471 = vcombine.low %v2406, %v2422
        %v2472 = vcombine.high %v2406, %v2422
        %v2474 = vunpack.c.l.s4 1934713408
        %v2475 = vunpack.c.0.s8 %v2474
        %v2476 = vlaneseq
        %v2477 = vshrl.u32 %v2476, 7
        %v2478 = vsub.s32 %v2475, %v2477
        %v2479 = vrot.slane %v2471, %v2478
        %v2481 = vunpack.c.l.s4 1934713408
        %v2482 = vunpack.c.0.s8 %v2481
        %v2483 = vlaneseq
        %v2484 = vshrl.u32 %v2483, 7
        %v2485 = vsub.s32 %v2482, %v2484
        %v2486 = vrot.slane %v2472, %v2485
        %v2487 = vcombine.low %v2431, %v2463
        %v2488 = vcombine.high %v2431, %v2463
        %v2489 = vcombine.low %v2438, %v2470
        %v2490 = vcombine.high %v2438, %v2470
        %v2491 = vcombine.low %v2447, %v2479
        %v2492 = vcombine.high %v2447, %v2479
        %v2493 = vcombine.low %v2454, %v2486
        %v2494 = vcombine.high %v2454, %v2486
        %v2495 = vcombine.low %v2314, %v2322
        %v2496 = vcombine.high %v2314, %v2322
        %v2498 = vunpack.c.l.s4 1983009808
        %v2499 = vunpack.c.0.s8 %v2498
        %v2500 = vlaneseq
        %v2501 = vshrl.u32 %v2500, 7
        %v2502 = vsub.s32 %v2499, %v2501
        %v2503 = vrot.slane %v2495, %v2502
        %v2505 = vunpack.c.l.s4 1983009808
        %v2506 = vunpack.c.0.s8 %v2505
        %v2507 = vlaneseq
        %v2508 = vshrl.u32 %v2507, 7
        %v2509 = vsub.s32 %v2506, %v2508
        %v2510 = vrot.slane %v2496, %v2509
        %v2511 = vcombine.low %v2318, %v2326
        %v2512 = vcombine.high %v2318, %v2326
        %v2514 = vunpack.c.l.s4 1983009808
        %v2515 = vunpack.c.0.s8 %v2514
        %v2516 = vlaneseq
        %v2517 = vshrl.u32 %v2516, 7
        %v2518 = vsub.s32 %v2515, %v2517
        %v2519 = vrot.slane %v2511, %v2518
        %v2521 = vunpack.c.l.s4 1983009808
        %v2522 = vunpack.c.0.s8 %v2521
        %v2523 = vlaneseq
        %v2524 = vshrl.u32 %v2523, 7
        %v2525 = vsub.s32 %v2522, %v2524
        %v2526 = vrot.slane %v2512, %v2525
        %v2527 = vcombine.low %v2330, %v2338
        %v2528 = vcombine.high %v2330, %v2338
        %v2530 = vunpack.c.l.s4 1983009808
        %v2531 = vunpack.c.0.s8 %v2530
        %v2532 = vlaneseq
        %v2533 = vshrl.u32 %v2532, 7
        %v2534 = vsub.s32 %v2531, %v2533
        %v2535 = vrot.slane %v2527, %v2534
        %v2537 = vunpack.c.l.s4 1983009808
        %v2538 = vunpack.c.0.s8 %v2537
        %v2539 = vlaneseq
        %v2540 = vshrl.u32 %v2539, 7
        %v2541 = vsub.s32 %v2538, %v2540
        %v2542 = vrot.slane %v2528, %v2541
        %v2543 = vcombine.low %v2334, %v2342
        %v2544 = vcombine.high %v2334, %v2342
        %v2546 = vunpack.c.l.s4 1983009808
        %v2547 = vunpack.c.0.s8 %v2546
        %v2548 = vlaneseq
        %v2549 = vshrl.u32 %v2548, 7
        %v2550 = vsub.s32 %v2547, %v2549
        %v2551 = vrot.slane %v2543, %v2550
        %v2553 = vunpack.c.l.s4 1983009808
        %v2554 = vunpack.c.0.s8 %v2553
        %v2555 = vlaneseq
        %v2556 = vshrl.u32 %v2555, 7
        %v2557 = vsub.s32 %v2554, %v2556
        %v2558 = vrot.slane %v2544, %v2557
        %v2559 = vcombine.low %v2503, %v2519
        %v2560 = vcombine.high %v2503, %v2519
        %v2562 = vunpack.c.l.s4 1934713408
        %v2563 = vunpack.c.0.s8 %v2562
        %v2564 = vlaneseq
        %v2565 = vshrl.u32 %v2564, 7
        %v2566 = vsub.s32 %v2563, %v2565
        %v2567 = vrot.slane %v2559, %v2566
        %v2569 = vunpack.c.l.s4 1934713408
        %v2570 = vunpack.c.0.s8 %v2569
        %v2571 = vlaneseq
        %v2572 = vshrl.u32 %v2571, 7
        %v2573 = vsub.s32 %v2570, %v2572
        %v2574 = vrot.slane %v2560, %v2573
        %v2575 = vcombine.low %v2510, %v2526
        %v2576 = vcombine.high %v2510, %v2526
        %v2578 = vunpack.c.l.s4 1934713408
        %v2579 = vunpack.c.0.s8 %v2578
        %v2580 = vlaneseq
        %v2581 = vshrl.u32 %v2580, 7
        %v2582 = vsub.s32 %v2579, %v2581
        %v2583 = vrot.slane %v2575, %v2582
        %v2585 = vunpack.c.l.s4 1934713408
        %v2586 = vunpack.c.0.s8 %v2585
        %v2587 = vlaneseq
        %v2588 = vshrl.u32 %v2587, 7
        %v2589 = vsub.s32 %v2586, %v2588
        %v2590 = vrot.slane %v2576, %v2589
        %v2591 = vcombine.low %v2535, %v2551
        %v2592 = vcombine.high %v2535, %v2551
        %v2594 = vunpack.c.l.s4 1934713408
        %v2595 = vunpack.c.0.s8 %v2594
        %v2596 = vlaneseq
        %v2597 = vshrl.u32 %v2596, 7
        %v2598 = vsub.s32 %v2595, %v2597
        %v2599 = vrot.slane %v2591, %v2598
        %v2601 = vunpack.c.l.s4 1934713408
        %v2602 = vunpack.c.0.s8 %v2601
        %v2603 = vlaneseq
        %v2604 = vshrl.u32 %v2603, 7
        %v2605 = vsub.s32 %v2602, %v2604
        %v2606 = vrot.slane %v2592, %v2605
        %v2607 = vcombine.low %v2542, %v2558
        %v2608 = vcombine.high %v2542, %v2558
        %v2610 = vunpack.c.l.s4 1934713408
        %v2611 = vunpack.c.0.s8 %v2610
        %v2612 = vlaneseq
        %v2613 = vshrl.u32 %v2612, 7
        %v2614 = vsub.s32 %v2611, %v2613
        %v2615 = vrot.slane %v2607, %v2614
        %v2617 = vunpack.c.l.s4 1934713408
        %v2618 = vunpack.c.0.s8 %v2617
        %v2619 = vlaneseq
        %v2620 = vshrl.u32 %v2619, 7
        %v2621 = vsub.s32 %v2618, %v2620
        %v2622 = vrot.slane %v2608, %v2621
        %v2623 = vcombine.low %v2567, %v2599
        %v2624 = vcombine.high %v2567, %v2599
        %v2625 = vcombine.low %v2574, %v2606
        %v2626 = vcombine.high %v2574, %v2606
        %v2627 = vcombine.low %v2583, %v2615
        %v2628 = vcombine.high %v2583, %v2615
        %v2629 = vcombine.low %v2590, %v2622
        %v2630 = vcombine.high %v2590, %v2622
        %2632 = vrot.lane.b32.xlu0 %v2488, 16
        %v2633 = vpop.permute.xlu0 %2632
        %2636 = vrot.lane.b32.xlu0 %v2489, 32
        %v2637 = vpop.permute.xlu0 %2636
        %2640 = vrot.lane.b32.xlu0 %v2490, 48
        %v2641 = vpop.permute.xlu0 %2640
        %2644 = vrot.lane.b32.xlu0 %v2491, 64
        %v2645 = vpop.permute.xlu0 %2644
        %2648 = vrot.lane.b32.xlu0 %v2492, 80
        %v2649 = vpop.permute.xlu0 %2648
        %2652 = vrot.lane.b32.xlu0 %v2493, 96
        %v2653 = vpop.permute.xlu0 %2652
        %2656 = vrot.lane.b32.xlu0 %v2494, 112
        %v2657 = vpop.permute.xlu0 %2656
        %2660 = vrot.lane.b32.xlu0 %v2624, 16
        %v2661 = vpop.permute.xlu0 %2660
        %2664 = vrot.lane.b32.xlu0 %v2625, 32
        %v2665 = vpop.permute.xlu0 %2664
        %2668 = vrot.lane.b32.xlu0 %v2626, 48
        %v2669 = vpop.permute.xlu0 %2668
        %2672 = vrot.lane.b32.xlu0 %v2627, 64
        %v2673 = vpop.permute.xlu0 %2672
        %2676 = vrot.lane.b32.xlu0 %v2628, 80
        %v2677 = vpop.permute.xlu0 %2676
        %2680 = vrot.lane.b32.xlu0 %v2629, 96
        %v2681 = vpop.permute.xlu0 %2680
        %2684 = vrot.lane.b32.xlu0 %v2630, 112
        %v2685 = vpop.permute.xlu0 %2684
        %v2687 = vsel %vm624, %v2487, %v2633
        %v2688 = vsel %vm626, %v2687, %v2637
        %v2689 = vsel %vm628, %v2688, %v2641
        %v2690 = vsel %vm630, %v2689, %v2645
        %v2691 = vsel %vm632, %v2690, %v2649
        %v2692 = vsel %vm634, %v2691, %v2653
        %v2693 = vsel %vm636, %v2692, %v2657
        %v2694 = vsel %vm624, %v2623, %v2661
        %v2695 = vsel %vm626, %v2694, %v2665
        %v2696 = vsel %vm628, %v2695, %v2669
        %v2697 = vsel %vm630, %v2696, %v2673
        %v2698 = vsel %vm632, %v2697, %v2677
        %v2699 = vsel %vm634, %v2698, %v2681
        %v2700 = vsel %vm636, %v2699, %v2685
        %2701 = vst [vmem:[#allocation3 + $0x50] sm:$0xff] %v2693
        %2702 = vst [vmem:[#allocation3 + $0x58] sm:$0xff] %v2700
        %v2703 = vld [vmem:[#allocation2 + $0x2] sm:$0xff]
        %v2704 = vld [vmem:[#allocation2 + $0xa] sm:$0xff]
        %v2705 = vld [vmem:[#allocation2 + $0x1a] sm:$0xff]
        %v2706 = vld [vmem:[#allocation2 + $0x22] sm:$0xff]
        %v2707 = vld [vmem:[#allocation2 + $0x32] sm:$0xff]
        %v2708 = vld [vmem:[#allocation2 + $0x3a] sm:$0xff]
        %v2709 = vld [vmem:[#allocation2 + $0x4a] sm:$0xff]
        %v2710 = vld [vmem:[#allocation2 + $0x52] sm:$0xff]
        %v2711 = vld [vmem:[#allocation2 + $0x62] sm:$0xff]
        %v2712 = vld [vmem:[#allocation2 + $0x6a] sm:$0xff]
        %v2713 = vld [vmem:[#allocation2 + $0x7a] sm:$0xff]
        %v2714 = vld [vmem:[#allocation2 + $0x82] sm:$0xff]
        %v2715 = vld [vmem:[#allocation2 + $0x92] sm:$0xff]
        %v2716 = vld [vmem:[#allocation2 + $0x9a] sm:$0xff]
        %v2717 = vld [vmem:[#allocation2 + $0xaa] sm:$0xff]
        %v2718 = vld [vmem:[#allocation2 + $0xb2] sm:$0xff]
        %v2719 = vcombine.low %v2703, %v2707
        %v2720 = vcombine.high %v2703, %v2707
        %v2722 = vunpack.c.l.s4 1983009808
        %v2723 = vunpack.c.0.s8 %v2722
        %v2724 = vlaneseq
        %v2725 = vshrl.u32 %v2724, 7
        %v2726 = vsub.s32 %v2723, %v2725
        %v2727 = vrot.slane %v2719, %v2726
        %v2729 = vunpack.c.l.s4 1983009808
        %v2730 = vunpack.c.0.s8 %v2729
        %v2731 = vlaneseq
        %v2732 = vshrl.u32 %v2731, 7
        %v2733 = vsub.s32 %v2730, %v2732
        %v2734 = vrot.slane %v2720, %v2733
        %v2735 = vcombine.low %v2705, %v2709
        %v2736 = vcombine.high %v2705, %v2709
        %v2738 = vunpack.c.l.s4 1983009808
        %v2739 = vunpack.c.0.s8 %v2738
        %v2740 = vlaneseq
        %v2741 = vshrl.u32 %v2740, 7
        %v2742 = vsub.s32 %v2739, %v2741
        %v2743 = vrot.slane %v2735, %v2742
        %v2745 = vunpack.c.l.s4 1983009808
        %v2746 = vunpack.c.0.s8 %v2745
        %v2747 = vlaneseq
        %v2748 = vshrl.u32 %v2747, 7
        %v2749 = vsub.s32 %v2746, %v2748
        %v2750 = vrot.slane %v2736, %v2749
        %v2751 = vcombine.low %v2711, %v2715
        %v2752 = vcombine.high %v2711, %v2715
        %v2754 = vunpack.c.l.s4 1983009808
        %v2755 = vunpack.c.0.s8 %v2754
        %v2756 = vlaneseq
        %v2757 = vshrl.u32 %v2756, 7
        %v2758 = vsub.s32 %v2755, %v2757
        %v2759 = vrot.slane %v2751, %v2758
        %v2761 = vunpack.c.l.s4 1983009808
        %v2762 = vunpack.c.0.s8 %v2761
        %v2763 = vlaneseq
        %v2764 = vshrl.u32 %v2763, 7
        %v2765 = vsub.s32 %v2762, %v2764
        %v2766 = vrot.slane %v2752, %v2765
        %v2767 = vcombine.low %v2713, %v2717
        %v2768 = vcombine.high %v2713, %v2717
        %v2770 = vunpack.c.l.s4 1983009808
        %v2771 = vunpack.c.0.s8 %v2770
        %v2772 = vlaneseq
        %v2773 = vshrl.u32 %v2772, 7
        %v2774 = vsub.s32 %v2771, %v2773
        %v2775 = vrot.slane %v2767, %v2774
        %v2777 = vunpack.c.l.s4 1983009808
        %v2778 = vunpack.c.0.s8 %v2777
        %v2779 = vlaneseq
        %v2780 = vshrl.u32 %v2779, 7
        %v2781 = vsub.s32 %v2778, %v2780
        %v2782 = vrot.slane %v2768, %v2781
        %v2783 = vcombine.low %v2727, %v2743
        %v2784 = vcombine.high %v2727, %v2743
        %v2786 = vunpack.c.l.s4 1934713408
        %v2787 = vunpack.c.0.s8 %v2786
        %v2788 = vlaneseq
        %v2789 = vshrl.u32 %v2788, 7
        %v2790 = vsub.s32 %v2787, %v2789
        %v2791 = vrot.slane %v2783, %v2790
        %v2793 = vunpack.c.l.s4 1934713408
        %v2794 = vunpack.c.0.s8 %v2793
        %v2795 = vlaneseq
        %v2796 = vshrl.u32 %v2795, 7
        %v2797 = vsub.s32 %v2794, %v2796
        %v2798 = vrot.slane %v2784, %v2797
        %v2799 = vcombine.low %v2734, %v2750
        %v2800 = vcombine.high %v2734, %v2750
        %v2802 = vunpack.c.l.s4 1934713408
        %v2803 = vunpack.c.0.s8 %v2802
        %v2804 = vlaneseq
        %v2805 = vshrl.u32 %v2804, 7
        %v2806 = vsub.s32 %v2803, %v2805
        %v2807 = vrot.slane %v2799, %v2806
        %v2809 = vunpack.c.l.s4 1934713408
        %v2810 = vunpack.c.0.s8 %v2809
        %v2811 = vlaneseq
        %v2812 = vshrl.u32 %v2811, 7
        %v2813 = vsub.s32 %v2810, %v2812
        %v2814 = vrot.slane %v2800, %v2813
        %v2815 = vcombine.low %v2759, %v2775
        %v2816 = vcombine.high %v2759, %v2775
        %v2818 = vunpack.c.l.s4 1934713408
        %v2819 = vunpack.c.0.s8 %v2818
        %v2820 = vlaneseq
        %v2821 = vshrl.u32 %v2820, 7
        %v2822 = vsub.s32 %v2819, %v2821
        %v2823 = vrot.slane %v2815, %v2822
        %v2825 = vunpack.c.l.s4 1934713408
        %v2826 = vunpack.c.0.s8 %v2825
        %v2827 = vlaneseq
        %v2828 = vshrl.u32 %v2827, 7
        %v2829 = vsub.s32 %v2826, %v2828
        %v2830 = vrot.slane %v2816, %v2829
        %v2831 = vcombine.low %v2766, %v2782
        %v2832 = vcombine.high %v2766, %v2782
        %v2834 = vunpack.c.l.s4 1934713408
        %v2835 = vunpack.c.0.s8 %v2834
        %v2836 = vlaneseq
        %v2837 = vshrl.u32 %v2836, 7
        %v2838 = vsub.s32 %v2835, %v2837
        %v2839 = vrot.slane %v2831, %v2838
        %v2841 = vunpack.c.l.s4 1934713408
        %v2842 = vunpack.c.0.s8 %v2841
        %v2843 = vlaneseq
        %v2844 = vshrl.u32 %v2843, 7
        %v2845 = vsub.s32 %v2842, %v2844
        %v2846 = vrot.slane %v2832, %v2845
        %v2847 = vcombine.low %v2791, %v2823
        %v2848 = vcombine.high %v2791, %v2823
        %v2849 = vcombine.low %v2798, %v2830
        %v2850 = vcombine.high %v2798, %v2830
        %v2851 = vcombine.low %v2807, %v2839
        %v2852 = vcombine.high %v2807, %v2839
        %v2853 = vcombine.low %v2814, %v2846
        %v2854 = vcombine.high %v2814, %v2846
        %v2855 = vcombine.low %v2704, %v2708
        %v2856 = vcombine.high %v2704, %v2708
        %v2858 = vunpack.c.l.s4 1983009808
        %v2859 = vunpack.c.0.s8 %v2858
        %v2860 = vlaneseq
        %v2861 = vshrl.u32 %v2860, 7
        %v2862 = vsub.s32 %v2859, %v2861
        %v2863 = vrot.slane %v2855, %v2862
        %v2865 = vunpack.c.l.s4 1983009808
        %v2866 = vunpack.c.0.s8 %v2865
        %v2867 = vlaneseq
        %v2868 = vshrl.u32 %v2867, 7
        %v2869 = vsub.s32 %v2866, %v2868
        %v2870 = vrot.slane %v2856, %v2869
        %v2871 = vcombine.low %v2706, %v2710
        %v2872 = vcombine.high %v2706, %v2710
        %v2874 = vunpack.c.l.s4 1983009808
        %v2875 = vunpack.c.0.s8 %v2874
        %v2876 = vlaneseq
        %v2877 = vshrl.u32 %v2876, 7
        %v2878 = vsub.s32 %v2875, %v2877
        %v2879 = vrot.slane %v2871, %v2878
        %v2881 = vunpack.c.l.s4 1983009808
        %v2882 = vunpack.c.0.s8 %v2881
        %v2883 = vlaneseq
        %v2884 = vshrl.u32 %v2883, 7
        %v2885 = vsub.s32 %v2882, %v2884
        %v2886 = vrot.slane %v2872, %v2885
        %v2887 = vcombine.low %v2712, %v2716
        %v2888 = vcombine.high %v2712, %v2716
        %v2890 = vunpack.c.l.s4 1983009808
        %v2891 = vunpack.c.0.s8 %v2890
        %v2892 = vlaneseq
        %v2893 = vshrl.u32 %v2892, 7
        %v2894 = vsub.s32 %v2891, %v2893
        %v2895 = vrot.slane %v2887, %v2894
        %v2897 = vunpack.c.l.s4 1983009808
        %v2898 = vunpack.c.0.s8 %v2897
        %v2899 = vlaneseq
        %v2900 = vshrl.u32 %v2899, 7
        %v2901 = vsub.s32 %v2898, %v2900
        %v2902 = vrot.slane %v2888, %v2901
        %v2903 = vcombine.low %v2714, %v2718
        %v2904 = vcombine.high %v2714, %v2718
        %v2906 = vunpack.c.l.s4 1983009808
        %v2907 = vunpack.c.0.s8 %v2906
        %v2908 = vlaneseq
        %v2909 = vshrl.u32 %v2908, 7
        %v2910 = vsub.s32 %v2907, %v2909
        %v2911 = vrot.slane %v2903, %v2910
        %v2913 = vunpack.c.l.s4 1983009808
        %v2914 = vunpack.c.0.s8 %v2913
        %v2915 = vlaneseq
        %v2916 = vshrl.u32 %v2915, 7
        %v2917 = vsub.s32 %v2914, %v2916
        %v2918 = vrot.slane %v2904, %v2917
        %v2919 = vcombine.low %v2863, %v2879
        %v2920 = vcombine.high %v2863, %v2879
        %v2922 = vunpack.c.l.s4 1934713408
        %v2923 = vunpack.c.0.s8 %v2922
        %v2924 = vlaneseq
        %v2925 = vshrl.u32 %v2924, 7
        %v2926 = vsub.s32 %v2923, %v2925
        %v2927 = vrot.slane %v2919, %v2926
        %v2929 = vunpack.c.l.s4 1934713408
        %v2930 = vunpack.c.0.s8 %v2929
        %v2931 = vlaneseq
        %v2932 = vshrl.u32 %v2931, 7
        %v2933 = vsub.s32 %v2930, %v2932
        %v2934 = vrot.slane %v2920, %v2933
        %v2935 = vcombine.low %v2870, %v2886
        %v2936 = vcombine.high %v2870, %v2886
        %v2938 = vunpack.c.l.s4 1934713408
        %v2939 = vunpack.c.0.s8 %v2938
        %v2940 = vlaneseq
        %v2941 = vshrl.u32 %v2940, 7
        %v2942 = vsub.s32 %v2939, %v2941
        %v2943 = vrot.slane %v2935, %v2942
        %v2945 = vunpack.c.l.s4 1934713408
        %v2946 = vunpack.c.0.s8 %v2945
        %v2947 = vlaneseq
        %v2948 = vshrl.u32 %v2947, 7
        %v2949 = vsub.s32 %v2946, %v2948
        %v2950 = vrot.slane %v2936, %v2949
        %v2951 = vcombine.low %v2895, %v2911
        %v2952 = vcombine.high %v2895, %v2911
        %v2954 = vunpack.c.l.s4 1934713408
        %v2955 = vunpack.c.0.s8 %v2954
        %v2956 = vlaneseq
        %v2957 = vshrl.u32 %v2956, 7
        %v2958 = vsub.s32 %v2955, %v2957
        %v2959 = vrot.slane %v2951, %v2958
        %v2961 = vunpack.c.l.s4 1934713408
        %v2962 = vunpack.c.0.s8 %v2961
        %v2963 = vlaneseq
        %v2964 = vshrl.u32 %v2963, 7
        %v2965 = vsub.s32 %v2962, %v2964
        %v2966 = vrot.slane %v2952, %v2965
        %v2967 = vcombine.low %v2902, %v2918
        %v2968 = vcombine.high %v2902, %v2918
        %v2970 = vunpack.c.l.s4 1934713408
        %v2971 = vunpack.c.0.s8 %v2970
        %v2972 = vlaneseq
        %v2973 = vshrl.u32 %v2972, 7
        %v2974 = vsub.s32 %v2971, %v2973
        %v2975 = vrot.slane %v2967, %v2974
        %v2977 = vunpack.c.l.s4 1934713408
        %v2978 = vunpack.c.0.s8 %v2977
        %v2979 = vlaneseq
        %v2980 = vshrl.u32 %v2979, 7
        %v2981 = vsub.s32 %v2978, %v2980
        %v2982 = vrot.slane %v2968, %v2981
        %v2983 = vcombine.low %v2927, %v2959
        %v2984 = vcombine.high %v2927, %v2959
        %v2985 = vcombine.low %v2934, %v2966
        %v2986 = vcombine.high %v2934, %v2966
        %v2987 = vcombine.low %v2943, %v2975
        %v2988 = vcombine.high %v2943, %v2975
        %v2989 = vcombine.low %v2950, %v2982
        %v2990 = vcombine.high %v2950, %v2982
        %2992 = vrot.lane.b32.xlu0 %v2848, 16
        %v2993 = vpop.permute.xlu0 %2992
        %2996 = vrot.lane.b32.xlu0 %v2849, 32
        %v2997 = vpop.permute.xlu0 %2996
        %3000 = vrot.lane.b32.xlu0 %v2850, 48
        %v3001 = vpop.permute.xlu0 %3000
        %3004 = vrot.lane.b32.xlu0 %v2851, 64
        %v3005 = vpop.permute.xlu0 %3004
        %3008 = vrot.lane.b32.xlu0 %v2852, 80
        %v3009 = vpop.permute.xlu0 %3008
        %3012 = vrot.lane.b32.xlu0 %v2853, 96
        %v3013 = vpop.permute.xlu0 %3012
        %3016 = vrot.lane.b32.xlu0 %v2854, 112
        %v3017 = vpop.permute.xlu0 %3016
        %3020 = vrot.lane.b32.xlu0 %v2984, 16
        %v3021 = vpop.permute.xlu0 %3020
        %3024 = vrot.lane.b32.xlu0 %v2985, 32
        %v3025 = vpop.permute.xlu0 %3024
        %3028 = vrot.lane.b32.xlu0 %v2986, 48
        %v3029 = vpop.permute.xlu0 %3028
        %3032 = vrot.lane.b32.xlu0 %v2987, 64
        %v3033 = vpop.permute.xlu0 %3032
        %3036 = vrot.lane.b32.xlu0 %v2988, 80
        %v3037 = vpop.permute.xlu0 %3036
        %3040 = vrot.lane.b32.xlu0 %v2989, 96
        %v3041 = vpop.permute.xlu0 %3040
        %3044 = vrot.lane.b32.xlu0 %v2990, 112
        %v3045 = vpop.permute.xlu0 %3044
        %v3047 = vsel %vm624, %v2847, %v2993
        %v3048 = vsel %vm626, %v3047, %v2997
        %v3049 = vsel %vm628, %v3048, %v3001
        %v3050 = vsel %vm630, %v3049, %v3005
        %v3051 = vsel %vm632, %v3050, %v3009
        %v3052 = vsel %vm634, %v3051, %v3013
        %v3053 = vsel %vm636, %v3052, %v3017
        %v3054 = vsel %vm624, %v2983, %v3021
        %v3055 = vsel %vm626, %v3054, %v3025
        %v3056 = vsel %vm628, %v3055, %v3029
        %v3057 = vsel %vm630, %v3056, %v3033
        %v3058 = vsel %vm632, %v3057, %v3037
        %v3059 = vsel %vm634, %v3058, %v3041
        %v3060 = vsel %vm636, %v3059, %v3045
        %3061 = vst [vmem:[#allocation3 + $0x60] sm:$0xff] %v3053
        %3062 = vst [vmem:[#allocation3 + $0x68] sm:$0xff] %v3060
        %v3063 = vld [vmem:[#allocation2 + $0x2] sm:$0xff]
        %v3064 = vld [vmem:[#allocation2 + $0xa] sm:$0xff]
        %v3065 = vld [vmem:[#allocation2 + $0x1a] sm:$0xff]
        %v3066 = vld [vmem:[#allocation2 + $0x22] sm:$0xff]
        %v3067 = vld [vmem:[#allocation2 + $0x32] sm:$0xff]
        %v3068 = vld [vmem:[#allocation2 + $0x3a] sm:$0xff]
        %v3069 = vld [vmem:[#allocation2 + $0x4a] sm:$0xff]
        %v3070 = vld [vmem:[#allocation2 + $0x52] sm:$0xff]
        %v3071 = vld [vmem:[#allocation2 + $0x62] sm:$0xff]
        %v3072 = vld [vmem:[#allocation2 + $0x6a] sm:$0xff]
        %v3073 = vld [vmem:[#allocation2 + $0x7a] sm:$0xff]
        %v3074 = vld [vmem:[#allocation2 + $0x82] sm:$0xff]
        %v3075 = vld [vmem:[#allocation2 + $0x92] sm:$0xff]
        %v3076 = vld [vmem:[#allocation2 + $0x9a] sm:$0xff]
        %v3077 = vld [vmem:[#allocation2 + $0xaa] sm:$0xff]
        %v3078 = vld [vmem:[#allocation2 + $0xb2] sm:$0xff]
        %3095 = vrot.lane.b32.xlu0 %v3063, 127
        %v3096 = vpop.permute.xlu0 %3095
        %3097 = vrot.lane.b32.xlu0 %v3064, 127
        %v3098 = vpop.permute.xlu0 %3097
        %3099 = vrot.lane.b32.xlu0 %v3065, 127
        %v3100 = vpop.permute.xlu0 %3099
        %3101 = vrot.lane.b32.xlu0 %v3066, 127
        %v3102 = vpop.permute.xlu0 %3101
        %3103 = vrot.lane.b32.xlu0 %v3067, 127
        %v3104 = vpop.permute.xlu0 %3103
        %3105 = vrot.lane.b32.xlu0 %v3068, 127
        %v3106 = vpop.permute.xlu0 %3105
        %3107 = vrot.lane.b32.xlu0 %v3069, 127
        %v3108 = vpop.permute.xlu0 %3107
        %3109 = vrot.lane.b32.xlu0 %v3070, 127
        %v3110 = vpop.permute.xlu0 %3109
        %3111 = vrot.lane.b32.xlu0 %v3071, 127
        %v3112 = vpop.permute.xlu0 %3111
        %3113 = vrot.lane.b32.xlu0 %v3072, 127
        %v3114 = vpop.permute.xlu0 %3113
        %3115 = vrot.lane.b32.xlu0 %v3073, 127
        %v3116 = vpop.permute.xlu0 %3115
        %3117 = vrot.lane.b32.xlu0 %v3074, 127
        %v3118 = vpop.permute.xlu0 %3117
        %3119 = vrot.lane.b32.xlu0 %v3075, 127
        %v3120 = vpop.permute.xlu0 %3119
        %3121 = vrot.lane.b32.xlu0 %v3076, 127
        %v3122 = vpop.permute.xlu0 %3121
        %3123 = vrot.lane.b32.xlu0 %v3077, 127
        %v3124 = vpop.permute.xlu0 %3123
        %3125 = vrot.lane.b32.xlu0 %v3078, 127
        %v3126 = vpop.permute.xlu0 %3125
        %v3143 = vcombine.low %v3096, %v3104
        %v3144 = vcombine.high %v3096, %v3104
        %v3146 = vunpack.c.l.s4 1983009808
        %v3147 = vunpack.c.0.s8 %v3146
        %v3148 = vlaneseq
        %v3149 = vshrl.u32 %v3148, 7
        %v3150 = vsub.s32 %v3147, %v3149
        %v3151 = vrot.slane %v3143, %v3150
        %v3153 = vunpack.c.l.s4 1983009808
        %v3154 = vunpack.c.0.s8 %v3153
        %v3155 = vlaneseq
        %v3156 = vshrl.u32 %v3155, 7
        %v3157 = vsub.s32 %v3154, %v3156
        %v3158 = vrot.slane %v3144, %v3157
        %v3159 = vcombine.low %v3100, %v3108
        %v3160 = vcombine.high %v3100, %v3108
        %v3162 = vunpack.c.l.s4 1983009808
        %v3163 = vunpack.c.0.s8 %v3162
        %v3164 = vlaneseq
        %v3165 = vshrl.u32 %v3164, 7
        %v3166 = vsub.s32 %v3163, %v3165
        %v3167 = vrot.slane %v3159, %v3166
        %v3169 = vunpack.c.l.s4 1983009808
        %v3170 = vunpack.c.0.s8 %v3169
        %v3171 = vlaneseq
        %v3172 = vshrl.u32 %v3171, 7
        %v3173 = vsub.s32 %v3170, %v3172
        %v3174 = vrot.slane %v3160, %v3173
        %v3175 = vcombine.low %v3112, %v3120
        %v3176 = vcombine.high %v3112, %v3120
        %v3178 = vunpack.c.l.s4 1983009808
        %v3179 = vunpack.c.0.s8 %v3178
        %v3180 = vlaneseq
        %v3181 = vshrl.u32 %v3180, 7
        %v3182 = vsub.s32 %v3179, %v3181
        %v3183 = vrot.slane %v3175, %v3182
        %v3185 = vunpack.c.l.s4 1983009808
        %v3186 = vunpack.c.0.s8 %v3185
        %v3187 = vlaneseq
        %v3188 = vshrl.u32 %v3187, 7
        %v3189 = vsub.s32 %v3186, %v3188
        %v3190 = vrot.slane %v3176, %v3189
        %v3191 = vcombine.low %v3116, %v3124
        %v3192 = vcombine.high %v3116, %v3124
        %v3194 = vunpack.c.l.s4 1983009808
        %v3195 = vunpack.c.0.s8 %v3194
        %v3196 = vlaneseq
        %v3197 = vshrl.u32 %v3196, 7
        %v3198 = vsub.s32 %v3195, %v3197
        %v3199 = vrot.slane %v3191, %v3198
        %v3201 = vunpack.c.l.s4 1983009808
        %v3202 = vunpack.c.0.s8 %v3201
        %v3203 = vlaneseq
        %v3204 = vshrl.u32 %v3203, 7
        %v3205 = vsub.s32 %v3202, %v3204
        %v3206 = vrot.slane %v3192, %v3205
        %v3207 = vcombine.low %v3151, %v3167
        %v3208 = vcombine.high %v3151, %v3167
        %v3210 = vunpack.c.l.s4 1934713408
        %v3211 = vunpack.c.0.s8 %v3210
        %v3212 = vlaneseq
        %v3213 = vshrl.u32 %v3212, 7
        %v3214 = vsub.s32 %v3211, %v3213
        %v3215 = vrot.slane %v3207, %v3214
        %v3217 = vunpack.c.l.s4 1934713408
        %v3218 = vunpack.c.0.s8 %v3217
        %v3219 = vlaneseq
        %v3220 = vshrl.u32 %v3219, 7
        %v3221 = vsub.s32 %v3218, %v3220
        %v3222 = vrot.slane %v3208, %v3221
        %v3223 = vcombine.low %v3158, %v3174
        %v3224 = vcombine.high %v3158, %v3174
        %v3226 = vunpack.c.l.s4 1934713408
        %v3227 = vunpack.c.0.s8 %v3226
        %v3228 = vlaneseq
        %v3229 = vshrl.u32 %v3228, 7
        %v3230 = vsub.s32 %v3227, %v3229
        %v3231 = vrot.slane %v3223, %v3230
        %v3233 = vunpack.c.l.s4 1934713408
        %v3234 = vunpack.c.0.s8 %v3233
        %v3235 = vlaneseq
        %v3236 = vshrl.u32 %v3235, 7
        %v3237 = vsub.s32 %v3234, %v3236
        %v3238 = vrot.slane %v3224, %v3237
        %v3239 = vcombine.low %v3183, %v3199
        %v3240 = vcombine.high %v3183, %v3199
        %v3242 = vunpack.c.l.s4 1934713408
        %v3243 = vunpack.c.0.s8 %v3242
        %v3244 = vlaneseq
        %v3245 = vshrl.u32 %v3244, 7
        %v3246 = vsub.s32 %v3243, %v3245
        %v3247 = vrot.slane %v3239, %v3246
        %v3249 = vunpack.c.l.s4 1934713408
        %v3250 = vunpack.c.0.s8 %v3249
        %v3251 = vlaneseq
        %v3252 = vshrl.u32 %v3251, 7
        %v3253 = vsub.s32 %v3250, %v3252
        %v3254 = vrot.slane %v3240, %v3253
        %v3255 = vcombine.low %v3190, %v3206
        %v3256 = vcombine.high %v3190, %v3206
        %v3258 = vunpack.c.l.s4 1934713408
        %v3259 = vunpack.c.0.s8 %v3258
        %v3260 = vlaneseq
        %v3261 = vshrl.u32 %v3260, 7
        %v3262 = vsub.s32 %v3259, %v3261
        %v3263 = vrot.slane %v3255, %v3262
        %v3265 = vunpack.c.l.s4 1934713408
        %v3266 = vunpack.c.0.s8 %v3265
        %v3267 = vlaneseq
        %v3268 = vshrl.u32 %v3267, 7
        %v3269 = vsub.s32 %v3266, %v3268
        %v3270 = vrot.slane %v3256, %v3269
        %v3271 = vcombine.low %v3215, %v3247
        %v3272 = vcombine.high %v3215, %v3247
        %v3273 = vcombine.low %v3222, %v3254
        %v3274 = vcombine.high %v3222, %v3254
        %v3275 = vcombine.low %v3231, %v3263
        %v3276 = vcombine.high %v3231, %v3263
        %v3277 = vcombine.low %v3238, %v3270
        %v3278 = vcombine.high %v3238, %v3270
        %v3279 = vcombine.low %v3098, %v3106
        %v3280 = vcombine.high %v3098, %v3106
        %v3282 = vunpack.c.l.s4 1983009808
        %v3283 = vunpack.c.0.s8 %v3282
        %v3284 = vlaneseq
        %v3285 = vshrl.u32 %v3284, 7
        %v3286 = vsub.s32 %v3283, %v3285
        %v3287 = vrot.slane %v3279, %v3286
        %v3289 = vunpack.c.l.s4 1983009808
        %v3290 = vunpack.c.0.s8 %v3289
        %v3291 = vlaneseq
        %v3292 = vshrl.u32 %v3291, 7
        %v3293 = vsub.s32 %v3290, %v3292
        %v3294 = vrot.slane %v3280, %v3293
        %v3295 = vcombine.low %v3102, %v3110
        %v3296 = vcombine.high %v3102, %v3110
        %v3298 = vunpack.c.l.s4 1983009808
        %v3299 = vunpack.c.0.s8 %v3298
        %v3300 = vlaneseq
        %v3301 = vshrl.u32 %v3300, 7
        %v3302 = vsub.s32 %v3299, %v3301
        %v3303 = vrot.slane %v3295, %v3302
        %v3305 = vunpack.c.l.s4 1983009808
        %v3306 = vunpack.c.0.s8 %v3305
        %v3307 = vlaneseq
        %v3308 = vshrl.u32 %v3307, 7
        %v3309 = vsub.s32 %v3306, %v3308
        %v3310 = vrot.slane %v3296, %v3309
        %v3311 = vcombine.low %v3114, %v3122
        %v3312 = vcombine.high %v3114, %v3122
        %v3314 = vunpack.c.l.s4 1983009808
        %v3315 = vunpack.c.0.s8 %v3314
        %v3316 = vlaneseq
        %v3317 = vshrl.u32 %v3316, 7
        %v3318 = vsub.s32 %v3315, %v3317
        %v3319 = vrot.slane %v3311, %v3318
        %v3321 = vunpack.c.l.s4 1983009808
        %v3322 = vunpack.c.0.s8 %v3321
        %v3323 = vlaneseq
        %v3324 = vshrl.u32 %v3323, 7
        %v3325 = vsub.s32 %v3322, %v3324
        %v3326 = vrot.slane %v3312, %v3325
        %v3327 = vcombine.low %v3118, %v3126
        %v3328 = vcombine.high %v3118, %v3126
        %v3330 = vunpack.c.l.s4 1983009808
        %v3331 = vunpack.c.0.s8 %v3330
        %v3332 = vlaneseq
        %v3333 = vshrl.u32 %v3332, 7
        %v3334 = vsub.s32 %v3331, %v3333
        %v3335 = vrot.slane %v3327, %v3334
        %v3337 = vunpack.c.l.s4 1983009808
        %v3338 = vunpack.c.0.s8 %v3337
        %v3339 = vlaneseq
        %v3340 = vshrl.u32 %v3339, 7
        %v3341 = vsub.s32 %v3338, %v3340
        %v3342 = vrot.slane %v3328, %v3341
        %v3343 = vcombine.low %v3287, %v3303
        %v3344 = vcombine.high %v3287, %v3303
        %v3346 = vunpack.c.l.s4 1934713408
        %v3347 = vunpack.c.0.s8 %v3346
        %v3348 = vlaneseq
        %v3349 = vshrl.u32 %v3348, 7
        %v3350 = vsub.s32 %v3347, %v3349
        %v3351 = vrot.slane %v3343, %v3350
        %v3353 = vunpack.c.l.s4 1934713408
        %v3354 = vunpack.c.0.s8 %v3353
        %v3355 = vlaneseq
        %v3356 = vshrl.u32 %v3355, 7
        %v3357 = vsub.s32 %v3354, %v3356
        %v3358 = vrot.slane %v3344, %v3357
        %v3359 = vcombine.low %v3294, %v3310
        %v3360 = vcombine.high %v3294, %v3310
        %v3362 = vunpack.c.l.s4 1934713408
        %v3363 = vunpack.c.0.s8 %v3362
        %v3364 = vlaneseq
        %v3365 = vshrl.u32 %v3364, 7
        %v3366 = vsub.s32 %v3363, %v3365
        %v3367 = vrot.slane %v3359, %v3366
        %v3369 = vunpack.c.l.s4 1934713408
        %v3370 = vunpack.c.0.s8 %v3369
        %v3371 = vlaneseq
        %v3372 = vshrl.u32 %v3371, 7
        %v3373 = vsub.s32 %v3370, %v3372
        %v3374 = vrot.slane %v3360, %v3373
        %v3375 = vcombine.low %v3319, %v3335
        %v3376 = vcombine.high %v3319, %v3335
        %v3378 = vunpack.c.l.s4 1934713408
        %v3379 = vunpack.c.0.s8 %v3378
        %v3380 = vlaneseq
        %v3381 = vshrl.u32 %v3380, 7
        %v3382 = vsub.s32 %v3379, %v3381
        %v3383 = vrot.slane %v3375, %v3382
        %v3385 = vunpack.c.l.s4 1934713408
        %v3386 = vunpack.c.0.s8 %v3385
        %v3387 = vlaneseq
        %v3388 = vshrl.u32 %v3387, 7
        %v3389 = vsub.s32 %v3386, %v3388
        %v3390 = vrot.slane %v3376, %v3389
        %v3391 = vcombine.low %v3326, %v3342
        %v3392 = vcombine.high %v3326, %v3342
        %v3394 = vunpack.c.l.s4 1934713408
        %v3395 = vunpack.c.0.s8 %v3394
        %v3396 = vlaneseq
        %v3397 = vshrl.u32 %v3396, 7
        %v3398 = vsub.s32 %v3395, %v3397
        %v3399 = vrot.slane %v3391, %v3398
        %v3401 = vunpack.c.l.s4 1934713408
        %v3402 = vunpack.c.0.s8 %v3401
        %v3403 = vlaneseq
        %v3404 = vshrl.u32 %v3403, 7
        %v3405 = vsub.s32 %v3402, %v3404
        %v3406 = vrot.slane %v3392, %v3405
        %v3407 = vcombine.low %v3351, %v3383
        %v3408 = vcombine.high %v3351, %v3383
        %v3409 = vcombine.low %v3358, %v3390
        %v3410 = vcombine.high %v3358, %v3390
        %v3411 = vcombine.low %v3367, %v3399
        %v3412 = vcombine.high %v3367, %v3399
        %v3413 = vcombine.low %v3374, %v3406
        %v3414 = vcombine.high %v3374, %v3406
        %3416 = vrot.lane.b32.xlu0 %v3272, 16
        %v3417 = vpop.permute.xlu0 %3416
        %3420 = vrot.lane.b32.xlu0 %v3273, 32
        %v3421 = vpop.permute.xlu0 %3420
        %3424 = vrot.lane.b32.xlu0 %v3274, 48
        %v3425 = vpop.permute.xlu0 %3424
        %3428 = vrot.lane.b32.xlu0 %v3275, 64
        %v3429 = vpop.permute.xlu0 %3428
        %3432 = vrot.lane.b32.xlu0 %v3276, 80
        %v3433 = vpop.permute.xlu0 %3432
        %3436 = vrot.lane.b32.xlu0 %v3277, 96
        %v3437 = vpop.permute.xlu0 %3436
        %3440 = vrot.lane.b32.xlu0 %v3278, 112
        %v3441 = vpop.permute.xlu0 %3440
        %3444 = vrot.lane.b32.xlu0 %v3408, 16
        %v3445 = vpop.permute.xlu0 %3444
        %3448 = vrot.lane.b32.xlu0 %v3409, 32
        %v3449 = vpop.permute.xlu0 %3448
        %3452 = vrot.lane.b32.xlu0 %v3410, 48
        %v3453 = vpop.permute.xlu0 %3452
        %3456 = vrot.lane.b32.xlu0 %v3411, 64
        %v3457 = vpop.permute.xlu0 %3456
        %3460 = vrot.lane.b32.xlu0 %v3412, 80
        %v3461 = vpop.permute.xlu0 %3460
        %3464 = vrot.lane.b32.xlu0 %v3413, 96
        %v3465 = vpop.permute.xlu0 %3464
        %3468 = vrot.lane.b32.xlu0 %v3414, 112
        %v3469 = vpop.permute.xlu0 %3468
        %v3471 = vsel %vm624, %v3271, %v3417
        %v3472 = vsel %vm626, %v3471, %v3421
        %v3473 = vsel %vm628, %v3472, %v3425
        %v3474 = vsel %vm630, %v3473, %v3429
        %v3475 = vsel %vm632, %v3474, %v3433
        %v3476 = vsel %vm634, %v3475, %v3437
        %v3477 = vsel %vm636, %v3476, %v3441
        %v3478 = vsel %vm624, %v3407, %v3445
        %v3479 = vsel %vm626, %v3478, %v3449
        %v3480 = vsel %vm628, %v3479, %v3453
        %v3481 = vsel %vm630, %v3480, %v3457
        %v3482 = vsel %vm632, %v3481, %v3461
        %v3483 = vsel %vm634, %v3482, %v3465
        %v3484 = vsel %vm636, %v3483, %v3469
        %3485 = vst [vmem:[#allocation3 + $0x70] sm:$0xff] %v3477
        %3486 = vst [vmem:[#allocation3 + $0x78] sm:$0xff] %v3484
        %v3487 = vld [vmem:[#allocation2 + $0x2] sm:$0xff]
        %v3488 = vld [vmem:[#allocation2 + $0xa] sm:$0xff]
        %v3489 = vld [vmem:[#allocation2 + $0x1a] sm:$0xff]
        %v3490 = vld [vmem:[#allocation2 + $0x22] sm:$0xff]
        %v3491 = vld [vmem:[#allocation2 + $0x32] sm:$0xff]
        %v3492 = vld [vmem:[#allocation2 + $0x3a] sm:$0xff]
        %v3493 = vld [vmem:[#allocation2 + $0x4a] sm:$0xff]
        %v3494 = vld [vmem:[#allocation2 + $0x52] sm:$0xff]
        %v3495 = vld [vmem:[#allocation2 + $0x62] sm:$0xff]
        %v3496 = vld [vmem:[#allocation2 + $0x6a] sm:$0xff]
        %v3497 = vld [vmem:[#allocation2 + $0x7a] sm:$0xff]
        %v3498 = vld [vmem:[#allocation2 + $0x82] sm:$0xff]
        %v3499 = vld [vmem:[#allocation2 + $0x92] sm:$0xff]
        %v3500 = vld [vmem:[#allocation2 + $0x9a] sm:$0xff]
        %v3501 = vld [vmem:[#allocation2 + $0xaa] sm:$0xff]
        %v3502 = vld [vmem:[#allocation2 + $0xb2] sm:$0xff]
        %3519 = vrot.lane.b32.xlu0 %v3487, 126
        %v3520 = vpop.permute.xlu0 %3519
        %3521 = vrot.lane.b32.xlu0 %v3488, 126
        %v3522 = vpop.permute.xlu0 %3521
        %3523 = vrot.lane.b32.xlu0 %v3489, 126
        %v3524 = vpop.permute.xlu0 %3523
        %3525 = vrot.lane.b32.xlu0 %v3490, 126
        %v3526 = vpop.permute.xlu0 %3525
        %3527 = vrot.lane.b32.xlu0 %v3491, 126
        %v3528 = vpop.permute.xlu0 %3527
        %3529 = vrot.lane.b32.xlu0 %v3492, 126
        %v3530 = vpop.permute.xlu0 %3529
        %3531 = vrot.lane.b32.xlu0 %v3493, 126
        %v3532 = vpop.permute.xlu0 %3531
        %3533 = vrot.lane.b32.xlu0 %v3494, 126
        %v3534 = vpop.permute.xlu0 %3533
        %3535 = vrot.lane.b32.xlu0 %v3495, 126
        %v3536 = vpop.permute.xlu0 %3535
        %3537 = vrot.lane.b32.xlu0 %v3496, 126
        %v3538 = vpop.permute.xlu0 %3537
        %3539 = vrot.lane.b32.xlu0 %v3497, 126
        %v3540 = vpop.permute.xlu0 %3539
        %3541 = vrot.lane.b32.xlu0 %v3498, 126
        %v3542 = vpop.permute.xlu0 %3541
        %3543 = vrot.lane.b32.xlu0 %v3499, 126
        %v3544 = vpop.permute.xlu0 %3543
        %3545 = vrot.lane.b32.xlu0 %v3500, 126
        %v3546 = vpop.permute.xlu0 %3545
        %3547 = vrot.lane.b32.xlu0 %v3501, 126
        %v3548 = vpop.permute.xlu0 %3547
        %3549 = vrot.lane.b32.xlu0 %v3502, 126
        %v3550 = vpop.permute.xlu0 %3549
        %v3567 = vcombine.low %v3520, %v3528
        %v3568 = vcombine.high %v3520, %v3528
        %v3570 = vunpack.c.l.s4 1983009808
        %v3571 = vunpack.c.0.s8 %v3570
        %v3572 = vlaneseq
        %v3573 = vshrl.u32 %v3572, 7
        %v3574 = vsub.s32 %v3571, %v3573
        %v3575 = vrot.slane %v3567, %v3574
        %v3577 = vunpack.c.l.s4 1983009808
        %v3578 = vunpack.c.0.s8 %v3577
        %v3579 = vlaneseq
        %v3580 = vshrl.u32 %v3579, 7
        %v3581 = vsub.s32 %v3578, %v3580
        %v3582 = vrot.slane %v3568, %v3581
        %v3583 = vcombine.low %v3524, %v3532
        %v3584 = vcombine.high %v3524, %v3532
        %v3586 = vunpack.c.l.s4 1983009808
        %v3587 = vunpack.c.0.s8 %v3586
        %v3588 = vlaneseq
        %v3589 = vshrl.u32 %v3588, 7
        %v3590 = vsub.s32 %v3587, %v3589
        %v3591 = vrot.slane %v3583, %v3590
        %v3593 = vunpack.c.l.s4 1983009808
        %v3594 = vunpack.c.0.s8 %v3593
        %v3595 = vlaneseq
        %v3596 = vshrl.u32 %v3595, 7
        %v3597 = vsub.s32 %v3594, %v3596
        %v3598 = vrot.slane %v3584, %v3597
        %v3599 = vcombine.low %v3536, %v3544
        %v3600 = vcombine.high %v3536, %v3544
        %v3602 = vunpack.c.l.s4 1983009808
        %v3603 = vunpack.c.0.s8 %v3602
        %v3604 = vlaneseq
        %v3605 = vshrl.u32 %v3604, 7
        %v3606 = vsub.s32 %v3603, %v3605
        %v3607 = vrot.slane %v3599, %v3606
        %v3609 = vunpack.c.l.s4 1983009808
        %v3610 = vunpack.c.0.s8 %v3609
        %v3611 = vlaneseq
        %v3612 = vshrl.u32 %v3611, 7
        %v3613 = vsub.s32 %v3610, %v3612
        %v3614 = vrot.slane %v3600, %v3613
        %v3615 = vcombine.low %v3540, %v3548
        %v3616 = vcombine.high %v3540, %v3548
        %v3618 = vunpack.c.l.s4 1983009808
        %v3619 = vunpack.c.0.s8 %v3618
        %v3620 = vlaneseq
        %v3621 = vshrl.u32 %v3620, 7
        %v3622 = vsub.s32 %v3619, %v3621
        %v3623 = vrot.slane %v3615, %v3622
        %v3625 = vunpack.c.l.s4 1983009808
        %v3626 = vunpack.c.0.s8 %v3625
        %v3627 = vlaneseq
        %v3628 = vshrl.u32 %v3627, 7
        %v3629 = vsub.s32 %v3626, %v3628
        %v3630 = vrot.slane %v3616, %v3629
        %v3631 = vcombine.low %v3575, %v3591
        %v3632 = vcombine.high %v3575, %v3591
        %v3634 = vunpack.c.l.s4 1934713408
        %v3635 = vunpack.c.0.s8 %v3634
        %v3636 = vlaneseq
        %v3637 = vshrl.u32 %v3636, 7
        %v3638 = vsub.s32 %v3635, %v3637
        %v3639 = vrot.slane %v3631, %v3638
        %v3641 = vunpack.c.l.s4 1934713408
        %v3642 = vunpack.c.0.s8 %v3641
        %v3643 = vlaneseq
        %v3644 = vshrl.u32 %v3643, 7
        %v3645 = vsub.s32 %v3642, %v3644
        %v3646 = vrot.slane %v3632, %v3645
        %v3647 = vcombine.low %v3582, %v3598
        %v3648 = vcombine.high %v3582, %v3598
        %v3650 = vunpack.c.l.s4 1934713408
        %v3651 = vunpack.c.0.s8 %v3650
        %v3652 = vlaneseq
        %v3653 = vshrl.u32 %v3652, 7
        %v3654 = vsub.s32 %v3651, %v3653
        %v3655 = vrot.slane %v3647, %v3654
        %v3657 = vunpack.c.l.s4 1934713408
        %v3658 = vunpack.c.0.s8 %v3657
        %v3659 = vlaneseq
        %v3660 = vshrl.u32 %v3659, 7
        %v3661 = vsub.s32 %v3658, %v3660
        %v3662 = vrot.slane %v3648, %v3661
        %v3663 = vcombine.low %v3607, %v3623
        %v3664 = vcombine.high %v3607, %v3623
        %v3666 = vunpack.c.l.s4 1934713408
        %v3667 = vunpack.c.0.s8 %v3666
        %v3668 = vlaneseq
        %v3669 = vshrl.u32 %v3668, 7
        %v3670 = vsub.s32 %v3667, %v3669
        %v3671 = vrot.slane %v3663, %v3670
        %v3673 = vunpack.c.l.s4 1934713408
        %v3674 = vunpack.c.0.s8 %v3673
        %v3675 = vlaneseq
        %v3676 = vshrl.u32 %v3675, 7
        %v3677 = vsub.s32 %v3674, %v3676
        %v3678 = vrot.slane %v3664, %v3677
        %v3679 = vcombine.low %v3614, %v3630
        %v3680 = vcombine.high %v3614, %v3630
        %v3682 = vunpack.c.l.s4 1934713408
        %v3683 = vunpack.c.0.s8 %v3682
        %v3684 = vlaneseq
        %v3685 = vshrl.u32 %v3684, 7
        %v3686 = vsub.s32 %v3683, %v3685
        %v3687 = vrot.slane %v3679, %v3686
        %v3689 = vunpack.c.l.s4 1934713408
        %v3690 = vunpack.c.0.s8 %v3689
        %v3691 = vlaneseq
        %v3692 = vshrl.u32 %v3691, 7
        %v3693 = vsub.s32 %v3690, %v3692
        %v3694 = vrot.slane %v3680, %v3693
        %v3695 = vcombine.low %v3639, %v3671
        %v3696 = vcombine.high %v3639, %v3671
        %v3697 = vcombine.low %v3646, %v3678
        %v3698 = vcombine.high %v3646, %v3678
        %v3699 = vcombine.low %v3655, %v3687
        %v3700 = vcombine.high %v3655, %v3687
        %v3701 = vcombine.low %v3662, %v3694
        %v3702 = vcombine.high %v3662, %v3694
        %v3703 = vcombine.low %v3522, %v3530
        %v3704 = vcombine.high %v3522, %v3530
        %v3706 = vunpack.c.l.s4 1983009808
        %v3707 = vunpack.c.0.s8 %v3706
        %v3708 = vlaneseq
        %v3709 = vshrl.u32 %v3708, 7
        %v3710 = vsub.s32 %v3707, %v3709
        %v3711 = vrot.slane %v3703, %v3710
        %v3713 = vunpack.c.l.s4 1983009808
        %v3714 = vunpack.c.0.s8 %v3713
        %v3715 = vlaneseq
        %v3716 = vshrl.u32 %v3715, 7
        %v3717 = vsub.s32 %v3714, %v3716
        %v3718 = vrot.slane %v3704, %v3717
        %v3719 = vcombine.low %v3526, %v3534
        %v3720 = vcombine.high %v3526, %v3534
        %v3722 = vunpack.c.l.s4 1983009808
        %v3723 = vunpack.c.0.s8 %v3722
        %v3724 = vlaneseq
        %v3725 = vshrl.u32 %v3724, 7
        %v3726 = vsub.s32 %v3723, %v3725
        %v3727 = vrot.slane %v3719, %v3726
        %v3729 = vunpack.c.l.s4 1983009808
        %v3730 = vunpack.c.0.s8 %v3729
        %v3731 = vlaneseq
        %v3732 = vshrl.u32 %v3731, 7
        %v3733 = vsub.s32 %v3730, %v3732
        %v3734 = vrot.slane %v3720, %v3733
        %v3735 = vcombine.low %v3538, %v3546
        %v3736 = vcombine.high %v3538, %v3546
        %v3738 = vunpack.c.l.s4 1983009808
        %v3739 = vunpack.c.0.s8 %v3738
        %v3740 = vlaneseq
        %v3741 = vshrl.u32 %v3740, 7
        %v3742 = vsub.s32 %v3739, %v3741
        %v3743 = vrot.slane %v3735, %v3742
        %v3745 = vunpack.c.l.s4 1983009808
        %v3746 = vunpack.c.0.s8 %v3745
        %v3747 = vlaneseq
        %v3748 = vshrl.u32 %v3747, 7
        %v3749 = vsub.s32 %v3746, %v3748
        %v3750 = vrot.slane %v3736, %v3749
        %v3751 = vcombine.low %v3542, %v3550
        %v3752 = vcombine.high %v3542, %v3550
        %v3754 = vunpack.c.l.s4 1983009808
        %v3755 = vunpack.c.0.s8 %v3754
        %v3756 = vlaneseq
        %v3757 = vshrl.u32 %v3756, 7
        %v3758 = vsub.s32 %v3755, %v3757
        %v3759 = vrot.slane %v3751, %v3758
        %v3761 = vunpack.c.l.s4 1983009808
        %v3762 = vunpack.c.0.s8 %v3761
        %v3763 = vlaneseq
        %v3764 = vshrl.u32 %v3763, 7
        %v3765 = vsub.s32 %v3762, %v3764
        %v3766 = vrot.slane %v3752, %v3765
        %v3767 = vcombine.low %v3711, %v3727
        %v3768 = vcombine.high %v3711, %v3727
        %v3770 = vunpack.c.l.s4 1934713408
        %v3771 = vunpack.c.0.s8 %v3770
        %v3772 = vlaneseq
        %v3773 = vshrl.u32 %v3772, 7
        %v3774 = vsub.s32 %v3771, %v3773
        %v3775 = vrot.slane %v3767, %v3774
        %v3777 = vunpack.c.l.s4 1934713408
        %v3778 = vunpack.c.0.s8 %v3777
        %v3779 = vlaneseq
        %v3780 = vshrl.u32 %v3779, 7
        %v3781 = vsub.s32 %v3778, %v3780
        %v3782 = vrot.slane %v3768, %v3781
        %v3783 = vcombine.low %v3718, %v3734
        %v3784 = vcombine.high %v3718, %v3734
        %v3786 = vunpack.c.l.s4 1934713408
        %v3787 = vunpack.c.0.s8 %v3786
        %v3788 = vlaneseq
        %v3789 = vshrl.u32 %v3788, 7
        %v3790 = vsub.s32 %v3787, %v3789
        %v3791 = vrot.slane %v3783, %v3790
        %v3793 = vunpack.c.l.s4 1934713408
        %v3794 = vunpack.c.0.s8 %v3793
        %v3795 = vlaneseq
        %v3796 = vshrl.u32 %v3795, 7
        %v3797 = vsub.s32 %v3794, %v3796
        %v3798 = vrot.slane %v3784, %v3797
        %v3799 = vcombine.low %v3743, %v3759
        %v3800 = vcombine.high %v3743, %v3759
        %v3802 = vunpack.c.l.s4 1934713408
        %v3803 = vunpack.c.0.s8 %v3802
        %v3804 = vlaneseq
        %v3805 = vshrl.u32 %v3804, 7
        %v3806 = vsub.s32 %v3803, %v3805
        %v3807 = vrot.slane %v3799, %v3806
        %v3809 = vunpack.c.l.s4 1934713408
        %v3810 = vunpack.c.0.s8 %v3809
        %v3811 = vlaneseq
        %v3812 = vshrl.u32 %v3811, 7
        %v3813 = vsub.s32 %v3810, %v3812
        %v3814 = vrot.slane %v3800, %v3813
        %v3815 = vcombine.low %v3750, %v3766
        %v3816 = vcombine.high %v3750, %v3766
        %v3818 = vunpack.c.l.s4 1934713408
        %v3819 = vunpack.c.0.s8 %v3818
        %v3820 = vlaneseq
        %v3821 = vshrl.u32 %v3820, 7
        %v3822 = vsub.s32 %v3819, %v3821
        %v3823 = vrot.slane %v3815, %v3822
        %v3825 = vunpack.c.l.s4 1934713408
        %v3826 = vunpack.c.0.s8 %v3825
        %v3827 = vlaneseq
        %v3828 = vshrl.u32 %v3827, 7
        %v3829 = vsub.s32 %v3826, %v3828
        %v3830 = vrot.slane %v3816, %v3829
        %v3831 = vcombine.low %v3775, %v3807
        %v3832 = vcombine.high %v3775, %v3807
        %v3833 = vcombine.low %v3782, %v3814
        %v3834 = vcombine.high %v3782, %v3814
        %v3835 = vcombine.low %v3791, %v3823
        %v3836 = vcombine.high %v3791, %v3823
        %v3837 = vcombine.low %v3798, %v3830
        %v3838 = vcombine.high %v3798, %v3830
        %3840 = vrot.lane.b32.xlu0 %v3696, 16
        %v3841 = vpop.permute.xlu0 %3840
        %3844 = vrot.lane.b32.xlu0 %v3697, 32
        %v3845 = vpop.permute.xlu0 %3844
        %3848 = vrot.lane.b32.xlu0 %v3698, 48
        %v3849 = vpop.permute.xlu0 %3848
        %3852 = vrot.lane.b32.xlu0 %v3699, 64
        %v3853 = vpop.permute.xlu0 %3852
        %3856 = vrot.lane.b32.xlu0 %v3700, 80
        %v3857 = vpop.permute.xlu0 %3856
        %3860 = vrot.lane.b32.xlu0 %v3701, 96
        %v3861 = vpop.permute.xlu0 %3860
        %3864 = vrot.lane.b32.xlu0 %v3702, 112
        %v3865 = vpop.permute.xlu0 %3864
        %3868 = vrot.lane.b32.xlu0 %v3832, 16
        %v3869 = vpop.permute.xlu0 %3868
        %3872 = vrot.lane.b32.xlu0 %v3833, 32
        %v3873 = vpop.permute.xlu0 %3872
        %3876 = vrot.lane.b32.xlu0 %v3834, 48
        %v3877 = vpop.permute.xlu0 %3876
        %3880 = vrot.lane.b32.xlu0 %v3835, 64
        %v3881 = vpop.permute.xlu0 %3880
        %3884 = vrot.lane.b32.xlu0 %v3836, 80
        %v3885 = vpop.permute.xlu0 %3884
        %3888 = vrot.lane.b32.xlu0 %v3837, 96
        %v3889 = vpop.permute.xlu0 %3888
        %3892 = vrot.lane.b32.xlu0 %v3838, 112
        %v3893 = vpop.permute.xlu0 %3892
        %v3895 = vsel %vm624, %v3695, %v3841
        %v3896 = vsel %vm626, %v3895, %v3845
        %v3897 = vsel %vm628, %v3896, %v3849
        %v3898 = vsel %vm630, %v3897, %v3853
        %v3899 = vsel %vm632, %v3898, %v3857
        %v3900 = vsel %vm634, %v3899, %v3861
        %v3901 = vsel %vm636, %v3900, %v3865
        %v3902 = vsel %vm624, %v3831, %v3869
        %v3903 = vsel %vm626, %v3902, %v3873
        %v3904 = vsel %vm628, %v3903, %v3877
        %v3905 = vsel %vm630, %v3904, %v3881
        %v3906 = vsel %vm632, %v3905, %v3885
        %v3907 = vsel %vm634, %v3906, %v3889
        %v3908 = vsel %vm636, %v3907, %v3893
        %3909 = vst [vmem:[#allocation3 + $0x80] sm:$0xff] %v3901
        %3910 = vst [vmem:[#allocation3 + $0x88] sm:$0xff] %v3908
        %v3911 = vld [vmem:[%s1] sm:$0xff]
        %v3912 = vld [vmem:[#allocation3] sm:$0xff]
        %v3913 = vld [vmem:[#allocation3 + $0x8] sm:$0xff]
        %v3914 = vld [vmem:[#allocation3 + $0x10] sm:$0xff]
        %v3915 = vld [vmem:[#allocation3 + $0x18] sm:$0xff]
        %v3916 = vld [vmem:[#allocation3 + $0x20] sm:$0xff]
        %v3917 = vld [vmem:[#allocation3 + $0x28] sm:$0xff]
        %v3918 = vld [vmem:[#allocation3 + $0x30] sm:$0xff]
        %v3919 = vld [vmem:[#allocation3 + $0x38] sm:$0xff]
        %v3920 = vld [vmem:[#allocation3 + $0x40] sm:$0xff]
        %v3921 = vld [vmem:[#allocation3 + $0x48] sm:$0xff]
        %v3922 = vld [vmem:[#allocation3 + $0x50] sm:$0xff]
        %v3923 = vld [vmem:[#allocation3 + $0x58] sm:$0xff]
        %v3924 = vld [vmem:[#allocation3 + $0x60] sm:$0xff]
        %v3925 = vld [vmem:[#allocation3 + $0x68] sm:$0xff]
        %v3926 = vld [vmem:[#allocation3 + $0x70] sm:$0xff]
        %v3927 = vld [vmem:[#allocation3 + $0x78] sm:$0xff]
        %v3928 = vld [vmem:[#allocation3 + $0x80] sm:$0xff]
        %v3929 = vld [vmem:[#allocation3 + $0x88] sm:$0xff]
        %v3930 = vld [vmem:[%s2] sm:$0xff]
        %3932 = vset.pattern.permute.xlu0 0
        %3933 = vperm.xlu0 %3932, %v3930
        %v3934 = vpop.permute.xlu0 %3933
        %vm3936 = vcmask 588800
        %v3938 = vsel %vm3936, %v3911, 0
        %3940 = vmatprep.subr.mxu0 %v3913
        %3941 = vmatpush1.msra.mxu0 %v3912
        %3942 = vmatprep.subr.mxu0 %v3915
        %3943 = vmatpush1.msra.mxu0 %v3914
        %3944 = vmatprep.subr.mxu0 %v3917
        %3945 = vmatpush1.msra.mxu0 %v3916
        %3946 = vmatprep.subr.mxu0 %v3919
        %3947 = vmatpush1.msra.mxu0 %v3918
        %3948 = vmatprep.subr.mxu0 %v3921
        %3949 = vmatpush1.msra.mxu0 %v3920
        %3950 = vmatprep.subr.mxu0 %v3923
        %3951 = vmatpush1.msra.mxu0 %v3922
        %3952 = vmatprep.subr.mxu0 %v3925
        %3953 = vmatpush1.msra.mxu0 %v3924
        %3954 = vmatprep.subr.mxu0 %v3927
        %3955 = vmatpush1.msra.mxu0 %v3926
        %3956 = vmatprep.subr.mxu0 %v3929
        %3957 = vmatpush1.msra.mxu0 %v3928
        %3958 = vmatprep.subr.mxu0 0.0
        %3959 = vmatpush1.msra.mxu0 0.0
        %3960 = vmatprep.subr.mxu0 0.0
        %3961 = vmatpush1.msra.mxu0 0.0
        %3962 = vmatprep.subr.mxu0 0.0
        %3963 = vmatpush1.msra.mxu0 0.0
        %3964 = vmatprep.subr.mxu0 0.0
        %3965 = vmatpush1.msra.mxu0 0.0
        %3966 = vmatprep.subr.mxu0 0.0
        %3967 = vmatpush1.msra.mxu0 0.0
        %3968 = vmatprep.subr.mxu0 0.0
        %3969 = vmatpush1.msra.mxu0 0.0
        %3970 = vmatprep.subr.mxu0 0.0
        %3971 = vmatpush1.msra.mxu0 0.0
        %3972 = vmatprep.subr.mxu0 0.0
        %3973 = vmatpush1.msra.mxu0 0.0
        %3974 = vmatprep.subr.mxu0 0.0
        %3975 = vmatpush1.msra.mxu0 0.0
        %3976 = vmatprep.subr.mxu0 0.0
        %3977 = vmatpush1.msra.mxu0 0.0
        %3978 = vmatprep.subr.mxu0 0.0
        %3979 = vmatpush1.msra.mxu0 0.0
        %3980 = vmatprep.subr.mxu0 0.0
        %3981 = vmatpush1.msra.mxu0 0.0
        %3982 = vmatprep.subr.mxu0 0.0
        %3983 = vmatpush1.msra.mxu0 0.0
        %3984 = vmatprep.subr.mxu0 0.0
        %3985 = vmatpush1.msra.mxu0 0.0
        %3986 = vmatprep.subr.mxu0 0.0
        %3987 = vmatpush1.msra.mxu0 0.0
        %3988 = vmatprep.subr.mxu0 0.0
        %3989 = vmatpush1.msra.mxu0 0.0
        %3990 = vmatprep.subr.mxu0 0.0
        %3991 = vmatpush1.msra.mxu0 0.0
        %3992 = vmatprep.subr.mxu0 0.0
        %3993 = vmatpush1.msra.mxu0 0.0
        %3994 = vmatprep.subr.mxu0 0.0
        %3995 = vmatpush1.msra.mxu0 0.0
        %3996 = vmatprep.subr.mxu0 0.0
        %3997 = vmatpush1.msra.mxu0 0.0
        %3998 = vmatprep.subr.mxu0 0.0
        %3999 = vmatpush1.msra.mxu0 0.0
        %4000 = vmatprep.subr.mxu0 0.0
        %4001 = vmatpush1.msra.mxu0 0.0
        %4002 = vmatprep.subr.mxu0 0.0
        %4003 = vmatpush1.msra.mxu0 0.0
        %4004 = vmatprep.mubr.f32.mxu0 0.0
        %4005 = vmatmul.mubr.f32.gmra.mrb[0].mxu0 %v3938
        %v4006 = vpop.f32.mrb[0].mxu0
        %v4007 = vadd.f32 %v3934, %v4006
        %v4008 = vpop.f32.mrb[0].mxu0
        %v4009 = vadd.f32 %v3934, %v4008
        %4010 = vdwg.mxu0
        %4011 = vst [vmem:[%s188] sm:$0xff] %v4007
        %4012 = vst [vmem:[%s188 + $0x8] sm:$0xff] %v4009
        %s4013 = sand.u32 %s96, 1
        %s4014 = scalar_lea.sflag [#allocation6], %s4013
        %s4015 = sand.u32 %s96, 1
        %s4016 = smul.addr %s4015, 16
        %s4017 = scalar_lea.vmem [#allocation7], %s4016
        // Predicated region
        $region37: #{tpu_custom_call.1} parent=31 // pred_check
          %p4018 = pneg %p106
        $region38: #{tpu_custom_call.1} parent=31 // pred_check_branch
          %4020 = sbr.rel (%p4018) target = $region40
        $region39: #{tpu_custom_call.1} parent=31 // pred_region
          %s4022 = ssub.s32 256, 256
          %4023 = vsyncadd %s4014, %s4022
          %s4024 = smul.addr %s20, 2
          %s4025 = smul.addr %s4024, 128
          %s4026 = scalar_lea.hbm %s3, %s4025
          %s4028 = sshll.u32 %s4017, 4
          %s4029 = int_to_ptr.vmem [resolvable:$true] %s4028
          %4031 = dma.vmem_to_hbm [thread:$0]  %s4029, 256, %s4026, %s4014
        $region40: #{tpu_custom_call.1} parent=31 // pred_fallthru
          _
      $region32: #{tpu_custom_call.1} parent=5 // pred_fallthru
        _
      %p4032 = scmp.le.s32.totalorder 2, %s15
      // Predicated region
      $region41: #{tpu_custom_call.1} parent=5 // pred_check
        %p4033 = pneg %p4032
      $region42: #{tpu_custom_call.1} parent=5 // pred_check_branch
        %4035 = sbr.rel (%p4033) target = $region44
      $region43: #{tpu_custom_call.1} parent=5 // pred_region
        %s4036 = ssub.s32 %s15, 2
        // Predicated region
        $region45: #{tpu_custom_call.1} parent=43 // pred_check
          %p4037 = pneg %p112
        $region46: #{tpu_custom_call.1} parent=43 // pred_check_branch
          %4039 = sbr.rel (%p4037) target = $region48
        $region47: #{tpu_custom_call.1} parent=43 // pred_region
          %s4040 = sand.u32 %s97, 1
          %s4041 = scalar_lea.sflag [#allocation6], %s4040
          %s4042 = sand.u32 %s97, 1
          %s4043 = smul.addr %s4042, 16
          %s4044 = scalar_lea.vmem [#allocation7], %s4043
          %4045 = dma.done %s4041, 256
        $region48: #{tpu_custom_call.1} parent=43 // pred_fallthru
          _
      $region44: #{tpu_custom_call.1} parent=5 // pred_fallthru
        _
    $region6: #{tpu_custom_call.1} parent=1 // loop_footer
      %s19 = sadd.s32 1, %s15
    $region7: #{tpu_custom_call.1} parent=1 // loop_footer_branch
      %14 = sbr.rel target = $region3
    $region8: #{tpu_custom_call.1} parent=1 // loop_exit
      _
    %4046 = vsyncpa [#allocation5], 1
    %s4047 = scalar_lea.sflag [#allocation5], 1
    %4048 = vsyncpa %s4047, 1
    %4049 = vsyncpa [#allocation6], 1
    %s4050 = scalar_lea.sflag [#allocation6], 1
    %4051 = vsyncpa %s4050, 1

</llo_original>
